<compile_context>
chip_gen: v6e
topology: v6e:2x2x1
jax: 0.10.0
libtpu: 0.0.40
codegen_flags: <defaults>
</compile_context>

<pallas_src>
import math
import numpy as np
import jax
import jax.numpy as jnp
from jax import lax
from jax.experimental import pallas as pl
from jax.experimental.pallas import tpu as pltpu


def make_kernel(spatial_shapes, level_start, n_heads, n_levels, n_points,
                d_model, len_q, compute_dtype=jnp.float32):
    d_head = d_model // n_heads
    LP = n_levels * n_points
    HLP = n_heads * LP
    f32 = jnp.float32
    cd = compute_dtype

    def kernel(q_ref, x_ref, bx_ref, by_ref, wrow_ref, hrow_ref,
               wv_ref, bv_ref, wo_ref, bo_ref, wa_ref, ba_ref,
               wc_ref, bc_ref, out_ref):
        t = pl.program_id(1)

        # Output block is resident across the frame (T) axis: initialize it with
        # the host-folded bias at t == 0, then accumulate one frame per step.
        @pl.when(t == 0)
        def _():
            out_ref[...] = jnp.broadcast_to(bc_ref[...], (len_q, d_model)).astype(out_ref.dtype)

        q = q_ref[...]                                       # (Len_q, D)   (bf16 when enabled)
        x = x_ref[...]                                       # (Len_in, D)

        # Per-frame projections (one matmul each, f32 accumulation).
        value = jnp.dot(x, wv_ref[...], preferred_element_type=f32) + bv_ref[...]    # (Len_in, D)
        offs = jnp.dot(q, wo_ref[...], preferred_element_type=f32) + bo_ref[...]     # (Len_q, 2*HLP) = [x | y]
        logits = jnp.dot(q, wa_ref[...], preferred_element_type=f32) + ba_ref[...]   # (Len_q, HLP)

        # ---- lane-dense sampling math over the whole (Len_q, HLP) block -------
        # (ref + off/W) * W - 0.5 == (ref*W - 0.5) + off ; the ref part is
        # precomputed host-side (bx/by), so only one add per coordinate here.
        x_im = bx_ref[...] + offs[:, :HLP]
        y_im = by_ref[...] + offs[:, HLP:]
        x0f = jnp.floor(x_im)
        y0f = jnp.floor(y_im)
        lx = x_im - x0f
        ly = y_im - y0f
        x0 = x0f.astype(jnp.int32)
        y0 = y0f.astype(jnp.int32)
        W_row = wrow_ref[...]                                # (1, HLP) int32 per-column level W
        H_row = hrow_ref[...]                                # (1, HLP) int32 per-column level H

        one_m_lx = 1.0 - lx
        one_m_ly = 1.0 - ly
        # Pure bilinear corner weights (attention probs applied per head below).
        b00 = one_m_ly * one_m_lx
        b01 = one_m_ly * lx
        b10 = ly * one_m_lx
        b11 = ly * lx

        def corner_idx(xi, yi):
            valid = (xi >= 0) & (xi < W_row) & (yi >= 0) & (yi < H_row)
            # -1 sentinel never matches a level-local iota (>= 0): grid_sample
            # zero padding with no extra select on the contribution.
            return jnp.where(valid, yi * W_row + xi, -1)

        i00 = corner_idx(x0, y0)
        i01 = corner_idx(x0 + 1, y0)
        i10 = corner_idx(x0, y0 + 1)
        i11 = corner_idx(x0 + 1, y0 + 1)

        # Level-local iotas, hoisted out of the head loop.
        iota_ls = [lax.broadcasted_iota(jnp.int32, (len_q, hh * ww), 1)
                   for (hh, ww) in spatial_shapes]

        Wc = wc_ref[...]                                     # (D, D) frame-t folded Wout@Wagg_t

        acc = jnp.zeros((len_q, d_model), dtype=f32)
        for h in range(n_heads):
            c0 = h * LP
            # Per-head softmax over (n_levels * n_points) (division on EUP).
            blk = logits[:, c0:c0 + LP]
            m = jnp.max(blk, axis=-1, keepdims=True)
            e = jnp.exp(blk - m)
            probs_h = e * pl.reciprocal(jnp.sum(e, axis=-1, keepdims=True), approx=True)
            # Corner weights * attention probs for this head (4 ops on (Lq, LP)).
            w00 = b00[:, c0:c0 + LP] * probs_h
            w01 = b01[:, c0:c0 + LP] * probs_h
            w10 = b10[:, c0:c0 + LP] * probs_h
            w11 = b11[:, c0:c0 + LP] * probs_h

            vh = value[:, h * d_head:(h + 1) * d_head].astype(cd)       # (Len_in, d_head)
            head_acc = jnp.zeros((len_q, d_head), dtype=f32)
            for l in range(n_levels):
                H_l, W_l = spatial_shapes[l]
                HW_l = H_l * W_l
                S_l = level_start[l]
                iota_l = iota_ls[l]
                A = jnp.zeros((len_q, HW_l), dtype=f32)
                for p in range(n_points):
                    lp = l * n_points + p
                    c = c0 + lp
                    for idx_full, w_full in ((i00, w00), (i01, w01), (i10, w10), (i11, w11)):
                        A = A + jnp.where(iota_l == idx_full[:, c:c + 1],
                                          w_full[:, lp:lp + 1], 0.0)
                head_acc = head_acc + jnp.dot(A.astype(cd), vh[S_l:S_l + HW_l, :],
                                              preferred_element_type=f32)
            # Fold this head straight through the combined (Wout @ Wagg_t) rows.
            acc = acc + jnp.dot(head_acc.astype(cd),
                                Wc[h * d_head:(h + 1) * d_head, :],
                                preferred_element_type=f32)

        out_ref[...] = out_ref[...] + acc.astype(out_ref.dtype)

    return kernel


def ms_deform_attn_pairwise(query_stack, input_stack, ref_points, params,
                            spatial_shapes, level_start,
                            n_heads, n_levels, n_points,
                            use_bf16_matmul=True):
    N, T, Lq, D = query_stack.shape
    Lin = input_stack.shape[2]
    LP = n_levels * n_points
    HLP = n_heads * LP
    Wv, bv, Wo, bo, Wa, ba, Wout, bout, Wagg, bagg = params

    # --- host-side parameter re-layout / folds (exact, done once) --------------
    # 1) Reorder sampling_offsets output columns from (h,l,p,xy) interleaved to
    #    [all-x | all-y] so the kernel slices two contiguous lane blocks.
    Wo_r = Wo.reshape(D, HLP, 2).transpose(0, 2, 1).reshape(D, 2 * HLP)
    bo_r = bo.reshape(1, HLP, 2).transpose(0, 2, 1).reshape(1, 2 * HLP)
    # 2) Fold output_proj into spatio_temporal_agg:
    #    sum_t (sampled_t @ Wout + bout) @ Wagg_t + bagg
    #    == sum_t sampled_t @ (Wout @ Wagg_t) + (bout @ sum_t Wagg_t + bagg)
    Wagg_t = Wagg.reshape(T, D, D)
    Wcomb = jnp.einsum('ij,tjk->tik', Wout, Wagg_t)           # (T, D, D)
    bias_comb = bagg + bout @ jnp.sum(Wagg_t, axis=0)         # (1, D)
    # 3) Precompute lane-dense sampling bases (ref*W - 0.5 broadcast to the
    #    (h,l,p) column layout) and per-column level extents.
    w_lvl = jnp.asarray([float(w) for (_h, w) in spatial_shapes], jnp.float32)
    h_lvl = jnp.asarray([float(h) for (h, _w) in spatial_shapes], jnp.float32)
    bx_lvl = ref_points[..., 0] * w_lvl - 0.5                 # (N, Lq, L)
    by_lvl = ref_points[..., 1] * h_lvl - 0.5
    base_x = jnp.broadcast_to(bx_lvl[:, :, None, :, None],
                              (N, Lq, n_heads, n_levels, n_points)).reshape(N, Lq, HLP)
    base_y = jnp.broadcast_to(by_lvl[:, :, None, :, None],
                              (N, Lq, n_heads, n_levels, n_points)).reshape(N, Lq, HLP)
    wrow = jnp.asarray(np.broadcast_to(
        np.asarray([w for (_h, w) in spatial_shapes], np.int32)[None, :, None],
        (n_heads, n_levels, n_points)).reshape(1, HLP))
    hrow = jnp.asarray(np.broadcast_to(
        np.asarray([h for (h, _w) in spatial_shapes], np.int32)[None, :, None],
        (n_heads, n_levels, n_points)).reshape(1, HLP))

    compute_dtype = jnp.bfloat16 if use_bf16_matmul else jnp.float32
    if use_bf16_matmul:
        # Cast the big operands in the wrapper: halves HBM->VMEM DMA and uses
        # the bf16 MXU path; biases / sampling bases stay f32.
        q_in = query_stack.astype(jnp.bfloat16)
        x_in = input_stack.astype(jnp.bfloat16)
        Wv_in = Wv.astype(jnp.bfloat16)
        Wo_in = Wo_r.astype(jnp.bfloat16)
        Wa_in = Wa.astype(jnp.bfloat16)
        Wc_in = Wcomb.astype(jnp.bfloat16)
    else:
        q_in, x_in = query_stack, input_stack
        Wv_in, Wo_in, Wa_in, Wc_in = Wv, Wo_r, Wa, Wcomb

    kernel = make_kernel(tuple(spatial_shapes), tuple(level_start),
                         n_heads, n_levels, n_points, D, Lq, compute_dtype)

    def full(arr):
        return pl.BlockSpec(arr.shape, lambda b, t, _n=arr.ndim: (0,) * _n)

    in_specs = [
        pl.BlockSpec((None, None, Lq, D), lambda b, t: (b, t, 0, 0)),    # query (per frame)
        pl.BlockSpec((None, None, Lin, D), lambda b, t: (b, t, 0, 0)),   # input (per frame)
        pl.BlockSpec((None, Lq, HLP), lambda b, t: (b, 0, 0)),           # base_x
        pl.BlockSpec((None, Lq, HLP), lambda b, t: (b, 0, 0)),           # base_y
        full(wrow), full(hrow),
        full(Wv_in), full(bv),
        full(Wo_in), full(bo_r),
        full(Wa_in), full(ba),
        pl.BlockSpec((None, D, D), lambda b, t: (t, 0, 0)),              # Wcomb[t]
        full(bias_comb),
    ]
    out_spec = pl.BlockSpec((None, Lq, D), lambda b, t: (b, 0, 0))       # resident across T

    # Explicit VMEM budget: double-buffered per-step inputs + resident output +
    # an allowance for in-kernel intermediates, with headroom.
    def nb(shape, dt):
        return int(np.prod(shape)) * jnp.dtype(dt).itemsize
    in_dt = jnp.bfloat16 if use_bf16_matmul else jnp.float32
    max_hw = max(h * w for (h, w) in spatial_shapes)
    per_step = (nb((Lq, D), in_dt) + nb((Lin, D), in_dt)
                + 2 * nb((Lq, HLP), jnp.float32) + 2 * nb((1, HLP), jnp.int32)
                + nb((D, D), in_dt))
    weights = (nb(Wv_in.shape, in_dt) + nb(Wo_in.shape, in_dt) + nb(Wa_in.shape, in_dt)
               + nb(bv.shape, jnp.float32) + nb(bo_r.shape, jnp.float32)
               + nb(ba.shape, jnp.float32) + nb(bias_comb.shape, jnp.float32))
    interm = (nb((Lin, D), jnp.float32) + 16 * nb((Lq, HLP), jnp.float32)
              + 6 * nb((Lq, max_hw), jnp.float32) + 4 * nb((Lq, D), jnp.float32))
    vmem_limit = int(2 * per_step + 2 * weights + 2 * nb((Lq, D), jnp.float32)
                     + interm + (8 << 20))
    vmem_limit = min(vmem_limit, 64 << 20)   # stay within v7x physical VMEM

    return pl.pallas_call(
        kernel,
        out_shape=jax.ShapeDtypeStruct((N, Lq, D), jnp.float32),
        grid=(N, T),
        in_specs=in_specs,
        out_specs=out_spec,
        compiler_params=pltpu.CompilerParams(
            dimension_semantics=("parallel", "arbitrary"),
            vmem_limit_bytes=vmem_limit),
    )(q_in, x_in, base_x, base_y, wrow, hrow,
      Wv_in, bv, Wo_in, bo_r, Wa_in, ba, Wc_in, bias_comb)


def init_params(key, d_model, n_heads, n_levels, n_points, num_iter):
    """Deterministic synthetic init mirroring MSDeformAttn._reset_parameters."""
    hlp = n_heads * n_levels * n_points
    k1, k2, k3 = jax.random.split(key, 3)

    def xavier(k, fan_in, fan_out):
        bound = math.sqrt(6.0 / (fan_in + fan_out))
        return jax.random.uniform(k, (fan_in, fan_out), jnp.float32, -bound, bound)

    Wv = xavier(k1, d_model, d_model)
    bv = jnp.zeros((1, d_model), jnp.float32)

    # sampling_offsets: zero weight, structured bias (grid_init)
    Wo = jnp.zeros((d_model, hlp * 2), jnp.float32)
    thetas = np.arange(n_heads, dtype=np.float32) * (2.0 * np.pi / n_heads)
    grid = np.stack([np.cos(thetas), np.sin(thetas)], -1)                 # (H, 2)
    grid = grid / np.abs(grid).max(-1, keepdims=True)
    grid = np.tile(grid[:, None, None, :], (1, n_levels, n_points, 1))    # (H, L, P, 2)
    for i in range(n_points):
        grid[:, :, i, :] *= (i + 1)
    bo = jnp.asarray(grid.reshape(1, -1), jnp.float32)

    # attention_weights: zero weight, zero bias
    Wa = jnp.zeros((d_model, hlp), jnp.float32)
    ba = jnp.zeros((1, hlp), jnp.float32)

    Wout = xavier(k2, d_model, d_model)
    bout = jnp.zeros((1, d_model), jnp.float32)
    Wagg = xavier(k3, d_model * num_iter, d_model)
    bagg = jnp.zeros((1, d_model), jnp.float32)
    return (Wv, bv, Wo, bo, Wa, ba, Wout, bout, Wagg, bagg)


def reference_forward(query_stack, input_stack, ref_points, params,
                      spatial_shapes, level_start, n_heads, n_levels, n_points):
    """Pure-JAX reference (gather-based bilinear sampling) for correctness check."""
    Wv, bv, Wo, bo, Wa, ba, Wout, bout, Wagg, bagg = params
    N, T, Lq, D = query_stack.shape
    Lin = input_stack.shape[2]
    dh = D // n_heads
    normalizer = jnp.array([[w, h] for (h, w) in spatial_shapes], jnp.float32)  # (L, 2) = [W, H]
    outs = []
    for t in range(T):
        q = query_stack[:, t]
        xin = input_stack[:, t]
        value = (xin @ Wv + bv).reshape(N, Lin, n_heads, dh)
        offs = (q @ Wo + bo).reshape(N, Lq, n_heads, n_levels, n_points, 2)
        attn = (q @ Wa + ba).reshape(N, Lq, n_heads, n_levels * n_points)
        attn = jax.nn.softmax(attn, axis=-1).reshape(N, Lq, n_heads, n_levels, n_points)
        loc = ref_points[:, :, None, :, None, :] + offs / normalizer[None, None, None, :, None, :]
        out = jnp.zeros((N, Lq, n_heads, dh), jnp.float32)
        n_idx = jnp.arange(N)[:, None, None, None]
        h_idx = jnp.arange(n_heads)[None, None, :, None]
        for l, (H_l, W_l) in enumerate(spatial_shapes):
            s0 = level_start[l]
            v_l = value[:, s0:s0 + H_l * W_l].reshape(N, H_l, W_l, n_heads, dh)
            gx = loc[:, :, :, l, :, 0] * W_l - 0.5
            gy = loc[:, :, :, l, :, 1] * H_l - 0.5
            x0 = jnp.floor(gx); y0 = jnp.floor(gy)
            lx = gx - x0; ly = gy - y0
            x0i = x0.astype(jnp.int32); y0i = y0.astype(jnp.int32)
            for dy in (0, 1):
                for dx in (0, 1):
                    xi = x0i + dx
                    yi = y0i + dy
                    wgt = (ly if dy else (1.0 - ly)) * (lx if dx else (1.0 - lx))
                    valid = (xi >= 0) & (xi < W_l) & (yi >= 0) & (yi < H_l)
                    xic = jnp.clip(xi, 0, W_l - 1)
                    yic = jnp.clip(yi, 0, H_l - 1)
                    g = v_l[n_idx, yic, xic, h_idx]                       # (N, Lq, H, P, dh)
                    w_eff = jnp.where(valid, wgt, 0.0) * attn[:, :, :, l, :]
                    out = out + jnp.sum(w_eff[..., None] * g, axis=3)
        out = out.reshape(N, Lq, D) @ Wout + bout
        outs.append(out)
    return jnp.concatenate(outs, axis=-1) @ Wagg + bagg


if __name__ == "__main__":
    # Small but structurally faithful config:
    d_model, n_heads, n_levels, n_points = 32, 4, 2, 2
    num_iter = 2        # length of query_list / input_flatten_list
    seq_length = 8      # stored-but-unused hyperparam in the torch module
    N, Lq = 2, 8
    spatial_shapes = [(8, 8), (4, 4)]
    level_start = [0]
    for (h, w) in spatial_shapes[:-1]:
        level_start.append(level_start[-1] + h * w)
    Lin = sum(h * w for (h, w) in spatial_shapes)   # 80

    key = jax.random.PRNGKey(0)
    k1, k2, k3, k4 = jax.random.split(key, 4)
    query_stack = jax.random.normal(k1, (N, num_iter, Lq, d_model), jnp.float32) * 0.5
    input_stack = jax.random.normal(k2, (N, num_iter, Lin, d_model), jnp.float32) * 0.5
    ref_points = jax.random.uniform(k3, (N, Lq, n_levels, 2), jnp.float32)
    params = init_params(k4, d_model, n_heads, n_levels, n_points, num_iter)

    ref = reference_forward(query_stack, input_stack, ref_points, params,
                            spatial_shapes, level_start,
                            n_heads, n_levels, n_points)
    ref = jax.block_until_ready(ref)

    # f32 path (tight tolerance; approx-reciprocal softmax denominator allowed).
    out_f32 = ms_deform_attn_pairwise(query_stack, input_stack, ref_points, params,
                                      spatial_shapes, level_start,
                                      n_heads, n_levels, n_points,
                                      use_bf16_matmul=False)
    out_f32 = jax.block_until_ready(out_f32)
    assert out_f32.shape == (N, Lq, d_model)
    err_f32 = float(jnp.max(jnp.abs(out_f32 - ref)))
    assert err_f32 < 2e-3, f"Pallas (f32) vs reference mismatch: {err_f32}"

    # bf16 path (wrapper-cast inputs/weights; f32 accumulation) -- loose tolerance.
    out_bf16 = ms_deform_attn_pairwise(query_stack, input_stack, ref_points, params,
                                       spatial_shapes, level_start,
                                       n_heads, n_levels, n_points,
                                       use_bf16_matmul=True)
    out_bf16 = jax.block_until_ready(out_bf16)
    err_bf16 = float(jnp.max(jnp.abs(out_bf16 - ref)))
    assert err_bf16 < 1e-1, f"Pallas (bf16) vs reference mismatch: {err_bf16}"

    print("KERNEL_OK")
</pallas_src>

<mosaic_0001>
module attributes {stable_mosaic.version = 11 : i64} {
  func.func @kernel(%arg0: i32, %arg1: i32, %arg2: memref<1x1x8x32xf32, #tpu.memory_space<vmem>>, %arg3: memref<1x1x80x32xf32, #tpu.memory_space<vmem>>, %arg4: memref<1x8x16xf32, #tpu.memory_space<vmem>>, %arg5: memref<1x8x16xf32, #tpu.memory_space<vmem>>, %arg6: memref<1x16xi32, #tpu.memory_space<vmem>>, %arg7: memref<1x16xi32, #tpu.memory_space<vmem>>, %arg8: memref<32x32xf32, #tpu.memory_space<vmem>>, %arg9: memref<1x32xf32, #tpu.memory_space<vmem>>, %arg10: memref<32x32xf32, #tpu.memory_space<vmem>>, %arg11: memref<1x32xf32, #tpu.memory_space<vmem>>, %arg12: memref<32x16xf32, #tpu.memory_space<vmem>>, %arg13: memref<1x16xf32, #tpu.memory_space<vmem>>, %arg14: memref<1x32x32xf32, #tpu.memory_space<vmem>>, %arg15: memref<1x32xf32, #tpu.memory_space<vmem>>, %arg16: memref<1x8x32xf32, #tpu.memory_space<vmem>>) attributes {dimension_semantics = [#tpu.dimension_semantics<parallel>, #tpu.dimension_semantics<arbitrary>], iteration_bounds = array<i64: 2, 2>, scalar_prefetch = 0 : i64, scratch_operands = 0 : i64, tpu.core_type = #tpu.core_type<tc>, window_params = [{transform_indices = @transform_0, window_bounds = array<i64: 1, 1, 8, 32>}, {transform_indices = @transform_1, window_bounds = array<i64: 1, 1, 80, 32>}, {transform_indices = @transform_2, window_bounds = array<i64: 1, 8, 16>}, {transform_indices = @transform_3, window_bounds = array<i64: 1, 8, 16>}, {pipeline_mode = #tpu.pipeline_mode<synchronous>, transform_indices = @transform_4, window_bounds = array<i64: 1, 16>}, {pipeline_mode = #tpu.pipeline_mode<synchronous>, transform_indices = @transform_5, window_bounds = array<i64: 1, 16>}, {pipeline_mode = #tpu.pipeline_mode<synchronous>, transform_indices = @transform_6, window_bounds = array<i64: 32, 32>}, {pipeline_mode = #tpu.pipeline_mode<synchronous>, transform_indices = @transform_7, window_bounds = array<i64: 1, 32>}, {pipeline_mode = #tpu.pipeline_mode<synchronous>, transform_indices = @transform_8, window_bounds = array<i64: 32, 32>}, {pipeline_mode = #tpu.pipeline_mode<synchronous>, transform_indices = @transform_9, window_bounds = array<i64: 1, 32>}, {pipeline_mode = #tpu.pipeline_mode<synchronous>, transform_indices = @transform_10, window_bounds = array<i64: 32, 16>}, {pipeline_mode = #tpu.pipeline_mode<synchronous>, transform_indices = @transform_11, window_bounds = array<i64: 1, 16>}, {transform_indices = @transform_12, window_bounds = array<i64: 1, 32, 32>}, {pipeline_mode = #tpu.pipeline_mode<synchronous>, transform_indices = @transform_13, window_bounds = array<i64: 1, 32>}, {transform_indices = @transform_14, window_bounds = array<i64: 1, 8, 32>}]} {
    %c0_i32 = arith.constant 0 : i32
    %0 = arith.cmpi eq, %arg1, %c0_i32 : i32
    %1 = arith.extui %0 : i1 to i32
    %c0_i32_0 = arith.constant 0 : i32
    %2 = arith.cmpi ne, %1, %c0_i32_0 : i32
    scf.if %2 {
      %c0_154 = arith.constant 0 : index
      %c0_155 = arith.constant 0 : index
      %833 = vector.load %arg15[%c0_154, %c0_155] : memref<1x32xf32, #tpu.memory_space<vmem>>, vector<1x32xf32>
      %834 = vector.shape_cast %833 : vector<1x32xf32> to vector<1x32xf32>
      %835 = vector.broadcast %834 : vector<1x32xf32> to vector<8x32xf32>
      %c0_156 = arith.constant 0 : index
      %c0_157 = arith.constant 0 : index
      %c0_158 = arith.constant 0 : index
      %836 = vector.load %arg16[%c0_156, %c0_157, %c0_158] : memref<1x8x32xf32, #tpu.memory_space<vmem>>, vector<1x8x32xf32>
      %837 = vector.shape_cast %836 : vector<1x8x32xf32> to vector<8x32xf32>
      %838 = vector.shape_cast %835 : vector<8x32xf32> to vector<1x8x32xf32>
      tpu.vector_store %arg16[%c0_156, %c0_157, %c0_158], %838 {strides = array<i32>} : memref<1x8x32xf32, #tpu.memory_space<vmem>>, vector<1x8x32xf32>,
    } else {
    }
    %c0 = arith.constant 0 : index
    %c0_1 = arith.constant 0 : index
    %c0_2 = arith.constant 0 : index
    %c0_3 = arith.constant 0 : index
    %3 = vector.load %arg2[%c0, %c0_1, %c0_2, %c0_3] : memref<1x1x8x32xf32, #tpu.memory_space<vmem>>, vector<1x1x8x32xf32>
    %4 = vector.shape_cast %3 : vector<1x1x8x32xf32> to vector<8x32xf32>
    %c0_4 = arith.constant 0 : index
    %c0_5 = arith.constant 0 : index
    %c0_6 = arith.constant 0 : index
    %c0_7 = arith.constant 0 : index
    %5 = vector.load %arg3[%c0_4, %c0_5, %c0_6, %c0_7] : memref<1x1x80x32xf32, #tpu.memory_space<vmem>>, vector<1x1x80x32xf32>
    %6 = vector.shape_cast %5 : vector<1x1x80x32xf32> to vector<80x32xf32>
    %c0_8 = arith.constant 0 : index
    %c0_9 = arith.constant 0 : index
    %7 = vector.load %arg8[%c0_8, %c0_9] : memref<32x32xf32, #tpu.memory_space<vmem>>, vector<32x32xf32>
    %cst = arith.constant dense<0.000000e+00> : vector<80x32xf32>
    %8 = tpu.matmul %6, %7, %cst {dimension_numbers = #tpu.dot_dimension_numbers<[1], [0], [0], [1], [0, 0, 1, 1], [], []>} : vector<80x32xf32>, vector<32x32xf32>, vector<80x32xf32> -> vector<80x32xf32>
    %c0_10 = arith.constant 0 : index
    %c0_11 = arith.constant 0 : index
    %9 = vector.load %arg9[%c0_10, %c0_11] : memref<1x32xf32, #tpu.memory_space<vmem>>, vector<1x32xf32>
    %10 = vector.broadcast %9 : vector<1x32xf32> to vector<80x32xf32>
    %11 = arith.addf %8, %10 : vector<80x32xf32>
    %c0_12 = arith.constant 0 : index
    %c0_13 = arith.constant 0 : index
    %12 = vector.load %arg10[%c0_12, %c0_13] : memref<32x32xf32, #tpu.memory_space<vmem>>, vector<32x32xf32>
    %cst_14 = arith.constant dense<0.000000e+00> : vector<8x32xf32>
    %13 = tpu.matmul %4, %12, %cst_14 {dimension_numbers = #tpu.dot_dimension_numbers<[1], [0], [0], [1], [0, 0, 1, 1], [], []>} : vector<8x32xf32>, vector<32x32xf32>, vector<8x32xf32> -> vector<8x32xf32>
    %c0_15 = arith.constant 0 : index
    %c0_16 = arith.constant 0 : index
    %14 = vector.load %arg11[%c0_15, %c0_16] : memref<1x32xf32, #tpu.memory_space<vmem>>, vector<1x32xf32>
    %15 = vector.broadcast %14 : vector<1x32xf32> to vector<8x32xf32>
    %16 = arith.addf %13, %15 : vector<8x32xf32>
    %c0_17 = arith.constant 0 : index
    %c0_18 = arith.constant 0 : index
    %17 = vector.load %arg12[%c0_17, %c0_18] : memref<32x16xf32, #tpu.memory_space<vmem>>, vector<32x16xf32>
    %cst_19 = arith.constant dense<0.000000e+00> : vector<8x16xf32>
    %18 = tpu.matmul %4, %17, %cst_19 {dimension_numbers = #tpu.dot_dimension_numbers<[1], [0], [0], [1], [0, 0, 1, 1], [], []>} : vector<8x32xf32>, vector<32x16xf32>, vector<8x16xf32> -> vector<8x16xf32>
    %c0_20 = arith.constant 0 : index
    %c0_21 = arith.constant 0 : index
    %19 = vector.load %arg13[%c0_20, %c0_21] : memref<1x16xf32, #tpu.memory_space<vmem>>, vector<1x16xf32>
    %20 = vector.broadcast %19 : vector<1x16xf32> to vector<8x16xf32>
    %21 = arith.addf %18, %20 : vector<8x16xf32>
    %c0_22 = arith.constant 0 : index
    %c0_23 = arith.constant 0 : index
    %c0_24 = arith.constant 0 : index
    %22 = vector.load %arg4[%c0_22, %c0_23, %c0_24] : memref<1x8x16xf32, #tpu.memory_space<vmem>>, vector<1x8x16xf32>
    %23 = vector.shape_cast %22 : vector<1x8x16xf32> to vector<8x16xf32>
    %24 = vector.extract_strided_slice %16 {offsets = [0, 0], sizes = [8, 16], strides = [1, 1]} : vector<8x32xf32> to vector<8x16xf32>
    %25 = arith.addf %23, %24 : vector<8x16xf32>
    %c0_25 = arith.constant 0 : index
    %c0_26 = arith.constant 0 : index
    %c0_27 = arith.constant 0 : index
    %26 = vector.load %arg5[%c0_25, %c0_26, %c0_27] : memref<1x8x16xf32, #tpu.memory_space<vmem>>, vector<1x8x16xf32>
    %27 = vector.shape_cast %26 : vector<1x8x16xf32> to vector<8x16xf32>
    %28 = vector.extract_strided_slice %16 {offsets = [0, 16], sizes = [8, 16], strides = [1, 1]} : vector<8x32xf32> to vector<8x16xf32>
    %29 = arith.addf %27, %28 : vector<8x16xf32>
    %30 = math.floor %25 : vector<8x16xf32>
    %31 = math.floor %29 : vector<8x16xf32>
    %32 = arith.subf %25, %30 : vector<8x16xf32>
    %33 = arith.subf %29, %31 : vector<8x16xf32>
    %34 = arith.fptosi %30 : vector<8x16xf32> to vector<8x16xi32>
    %35 = arith.fptosi %31 : vector<8x16xf32> to vector<8x16xi32>
    %c0_28 = arith.constant 0 : index
    %c0_29 = arith.constant 0 : index
    %36 = vector.load %arg6[%c0_28, %c0_29] : memref<1x16xi32, #tpu.memory_space<vmem>>, vector<1x16xi32>
    %c0_30 = arith.constant 0 : index
    %c0_31 = arith.constant 0 : index
    %37 = vector.load %arg7[%c0_30, %c0_31] : memref<1x16xi32, #tpu.memory_space<vmem>>, vector<1x16xi32>
    %cst_32 = arith.constant 1.000000e+00 : f32
    %38 = vector.broadcast %cst_32 : f32 to vector<8x16xf32>
    %39 = arith.subf %38, %32 : vector<8x16xf32>
    %cst_33 = arith.constant 1.000000e+00 : f32
    %40 = vector.broadcast %cst_33 : f32 to vector<8x16xf32>
    %41 = arith.subf %40, %33 : vector<8x16xf32>
    %42 = arith.mulf %41, %39 : vector<8x16xf32>
    %43 = arith.mulf %41, %32 : vector<8x16xf32>
    %44 = arith.mulf %33, %39 : vector<8x16xf32>
    %45 = arith.mulf %33, %32 : vector<8x16xf32>
    %c0_i32_34 = arith.constant 0 : i32
    %46 = vector.broadcast %c0_i32_34 : i32 to vector<8x16xi32>
    %47 = arith.cmpi sge, %34, %46 : vector<8x16xi32>
    %48 = vector.broadcast %36 : vector<1x16xi32> to vector<8x16xi32>
    %49 = arith.cmpi slt, %34, %48 : vector<8x16xi32>
    %50 = arith.andi %47, %49 : vector<8x16xi1>
    %c0_i32_35 = arith.constant 0 : i32
    %51 = vector.broadcast %c0_i32_35 : i32 to vector<8x16xi32>
    %52 = arith.cmpi sge, %35, %51 : vector<8x16xi32>
    %53 = arith.andi %50, %52 : vector<8x16xi1>
    %54 = vector.broadcast %37 : vector<1x16xi32> to vector<8x16xi32>
    %55 = arith.cmpi slt, %35, %54 : vector<8x16xi32>
    %56 = arith.andi %53, %55 : vector<8x16xi1>
    %57 = vector.broadcast %36 : vector<1x16xi32> to vector<8x16xi32>
    %58 = arith.muli %35, %57 : vector<8x16xi32>
    %59 = arith.addi %58, %34 : vector<8x16xi32>
    %c-1_i32 = arith.constant -1 : i32
    %60 = vector.broadcast %c-1_i32 : i32 to vector<8x16xi32>
    %61 = arith.select %56, %59, %60 : vector<8x16xi1>, vector<8x16xi32>
    %c1_i32 = arith.constant 1 : i32
    %62 = vector.broadcast %c1_i32 : i32 to vector<8x16xi32>
    %63 = arith.addi %34, %62 : vector<8x16xi32>
    %c0_i32_36 = arith.constant 0 : i32
    %64 = vector.broadcast %c0_i32_36 : i32 to vector<8x16xi32>
    %65 = arith.cmpi sge, %63, %64 : vector<8x16xi32>
    %66 = vector.broadcast %36 : vector<1x16xi32> to vector<8x16xi32>
    %67 = arith.cmpi slt, %63, %66 : vector<8x16xi32>
    %68 = arith.andi %65, %67 : vector<8x16xi1>
    %c0_i32_37 = arith.constant 0 : i32
    %69 = vector.broadcast %c0_i32_37 : i32 to vector<8x16xi32>
    %70 = arith.cmpi sge, %35, %69 : vector<8x16xi32>
    %71 = arith.andi %68, %70 : vector<8x16xi1>
    %72 = vector.broadcast %37 : vector<1x16xi32> to vector<8x16xi32>
    %73 = arith.cmpi slt, %35, %72 : vector<8x16xi32>
    %74 = arith.andi %71, %73 : vector<8x16xi1>
    %75 = vector.broadcast %36 : vector<1x16xi32> to vector<8x16xi32>
    %76 = arith.muli %35, %75 : vector<8x16xi32>
    %77 = arith.addi %76, %63 : vector<8x16xi32>
    %c-1_i32_38 = arith.constant -1 : i32
    %78 = vector.broadcast %c-1_i32_38 : i32 to vector<8x16xi32>
    %79 = arith.select %74, %77, %78 : vector<8x16xi1>, vector<8x16xi32>
    %c1_i32_39 = arith.constant 1 : i32
    %80 = vector.broadcast %c1_i32_39 : i32 to vector<8x16xi32>
    %81 = arith.addi %35, %80 : vector<8x16xi32>
    %c0_i32_40 = arith.constant 0 : i32
    %82 = vector.broadcast %c0_i32_40 : i32 to vector<8x16xi32>
    %83 = arith.cmpi sge, %34, %82 : vector<8x16xi32>
    %84 = vector.broadcast %36 : vector<1x16xi32> to vector<8x16xi32>
    %85 = arith.cmpi slt, %34, %84 : vector<8x16xi32>
    %86 = arith.andi %83, %85 : vector<8x16xi1>
    %c0_i32_41 = arith.constant 0 : i32
    %87 = vector.broadcast %c0_i32_41 : i32 to vector<8x16xi32>
    %88 = arith.cmpi sge, %81, %87 : vector<8x16xi32>
    %89 = arith.andi %86, %88 : vector<8x16xi1>
    %90 = vector.broadcast %37 : vector<1x16xi32> to vector<8x16xi32>
    %91 = arith.cmpi slt, %81, %90 : vector<8x16xi32>
    %92 = arith.andi %89, %91 : vector<8x16xi1>
    %93 = vector.broadcast %36 : vector<1x16xi32> to vector<8x16xi32>
    %94 = arith.muli %81, %93 : vector<8x16xi32>
    %95 = arith.addi %94, %34 : vector<8x16xi32>
    %c-1_i32_42 = arith.constant -1 : i32
    %96 = vector.broadcast %c-1_i32_42 : i32 to vector<8x16xi32>
    %97 = arith.select %92, %95, %96 : vector<8x16xi1>, vector<8x16xi32>
    %c1_i32_43 = arith.constant 1 : i32
    %98 = vector.broadcast %c1_i32_43 : i32 to vector<8x16xi32>
    %99 = arith.addi %34, %98 : vector<8x16xi32>
    %c1_i32_44 = arith.constant 1 : i32
    %100 = vector.broadcast %c1_i32_44 : i32 to vector<8x16xi32>
    %101 = arith.addi %35, %100 : vector<8x16xi32>
    %c0_i32_45 = arith.constant 0 : i32
    %102 = vector.broadcast %c0_i32_45 : i32 to vector<8x16xi32>
    %103 = arith.cmpi sge, %99, %102 : vector<8x16xi32>
    %104 = vector.broadcast %36 : vector<1x16xi32> to vector<8x16xi32>
    %105 = arith.cmpi slt, %99, %104 : vector<8x16xi32>
    %106 = arith.andi %103, %105 : vector<8x16xi1>
    %c0_i32_46 = arith.constant 0 : i32
    %107 = vector.broadcast %c0_i32_46 : i32 to vector<8x16xi32>
    %108 = arith.cmpi sge, %101, %107 : vector<8x16xi32>
    %109 = arith.andi %106, %108 : vector<8x16xi1>
    %110 = vector.broadcast %37 : vector<1x16xi32> to vector<8x16xi32>
    %111 = arith.cmpi slt, %101, %110 : vector<8x16xi32>
    %112 = arith.andi %109, %111 : vector<8x16xi1>
    %113 = vector.broadcast %36 : vector<1x16xi32> to vector<8x16xi32>
    %114 = arith.muli %101, %113 : vector<8x16xi32>
    %115 = arith.addi %114, %99 : vector<8x16xi32>
    %c-1_i32_47 = arith.constant -1 : i32
    %116 = vector.broadcast %c-1_i32_47 : i32 to vector<8x16xi32>
    %117 = arith.select %112, %115, %116 : vector<8x16xi1>, vector<8x16xi32>
    %118 = tpu.iota {dimensions = array<i32: 1>} : vector<8x64xi32>
    %119 = tpu.iota {dimensions = array<i32: 1>} : vector<8x16xi32>
    %c0_48 = arith.constant 0 : index
    %c0_49 = arith.constant 0 : index
    %c0_50 = arith.constant 0 : index
    %120 = vector.load %arg14[%c0_48, %c0_49, %c0_50] : memref<1x32x32xf32, #tpu.memory_space<vmem>>, vector<1x32x32xf32>
    %121 = vector.shape_cast %120 : vector<1x32x32xf32> to vector<32x32xf32>
    %cst_51 = arith.constant 0.000000e+00 : f32
    %122 = vector.broadcast %cst_51 : f32 to vector<8x32xf32>
    %123 = vector.extract_strided_slice %21 {offsets = [0, 0], sizes = [8, 4], strides = [1, 1]} : vector<8x16xf32> to vector<8x4xf32>
    %cst_52 = arith.constant dense<0xFF800000> : vector<8xf32>
    %124 = vector.multi_reduction <maximumf>, %123, %cst_52 [1] : vector<8x4xf32> to vector<8xf32>
    %125 = vector.shape_cast %124 : vector<8xf32> to vector<8x1xf32>
    %126 = vector.broadcast %125 : vector<8x1xf32> to vector<8x4xf32>
    %127 = arith.subf %123, %126 : vector<8x4xf32>
    %128 = math.exp %127 : vector<8x4xf32>
    %cst_53 = arith.constant dense<0.000000e+00> : vector<8xf32>
    %129 = vector.multi_reduction <add>, %128, %cst_53 [1] : vector<8x4xf32> to vector<8xf32>
    %130 = vector.shape_cast %129 : vector<8xf32> to vector<8x1xf32>
    %131 = tpu.reciprocal %130 {approx = true} : vector<8x1xf32> -> vector<8x1xf32>
    %132 = vector.broadcast %131 : vector<8x1xf32> to vector<8x4xf32>
    %133 = arith.mulf %128, %132 : vector<8x4xf32>
    %134 = vector.extract_strided_slice %42 {offsets = [0, 0], sizes = [8, 4], strides = [1, 1]} : vector<8x16xf32> to vector<8x4xf32>
    %135 = arith.mulf %134, %133 : vector<8x4xf32>
    %136 = vector.extract_strided_slice %43 {offsets = [0, 0], sizes = [8, 4], strides = [1, 1]} : vector<8x16xf32> to vector<8x4xf32>
    %137 = arith.mulf %136, %133 : vector<8x4xf32>
    %138 = vector.extract_strided_slice %44 {offsets = [0, 0], sizes = [8, 4], strides = [1, 1]} : vector<8x16xf32> to vector<8x4xf32>
    %139 = arith.mulf %138, %133 : vector<8x4xf32>
    %140 = vector.extract_strided_slice %45 {offsets = [0, 0], sizes = [8, 4], strides = [1, 1]} : vector<8x16xf32> to vector<8x4xf32>
    %141 = arith.mulf %140, %133 : vector<8x4xf32>
    %142 = vector.extract_strided_slice %11 {offsets = [0, 0], sizes = [80, 8], strides = [1, 1]} : vector<80x32xf32> to vector<80x8xf32>
    %cst_54 = arith.constant 0.000000e+00 : f32
    %143 = vector.broadcast %cst_54 : f32 to vector<8x8xf32>
    %cst_55 = arith.constant 0.000000e+00 : f32
    %144 = vector.broadcast %cst_55 : f32 to vector<8x64xf32>
    %145 = vector.extract_strided_slice %61 {offsets = [0, 0], sizes = [8, 1], strides = [1, 1]} : vector<8x16xi32> to vector<8x1xi32>
    %146 = vector.broadcast %145 : vector<8x1xi32> to vector<8x64xi32>
    %147 = arith.cmpi eq, %118, %146 : vector<8x64xi32>
    %148 = vector.extract_strided_slice %135 {offsets = [0, 0], sizes = [8, 1], strides = [1, 1]} : vector<8x4xf32> to vector<8x1xf32>
    %cst_56 = arith.constant 0.000000e+00 : f32
    %149 = vector.shape_cast %148 : vector<8x1xf32> to vector<8x1xf32>
    %150 = vector.broadcast %149 : vector<8x1xf32> to vector<8x64xf32>
    %151 = vector.broadcast %cst_56 : f32 to vector<8x64xf32>
    %152 = arith.select %147, %150, %151 : vector<8x64xi1>, vector<8x64xf32>
    %153 = arith.addf %144, %152 : vector<8x64xf32>
    %154 = vector.extract_strided_slice %79 {offsets = [0, 0], sizes = [8, 1], strides = [1, 1]} : vector<8x16xi32> to vector<8x1xi32>
    %155 = vector.broadcast %154 : vector<8x1xi32> to vector<8x64xi32>
    %156 = arith.cmpi eq, %118, %155 : vector<8x64xi32>
    %157 = vector.extract_strided_slice %137 {offsets = [0, 0], sizes = [8, 1], strides = [1, 1]} : vector<8x4xf32> to vector<8x1xf32>
    %cst_57 = arith.constant 0.000000e+00 : f32
    %158 = vector.shape_cast %157 : vector<8x1xf32> to vector<8x1xf32>
    %159 = vector.broadcast %158 : vector<8x1xf32> to vector<8x64xf32>
    %160 = vector.broadcast %cst_57 : f32 to vector<8x64xf32>
    %161 = arith.select %156, %159, %160 : vector<8x64xi1>, vector<8x64xf32>
    %162 = arith.addf %153, %161 : vector<8x64xf32>
    %163 = vector.extract_strided_slice %97 {offsets = [0, 0], sizes = [8, 1], strides = [1, 1]} : vector<8x16xi32> to vector<8x1xi32>
    %164 = vector.broadcast %163 : vector<8x1xi32> to vector<8x64xi32>
    %165 = arith.cmpi eq, %118, %164 : vector<8x64xi32>
    %166 = vector.extract_strided_slice %139 {offsets = [0, 0], sizes = [8, 1], strides = [1, 1]} : vector<8x4xf32> to vector<8x1xf32>
    %cst_58 = arith.constant 0.000000e+00 : f32
    %167 = vector.shape_cast %166 : vector<8x1xf32> to vector<8x1xf32>
    %168 = vector.broadcast %167 : vector<8x1xf32> to vector<8x64xf32>
    %169 = vector.broadcast %cst_58 : f32 to vector<8x64xf32>
    %170 = arith.select %165, %168, %169 : vector<8x64xi1>, vector<8x64xf32>
    %171 = arith.addf %162, %170 : vector<8x64xf32>
    %172 = vector.extract_strided_slice %117 {offsets = [0, 0], sizes = [8, 1], strides = [1, 1]} : vector<8x16xi32> to vector<8x1xi32>
    %173 = vector.broadcast %172 : vector<8x1xi32> to vector<8x64xi32>
    %174 = arith.cmpi eq, %118, %173 : vector<8x64xi32>
    %175 = vector.extract_strided_slice %141 {offsets = [0, 0], sizes = [8, 1], strides = [1, 1]} : vector<8x4xf32> to vector<8x1xf32>
    %cst_59 = arith.constant 0.000000e+00 : f32
    %176 = vector.shape_cast %175 : vector<8x1xf32> to vector<8x1xf32>
    %177 = vector.broadcast %176 : vector<8x1xf32> to vector<8x64xf32>
    %178 = vector.broadcast %cst_59 : f32 to vector<8x64xf32>
    %179 = arith.select %174, %177, %178 : vector<8x64xi1>, vector<8x64xf32>
    %180 = arith.addf %171, %179 : vector<8x64xf32>
    %181 = vector.extract_strided_slice %61 {offsets = [0, 1], sizes = [8, 1], strides = [1, 1]} : vector<8x16xi32> to vector<8x1xi32>
    %182 = vector.broadcast %181 : vector<8x1xi32> to vector<8x64xi32>
    %183 = arith.cmpi eq, %118, %182 : vector<8x64xi32>
    %184 = vector.extract_strided_slice %135 {offsets = [0, 1], sizes = [8, 1], strides = [1, 1]} : vector<8x4xf32> to vector<8x1xf32>
    %cst_60 = arith.constant 0.000000e+00 : f32
    %185 = vector.shape_cast %184 : vector<8x1xf32> to vector<8x1xf32>
    %186 = vector.broadcast %185 : vector<8x1xf32> to vector<8x64xf32>
    %187 = vector.broadcast %cst_60 : f32 to vector<8x64xf32>
    %188 = arith.select %183, %186, %187 : vector<8x64xi1>, vector<8x64xf32>
    %189 = arith.addf %180, %188 : vector<8x64xf32>
    %190 = vector.extract_strided_slice %79 {offsets = [0, 1], sizes = [8, 1], strides = [1, 1]} : vector<8x16xi32> to vector<8x1xi32>
    %191 = vector.broadcast %190 : vector<8x1xi32> to vector<8x64xi32>
    %192 = arith.cmpi eq, %118, %191 : vector<8x64xi32>
    %193 = vector.extract_strided_slice %137 {offsets = [0, 1], sizes = [8, 1], strides = [1, 1]} : vector<8x4xf32> to vector<8x1xf32>
    %cst_61 = arith.constant 0.000000e+00 : f32
    %194 = vector.shape_cast %193 : vector<8x1xf32> to vector<8x1xf32>
    %195 = vector.broadcast %194 : vector<8x1xf32> to vector<8x64xf32>
    %196 = vector.broadcast %cst_61 : f32 to vector<8x64xf32>
    %197 = arith.select %192, %195, %196 : vector<8x64xi1>, vector<8x64xf32>
    %198 = arith.addf %189, %197 : vector<8x64xf32>
    %199 = vector.extract_strided_slice %97 {offsets = [0, 1], sizes = [8, 1], strides = [1, 1]} : vector<8x16xi32> to vector<8x1xi32>
    %200 = vector.broadcast %199 : vector<8x1xi32> to vector<8x64xi32>
    %201 = arith.cmpi eq, %118, %200 : vector<8x64xi32>
    %202 = vector.extract_strided_slice %139 {offsets = [0, 1], sizes = [8, 1], strides = [1, 1]} : vector<8x4xf32> to vector<8x1xf32>
    %cst_62 = arith.constant 0.000000e+00 : f32
    %203 = vector.shape_cast %202 : vector<8x1xf32> to vector<8x1xf32>
    %204 = vector.broadcast %203 : vector<8x1xf32> to vector<8x64xf32>
    %205 = vector.broadcast %cst_62 : f32 to vector<8x64xf32>
    %206 = arith.select %201, %204, %205 : vector<8x64xi1>, vector<8x64xf32>
    %207 = arith.addf %198, %206 : vector<8x64xf32>
    %208 = vector.extract_strided_slice %117 {offsets = [0, 1], sizes = [8, 1], strides = [1, 1]} : vector<8x16xi32> to vector<8x1xi32>
    %209 = vector.broadcast %208 : vector<8x1xi32> to vector<8x64xi32>
    %210 = arith.cmpi eq, %118, %209 : vector<8x64xi32>
    %211 = vector.extract_strided_slice %141 {offsets = [0, 1], sizes = [8, 1], strides = [1, 1]} : vector<8x4xf32> to vector<8x1xf32>
    %cst_63 = arith.constant 0.000000e+00 : f32
    %212 = vector.shape_cast %211 : vector<8x1xf32> to vector<8x1xf32>
    %213 = vector.broadcast %212 : vector<8x1xf32> to vector<8x64xf32>
    %214 = vector.broadcast %cst_63 : f32 to vector<8x64xf32>
    %215 = arith.select %210, %213, %214 : vector<8x64xi1>, vector<8x64xf32>
    %216 = arith.addf %207, %215 : vector<8x64xf32>
    %217 = vector.extract_strided_slice %142 {offsets = [0, 0], sizes = [64, 8], strides = [1, 1]} : vector<80x8xf32> to vector<64x8xf32>
    %cst_64 = arith.constant dense<0.000000e+00> : vector<8x8xf32>
    %218 = tpu.matmul %216, %217, %cst_64 {dimension_numbers = #tpu.dot_dimension_numbers<[1], [0], [0], [1], [0, 0, 1, 1], [], []>} : vector<8x64xf32>, vector<64x8xf32>, vector<8x8xf32> -> vector<8x8xf32>
    %219 = arith.addf %143, %218 : vector<8x8xf32>
    %cst_65 = arith.constant 0.000000e+00 : f32
    %220 = vector.broadcast %cst_65 : f32 to vector<8x16xf32>
    %221 = vector.extract_strided_slice %61 {offsets = [0, 2], sizes = [8, 1], strides = [1, 1]} : vector<8x16xi32> to vector<8x1xi32>
    %222 = vector.broadcast %221 : vector<8x1xi32> to vector<8x16xi32>
    %223 = arith.cmpi eq, %119, %222 : vector<8x16xi32>
    %224 = vector.extract_strided_slice %135 {offsets = [0, 2], sizes = [8, 1], strides = [1, 1]} : vector<8x4xf32> to vector<8x1xf32>
    %cst_66 = arith.constant 0.000000e+00 : f32
    %225 = vector.shape_cast %224 : vector<8x1xf32> to vector<8x1xf32>
    %226 = vector.broadcast %225 : vector<8x1xf32> to vector<8x16xf32>
    %227 = vector.broadcast %cst_66 : f32 to vector<8x16xf32>
    %228 = arith.select %223, %226, %227 : vector<8x16xi1>, vector<8x16xf32>
    %229 = arith.addf %220, %228 : vector<8x16xf32>
    %230 = vector.extract_strided_slice %79 {offsets = [0, 2], sizes = [8, 1], strides = [1, 1]} : vector<8x16xi32> to vector<8x1xi32>
    %231 = vector.broadcast %230 : vector<8x1xi32> to vector<8x16xi32>
    %232 = arith.cmpi eq, %119, %231 : vector<8x16xi32>
    %233 = vector.extract_strided_slice %137 {offsets = [0, 2], sizes = [8, 1], strides = [1, 1]} : vector<8x4xf32> to vector<8x1xf32>
    %cst_67 = arith.constant 0.000000e+00 : f32
    %234 = vector.shape_cast %233 : vector<8x1xf32> to vector<8x1xf32>
    %235 = vector.broadcast %234 : vector<8x1xf32> to vector<8x16xf32>
    %236 = vector.broadcast %cst_67 : f32 to vector<8x16xf32>
    %237 = arith.select %232, %235, %236 : vector<8x16xi1>, vector<8x16xf32>
    %238 = arith.addf %229, %237 : vector<8x16xf32>
    %239 = vector.extract_strided_slice %97 {offsets = [0, 2], sizes = [8, 1], strides = [1, 1]} : vector<8x16xi32> to vector<8x1xi32>
    %240 = vector.broadcast %239 : vector<8x1xi32> to vector<8x16xi32>
    %241 = arith.cmpi eq, %119, %240 : vector<8x16xi32>
    %242 = vector.extract_strided_slice %139 {offsets = [0, 2], sizes = [8, 1], strides = [1, 1]} : vector<8x4xf32> to vector<8x1xf32>
    %cst_68 = arith.constant 0.000000e+00 : f32
    %243 = vector.shape_cast %242 : vector<8x1xf32> to vector<8x1xf32>
    %244 = vector.broadcast %243 : vector<8x1xf32> to vector<8x16xf32>
    %245 = vector.broadcast %cst_68 : f32 to vector<8x16xf32>
    %246 = arith.select %241, %244, %245 : vector<8x16xi1>, vector<8x16xf32>
    %247 = arith.addf %238, %246 : vector<8x16xf32>
    %248 = vector.extract_strided_slice %117 {offsets = [0, 2], sizes = [8, 1], strides = [1, 1]} : vector<8x16xi32> to vector<8x1xi32>
    %249 = vector.broadcast %248 : vector<8x1xi32> to vector<8x16xi32>
    %250 = arith.cmpi eq, %119, %249 : vector<8x16xi32>
    %251 = vector.extract_strided_slice %141 {offsets = [0, 2], sizes = [8, 1], strides = [1, 1]} : vector<8x4xf32> to vector<8x1xf32>
    %cst_69 = arith.constant 0.000000e+00 : f32
    %252 = vector.shape_cast %251 : vector<8x1xf32> to vector<8x1xf32>
    %253 = vector.broadcast %252 : vector<8x1xf32> to vector<8x16xf32>
    %254 = vector.broadcast %cst_69 : f32 to vector<8x16xf32>
    %255 = arith.select %250, %253, %254 : vector<8x16xi1>, vector<8x16xf32>
    %256 = arith.addf %247, %255 : vector<8x16xf32>
    %257 = vector.extract_strided_slice %61 {offsets = [0, 3], sizes = [8, 1], strides = [1, 1]} : vector<8x16xi32> to vector<8x1xi32>
    %258 = vector.broadcast %257 : vector<8x1xi32> to vector<8x16xi32>
    %259 = arith.cmpi eq, %119, %258 : vector<8x16xi32>
    %260 = vector.extract_strided_slice %135 {offsets = [0, 3], sizes = [8, 1], strides = [1, 1]} : vector<8x4xf32> to vector<8x1xf32>
    %cst_70 = arith.constant 0.000000e+00 : f32
    %261 = vector.shape_cast %260 : vector<8x1xf32> to vector<8x1xf32>
    %262 = vector.broadcast %261 : vector<8x1xf32> to vector<8x16xf32>
    %263 = vector.broadcast %cst_70 : f32 to vector<8x16xf32>
    %264 = arith.select %259, %262, %263 : vector<8x16xi1>, vector<8x16xf32>
    %265 = arith.addf %256, %264 : vector<8x16xf32>
    %266 = vector.extract_strided_slice %79 {offsets = [0, 3], sizes = [8, 1], strides = [1, 1]} : vector<8x16xi32> to vector<8x1xi32>
    %267 = vector.broadcast %266 : vector<8x1xi32> to vector<8x16xi32>
    %268 = arith.cmpi eq, %119, %267 : vector<8x16xi32>
    %269 = vector.extract_strided_slice %137 {offsets = [0, 3], sizes = [8, 1], strides = [1, 1]} : vector<8x4xf32> to vector<8x1xf32>
    %cst_71 = arith.constant 0.000000e+00 : f32
    %270 = vector.shape_cast %269 : vector<8x1xf32> to vector<8x1xf32>
    %271 = vector.broadcast %270 : vector<8x1xf32> to vector<8x16xf32>
    %272 = vector.broadcast %cst_71 : f32 to vector<8x16xf32>
    %273 = arith.select %268, %271, %272 : vector<8x16xi1>, vector<8x16xf32>
    %274 = arith.addf %265, %273 : vector<8x16xf32>
    %275 = vector.extract_strided_slice %97 {offsets = [0, 3], sizes = [8, 1], strides = [1, 1]} : vector<8x16xi32> to vector<8x1xi32>
    %276 = vector.broadcast %275 : vector<8x1xi32> to vector<8x16xi32>
    %277 = arith.cmpi eq, %119, %276 : vector<8x16xi32>
    %278 = vector.extract_strided_slice %139 {offsets = [0, 3], sizes = [8, 1], strides = [1, 1]} : vector<8x4xf32> to vector<8x1xf32>
    %cst_72 = arith.constant 0.000000e+00 : f32
    %279 = vector.shape_cast %278 : vector<8x1xf32> to vector<8x1xf32>
    %280 = vector.broadcast %279 : vector<8x1xf32> to vector<8x16xf32>
    %281 = vector.broadcast %cst_72 : f32 to vector<8x16xf32>
    %282 = arith.select %277, %280, %281 : vector<8x16xi1>, vector<8x16xf32>
    %283 = arith.addf %274, %282 : vector<8x16xf32>
    %284 = vector.extract_strided_slice %117 {offsets = [0, 3], sizes = [8, 1], strides = [1, 1]} : vector<8x16xi32> to vector<8x1xi32>
    %285 = vector.broadcast %284 : vector<8x1xi32> to vector<8x16xi32>
    %286 = arith.cmpi eq, %119, %285 : vector<8x16xi32>
    %287 = vector.extract_strided_slice %141 {offsets = [0, 3], sizes = [8, 1], strides = [1, 1]} : vector<8x4xf32> to vector<8x1xf32>
    %cst_73 = arith.constant 0.000000e+00 : f32
    %288 = vector.shape_cast %287 : vector<8x1xf32> to vector<8x1xf32>
    %289 = vector.broadcast %288 : vector<8x1xf32> to vector<8x16xf32>
    %290 = vector.broadcast %cst_73 : f32 to vector<8x16xf32>
    %291 = arith.select %286, %289, %290 : vector<8x16xi1>, vector<8x16xf32>
    %292 = arith.addf %283, %291 : vector<8x16xf32>
    %293 = vector.extract_strided_slice %142 {offsets = [64, 0], sizes = [16, 8], strides = [1, 1]} : vector<80x8xf32> to vector<16x8xf32>
    %cst_74 = arith.constant dense<0.000000e+00> : vector<8x8xf32>
    %294 = tpu.matmul %292, %293, %cst_74 {dimension_numbers = #tpu.dot_dimension_numbers<[1], [0], [0], [1], [0, 0, 1, 1], [], []>} : vector<8x16xf32>, vector<16x8xf32>, vector<8x8xf32> -> vector<8x8xf32>
    %295 = arith.addf %219, %294 : vector<8x8xf32>
    %296 = vector.extract_strided_slice %121 {offsets = [0, 0], sizes = [8, 32], strides = [1, 1]} : vector<32x32xf32> to vector<8x32xf32>
    %cst_75 = arith.constant dense<0.000000e+00> : vector<8x32xf32>
    %297 = tpu.matmul %295, %296, %cst_75 {dimension_numbers = #tpu.dot_dimension_numbers<[1], [0], [0], [1], [0, 0, 1, 1], [], []>} : vector<8x8xf32>, vector<8x32xf32>, vector<8x32xf32> -> vector<8x32xf32>
    %298 = arith.addf %122, %297 : vector<8x32xf32>
    %299 = vector.extract_strided_slice %21 {offsets = [0, 4], sizes = [8, 4], strides = [1, 1]} : vector<8x16xf32> to vector<8x4xf32>
    %cst_76 = arith.constant dense<0xFF800000> : vector<8xf32>
    %300 = vector.multi_reduction <maximumf>, %299, %cst_76 [1] : vector<8x4xf32> to vector<8xf32>
    %301 = vector.shape_cast %300 : vector<8xf32> to vector<8x1xf32>
    %302 = vector.broadcast %301 : vector<8x1xf32> to vector<8x4xf32>
    %303 = arith.subf %299, %302 : vector<8x4xf32>
    %304 = math.exp %303 : vector<8x4xf32>
    %cst_77 = arith.constant dense<0.000000e+00> : vector<8xf32>
    %305 = vector.multi_reduction <add>, %304, %cst_77 [1] : vector<8x4xf32> to vector<8xf32>
    %306 = vector.shape_cast %305 : vector<8xf32> to vector<8x1xf32>
    %307 = tpu.reciprocal %306 {approx = true} : vector<8x1xf32> -> vector<8x1xf32>
    %308 = vector.broadcast %307 : vector<8x1xf32> to vector<8x4xf32>
    %309 = arith.mulf %304, %308 : vector<8x4xf32>
    %310 = vector.extract_strided_slice %42 {offsets = [0, 4], sizes = [8, 4], strides = [1, 1]} : vector<8x16xf32> to vector<8x4xf32>
    %311 = arith.mulf %310, %309 : vector<8x4xf32>
    %312 = vector.extract_strided_slice %43 {offsets = [0, 4], sizes = [8, 4], strides = [1, 1]} : vector<8x16xf32> to vector<8x4xf32>
    %313 = arith.mulf %312, %309 : vector<8x4xf32>
    %314 = vector.extract_strided_slice %44 {offsets = [0, 4], sizes = [8, 4], strides = [1, 1]} : vector<8x16xf32> to vector<8x4xf32>
    %315 = arith.mulf %314, %309 : vector<8x4xf32>
    %316 = vector.extract_strided_slice %45 {offsets = [0, 4], sizes = [8, 4], strides = [1, 1]} : vector<8x16xf32> to vector<8x4xf32>
    %317 = arith.mulf %316, %309 : vector<8x4xf32>
    %318 = vector.extract_strided_slice %11 {offsets = [0, 8], sizes = [80, 8], strides = [1, 1]} : vector<80x32xf32> to vector<80x8xf32>
    %cst_78 = arith.constant 0.000000e+00 : f32
    %319 = vector.broadcast %cst_78 : f32 to vector<8x8xf32>
    %cst_79 = arith.constant 0.000000e+00 : f32
    %320 = vector.broadcast %cst_79 : f32 to vector<8x64xf32>
    %321 = vector.extract_strided_slice %61 {offsets = [0, 4], sizes = [8, 1], strides = [1, 1]} : vector<8x16xi32> to vector<8x1xi32>
    %322 = vector.broadcast %321 : vector<8x1xi32> to vector<8x64xi32>
    %323 = arith.cmpi eq, %118, %322 : vector<8x64xi32>
    %324 = vector.extract_strided_slice %311 {offsets = [0, 0], sizes = [8, 1], strides = [1, 1]} : vector<8x4xf32> to vector<8x1xf32>
    %cst_80 = arith.constant 0.000000e+00 : f32
    %325 = vector.shape_cast %324 : vector<8x1xf32> to vector<8x1xf32>
    %326 = vector.broadcast %325 : vector<8x1xf32> to vector<8x64xf32>
    %327 = vector.broadcast %cst_80 : f32 to vector<8x64xf32>
    %328 = arith.select %323, %326, %327 : vector<8x64xi1>, vector<8x64xf32>
    %329 = arith.addf %320, %328 : vector<8x64xf32>
    %330 = vector.extract_strided_slice %79 {offsets = [0, 4], sizes = [8, 1], strides = [1, 1]} : vector<8x16xi32> to vector<8x1xi32>
    %331 = vector.broadcast %330 : vector<8x1xi32> to vector<8x64xi32>
    %332 = arith.cmpi eq, %118, %331 : vector<8x64xi32>
    %333 = vector.extract_strided_slice %313 {offsets = [0, 0], sizes = [8, 1], strides = [1, 1]} : vector<8x4xf32> to vector<8x1xf32>
    %cst_81 = arith.constant 0.000000e+00 : f32
    %334 = vector.shape_cast %333 : vector<8x1xf32> to vector<8x1xf32>
    %335 = vector.broadcast %334 : vector<8x1xf32> to vector<8x64xf32>
    %336 = vector.broadcast %cst_81 : f32 to vector<8x64xf32>
    %337 = arith.select %332, %335, %336 : vector<8x64xi1>, vector<8x64xf32>
    %338 = arith.addf %329, %337 : vector<8x64xf32>
    %339 = vector.extract_strided_slice %97 {offsets = [0, 4], sizes = [8, 1], strides = [1, 1]} : vector<8x16xi32> to vector<8x1xi32>
    %340 = vector.broadcast %339 : vector<8x1xi32> to vector<8x64xi32>
    %341 = arith.cmpi eq, %118, %340 : vector<8x64xi32>
    %342 = vector.extract_strided_slice %315 {offsets = [0, 0], sizes = [8, 1], strides = [1, 1]} : vector<8x4xf32> to vector<8x1xf32>
    %cst_82 = arith.constant 0.000000e+00 : f32
    %343 = vector.shape_cast %342 : vector<8x1xf32> to vector<8x1xf32>
    %344 = vector.broadcast %343 : vector<8x1xf32> to vector<8x64xf32>
    %345 = vector.broadcast %cst_82 : f32 to vector<8x64xf32>
    %346 = arith.select %341, %344, %345 : vector<8x64xi1>, vector<8x64xf32>
    %347 = arith.addf %338, %346 : vector<8x64xf32>
    %348 = vector.extract_strided_slice %117 {offsets = [0, 4], sizes = [8, 1], strides = [1, 1]} : vector<8x16xi32> to vector<8x1xi32>
    %349 = vector.broadcast %348 : vector<8x1xi32> to vector<8x64xi32>
    %350 = arith.cmpi eq, %118, %349 : vector<8x64xi32>
    %351 = vector.extract_strided_slice %317 {offsets = [0, 0], sizes = [8, 1], strides = [1, 1]} : vector<8x4xf32> to vector<8x1xf32>
    %cst_83 = arith.constant 0.000000e+00 : f32
    %352 = vector.shape_cast %351 : vector<8x1xf32> to vector<8x1xf32>
    %353 = vector.broadcast %352 : vector<8x1xf32> to vector<8x64xf32>
    %354 = vector.broadcast %cst_83 : f32 to vector<8x64xf32>
    %355 = arith.select %350, %353, %354 : vector<8x64xi1>, vector<8x64xf32>
    %356 = arith.addf %347, %355 : vector<8x64xf32>
    %357 = vector.extract_strided_slice %61 {offsets = [0, 5], sizes = [8, 1], strides = [1, 1]} : vector<8x16xi32> to vector<8x1xi32>
    %358 = vector.broadcast %357 : vector<8x1xi32> to vector<8x64xi32>
    %359 = arith.cmpi eq, %118, %358 : vector<8x64xi32>
    %360 = vector.extract_strided_slice %311 {offsets = [0, 1], sizes = [8, 1], strides = [1, 1]} : vector<8x4xf32> to vector<8x1xf32>
    %cst_84 = arith.constant 0.000000e+00 : f32
    %361 = vector.shape_cast %360 : vector<8x1xf32> to vector<8x1xf32>
    %362 = vector.broadcast %361 : vector<8x1xf32> to vector<8x64xf32>
    %363 = vector.broadcast %cst_84 : f32 to vector<8x64xf32>
    %364 = arith.select %359, %362, %363 : vector<8x64xi1>, vector<8x64xf32>
    %365 = arith.addf %356, %364 : vector<8x64xf32>
    %366 = vector.extract_strided_slice %79 {offsets = [0, 5], sizes = [8, 1], strides = [1, 1]} : vector<8x16xi32> to vector<8x1xi32>
    %367 = vector.broadcast %366 : vector<8x1xi32> to vector<8x64xi32>
    %368 = arith.cmpi eq, %118, %367 : vector<8x64xi32>
    %369 = vector.extract_strided_slice %313 {offsets = [0, 1], sizes = [8, 1], strides = [1, 1]} : vector<8x4xf32> to vector<8x1xf32>
    %cst_85 = arith.constant 0.000000e+00 : f32
    %370 = vector.shape_cast %369 : vector<8x1xf32> to vector<8x1xf32>
    %371 = vector.broadcast %370 : vector<8x1xf32> to vector<8x64xf32>
    %372 = vector.broadcast %cst_85 : f32 to vector<8x64xf32>
    %373 = arith.select %368, %371, %372 : vector<8x64xi1>, vector<8x64xf32>
    %374 = arith.addf %365, %373 : vector<8x64xf32>
    %375 = vector.extract_strided_slice %97 {offsets = [0, 5], sizes = [8, 1], strides = [1, 1]} : vector<8x16xi32> to vector<8x1xi32>
    %376 = vector.broadcast %375 : vector<8x1xi32> to vector<8x64xi32>
    %377 = arith.cmpi eq, %118, %376 : vector<8x64xi32>
    %378 = vector.extract_strided_slice %315 {offsets = [0, 1], sizes = [8, 1], strides = [1, 1]} : vector<8x4xf32> to vector<8x1xf32>
    %cst_86 = arith.constant 0.000000e+00 : f32
    %379 = vector.shape_cast %378 : vector<8x1xf32> to vector<8x1xf32>
    %380 = vector.broadcast %379 : vector<8x1xf32> to vector<8x64xf32>
    %381 = vector.broadcast %cst_86 : f32 to vector<8x64xf32>
    %382 = arith.select %377, %380, %381 : vector<8x64xi1>, vector<8x64xf32>
    %383 = arith.addf %374, %382 : vector<8x64xf32>
    %384 = vector.extract_strided_slice %117 {offsets = [0, 5], sizes = [8, 1], strides = [1, 1]} : vector<8x16xi32> to vector<8x1xi32>
    %385 = vector.broadcast %384 : vector<8x1xi32> to vector<8x64xi32>
    %386 = arith.cmpi eq, %118, %385 : vector<8x64xi32>
    %387 = vector.extract_strided_slice %317 {offsets = [0, 1], sizes = [8, 1], strides = [1, 1]} : vector<8x4xf32> to vector<8x1xf32>
    %cst_87 = arith.constant 0.000000e+00 : f32
    %388 = vector.shape_cast %387 : vector<8x1xf32> to vector<8x1xf32>
    %389 = vector.broadcast %388 : vector<8x1xf32> to vector<8x64xf32>
    %390 = vector.broadcast %cst_87 : f32 to vector<8x64xf32>
    %391 = arith.select %386, %389, %390 : vector<8x64xi1>, vector<8x64xf32>
    %392 = arith.addf %383, %391 : vector<8x64xf32>
    %393 = vector.extract_strided_slice %318 {offsets = [0, 0], sizes = [64, 8], strides = [1, 1]} : vector<80x8xf32> to vector<64x8xf32>
    %cst_88 = arith.constant dense<0.000000e+00> : vector<8x8xf32>
    %394 = tpu.matmul %392, %393, %cst_88 {dimension_numbers = #tpu.dot_dimension_numbers<[1], [0], [0], [1], [0, 0, 1, 1], [], []>} : vector<8x64xf32>, vector<64x8xf32>, vector<8x8xf32> -> vector<8x8xf32>
    %395 = arith.addf %319, %394 : vector<8x8xf32>
    %cst_89 = arith.constant 0.000000e+00 : f32
    %396 = vector.broadcast %cst_89 : f32 to vector<8x16xf32>
    %397 = vector.extract_strided_slice %61 {offsets = [0, 6], sizes = [8, 1], strides = [1, 1]} : vector<8x16xi32> to vector<8x1xi32>
    %398 = vector.broadcast %397 : vector<8x1xi32> to vector<8x16xi32>
    %399 = arith.cmpi eq, %119, %398 : vector<8x16xi32>
    %400 = vector.extract_strided_slice %311 {offsets = [0, 2], sizes = [8, 1], strides = [1, 1]} : vector<8x4xf32> to vector<8x1xf32>
    %cst_90 = arith.constant 0.000000e+00 : f32
    %401 = vector.shape_cast %400 : vector<8x1xf32> to vector<8x1xf32>
    %402 = vector.broadcast %401 : vector<8x1xf32> to vector<8x16xf32>
    %403 = vector.broadcast %cst_90 : f32 to vector<8x16xf32>
    %404 = arith.select %399, %402, %403 : vector<8x16xi1>, vector<8x16xf32>
    %405 = arith.addf %396, %404 : vector<8x16xf32>
    %406 = vector.extract_strided_slice %79 {offsets = [0, 6], sizes = [8, 1], strides = [1, 1]} : vector<8x16xi32> to vector<8x1xi32>
    %407 = vector.broadcast %406 : vector<8x1xi32> to vector<8x16xi32>
    %408 = arith.cmpi eq, %119, %407 : vector<8x16xi32>
    %409 = vector.extract_strided_slice %313 {offsets = [0, 2], sizes = [8, 1], strides = [1, 1]} : vector<8x4xf32> to vector<8x1xf32>
    %cst_91 = arith.constant 0.000000e+00 : f32
    %410 = vector.shape_cast %409 : vector<8x1xf32> to vector<8x1xf32>
    %411 = vector.broadcast %410 : vector<8x1xf32> to vector<8x16xf32>
    %412 = vector.broadcast %cst_91 : f32 to vector<8x16xf32>
    %413 = arith.select %408, %411, %412 : vector<8x16xi1>, vector<8x16xf32>
    %414 = arith.addf %405, %413 : vector<8x16xf32>
    %415 = vector.extract_strided_slice %97 {offsets = [0, 6], sizes = [8, 1], strides = [1, 1]} : vector<8x16xi32> to vector<8x1xi32>
    %416 = vector.broadcast %415 : vector<8x1xi32> to vector<8x16xi32>
    %417 = arith.cmpi eq, %119, %416 : vector<8x16xi32>
    %418 = vector.extract_strided_slice %315 {offsets = [0, 2], sizes = [8, 1], strides = [1, 1]} : vector<8x4xf32> to vector<8x1xf32>
    %cst_92 = arith.constant 0.000000e+00 : f32
    %419 = vector.shape_cast %418 : vector<8x1xf32> to vector<8x1xf32>
    %420 = vector.broadcast %419 : vector<8x1xf32> to vector<8x16xf32>
    %421 = vector.broadcast %cst_92 : f32 to vector<8x16xf32>
    %422 = arith.select %417, %420, %421 : vector<8x16xi1>, vector<8x16xf32>
    %423 = arith.addf %414, %422 : vector<8x16xf32>
    %424 = vector.extract_strided_slice %117 {offsets = [0, 6], sizes = [8, 1], strides = [1, 1]} : vector<8x16xi32> to vector<8x1xi32>
    %425 = vector.broadcast %424 : vector<8x1xi32> to vector<8x16xi32>
    %426 = arith.cmpi eq, %119, %425 : vector<8x16xi32>
    %427 = vector.extract_strided_slice %317 {offsets = [0, 2], sizes = [8, 1], strides = [1, 1]} : vector<8x4xf32> to vector<8x1xf32>
    %cst_93 = arith.constant 0.000000e+00 : f32
    %428 = vector.shape_cast %427 : vector<8x1xf32> to vector<8x1xf32>
    %429 = vector.broadcast %428 : vector<8x1xf32> to vector<8x16xf32>
    %430 = vector.broadcast %cst_93 : f32 to vector<8x16xf32>
    %431 = arith.select %426, %429, %430 : vector<8x16xi1>, vector<8x16xf32>
    %432 = arith.addf %423, %431 : vector<8x16xf32>
    %433 = vector.extract_strided_slice %61 {offsets = [0, 7], sizes = [8, 1], strides = [1, 1]} : vector<8x16xi32> to vector<8x1xi32>
    %434 = vector.broadcast %433 : vector<8x1xi32> to vector<8x16xi32>
    %435 = arith.cmpi eq, %119, %434 : vector<8x16xi32>
    %436 = vector.extract_strided_slice %311 {offsets = [0, 3], sizes = [8, 1], strides = [1, 1]} : vector<8x4xf32> to vector<8x1xf32>
    %cst_94 = arith.constant 0.000000e+00 : f32
    %437 = vector.shape_cast %436 : vector<8x1xf32> to vector<8x1xf32>
    %438 = vector.broadcast %437 : vector<8x1xf32> to vector<8x16xf32>
    %439 = vector.broadcast %cst_94 : f32 to vector<8x16xf32>
    %440 = arith.select %435, %438, %439 : vector<8x16xi1>, vector<8x16xf32>
    %441 = arith.addf %432, %440 : vector<8x16xf32>
    %442 = vector.extract_strided_slice %79 {offsets = [0, 7], sizes = [8, 1], strides = [1, 1]} : vector<8x16xi32> to vector<8x1xi32>
    %443 = vector.broadcast %442 : vector<8x1xi32> to vector<8x16xi32>
    %444 = arith.cmpi eq, %119, %443 : vector<8x16xi32>
    %445 = vector.extract_strided_slice %313 {offsets = [0, 3], sizes = [8, 1], strides = [1, 1]} : vector<8x4xf32> to vector<8x1xf32>
    %cst_95 = arith.constant 0.000000e+00 : f32
    %446 = vector.shape_cast %445 : vector<8x1xf32> to vector<8x1xf32>
    %447 = vector.broadcast %446 : vector<8x1xf32> to vector<8x16xf32>
    %448 = vector.broadcast %cst_95 : f32 to vector<8x16xf32>
    %449 = arith.select %444, %447, %448 : vector<8x16xi1>, vector<8x16xf32>
    %450 = arith.addf %441, %449 : vector<8x16xf32>
    %451 = vector.extract_strided_slice %97 {offsets = [0, 7], sizes = [8, 1], strides = [1, 1]} : vector<8x16xi32> to vector<8x1xi32>
    %452 = vector.broadcast %451 : vector<8x1xi32> to vector<8x16xi32>
    %453 = arith.cmpi eq, %119, %452 : vector<8x16xi32>
    %454 = vector.extract_strided_slice %315 {offsets = [0, 3], sizes = [8, 1], strides = [1, 1]} : vector<8x4xf32> to vector<8x1xf32>
    %cst_96 = arith.constant 0.000000e+00 : f32
    %455 = vector.shape_cast %454 : vector<8x1xf32> to vector<8x1xf32>
    %456 = vector.broadcast %455 : vector<8x1xf32> to vector<8x16xf32>
    %457 = vector.broadcast %cst_96 : f32 to vector<8x16xf32>
    %458 = arith.select %453, %456, %457 : vector<8x16xi1>, vector<8x16xf32>
    %459 = arith.addf %450, %458 : vector<8x16xf32>
    %460 = vector.extract_strided_slice %117 {offsets = [0, 7], sizes = [8, 1], strides = [1, 1]} : vector<8x16xi32> to vector<8x1xi32>
    %461 = vector.broadcast %460 : vector<8x1xi32> to vector<8x16xi32>
    %462 = arith.cmpi eq, %119, %461 : vector<8x16xi32>
    %463 = vector.extract_strided_slice %317 {offsets = [0, 3], sizes = [8, 1], strides = [1, 1]} : vector<8x4xf32> to vector<8x1xf32>
    %cst_97 = arith.constant 0.000000e+00 : f32
    %464 = vector.shape_cast %463 : vector<8x1xf32> to vector<8x1xf32>
    %465 = vector.broadcast %464 : vector<8x1xf32> to vector<8x16xf32>
    %466 = vector.broadcast %cst_97 : f32 to vector<8x16xf32>
    %467 = arith.select %462, %465, %466 : vector<8x16xi1>, vector<8x16xf32>
    %468 = arith.addf %459, %467 : vector<8x16xf32>
    %469 = vector.extract_strided_slice %318 {offsets = [64, 0], sizes = [16, 8], strides = [1, 1]} : vector<80x8xf32> to vector<16x8xf32>
    %cst_98 = arith.constant dense<0.000000e+00> : vector<8x8xf32>
    %470 = tpu.matmul %468, %469, %cst_98 {dimension_numbers = #tpu.dot_dimension_numbers<[1], [0], [0], [1], [0, 0, 1, 1], [], []>} : vector<8x16xf32>, vector<16x8xf32>, vector<8x8xf32> -> vector<8x8xf32>
    %471 = arith.addf %395, %470 : vector<8x8xf32>
    %472 = vector.extract_strided_slice %121 {offsets = [8, 0], sizes = [8, 32], strides = [1, 1]} : vector<32x32xf32> to vector<8x32xf32>
    %cst_99 = arith.constant dense<0.000000e+00> : vector<8x32xf32>
    %473 = tpu.matmul %471, %472, %cst_99 {dimension_numbers = #tpu.dot_dimension_numbers<[1], [0], [0], [1], [0, 0, 1, 1], [], []>} : vector<8x8xf32>, vector<8x32xf32>, vector<8x32xf32> -> vector<8x32xf32>
    %474 = arith.addf %298, %473 : vector<8x32xf32>
    %475 = vector.extract_strided_slice %21 {offsets = [0, 8], sizes = [8, 4], strides = [1, 1]} : vector<8x16xf32> to vector<8x4xf32>
    %cst_100 = arith.constant dense<0xFF800000> : vector<8xf32>
    %476 = vector.multi_reduction <maximumf>, %475, %cst_100 [1] : vector<8x4xf32> to vector<8xf32>
    %477 = vector.shape_cast %476 : vector<8xf32> to vector<8x1xf32>
    %478 = vector.broadcast %477 : vector<8x1xf32> to vector<8x4xf32>
    %479 = arith.subf %475, %478 : vector<8x4xf32>
    %480 = math.exp %479 : vector<8x4xf32>
    %cst_101 = arith.constant dense<0.000000e+00> : vector<8xf32>
    %481 = vector.multi_reduction <add>, %480, %cst_101 [1] : vector<8x4xf32> to vector<8xf32>
    %482 = vector.shape_cast %481 : vector<8xf32> to vector<8x1xf32>
    %483 = tpu.reciprocal %482 {approx = true} : vector<8x1xf32> -> vector<8x1xf32>
    %484 = vector.broadcast %483 : vector<8x1xf32> to vector<8x4xf32>
    %485 = arith.mulf %480, %484 : vector<8x4xf32>
    %486 = vector.extract_strided_slice %42 {offsets = [0, 8], sizes = [8, 4], strides = [1, 1]} : vector<8x16xf32> to vector<8x4xf32>
    %487 = arith.mulf %486, %485 : vector<8x4xf32>
    %488 = vector.extract_strided_slice %43 {offsets = [0, 8], sizes = [8, 4], strides = [1, 1]} : vector<8x16xf32> to vector<8x4xf32>
    %489 = arith.mulf %488, %485 : vector<8x4xf32>
    %490 = vector.extract_strided_slice %44 {offsets = [0, 8], sizes = [8, 4], strides = [1, 1]} : vector<8x16xf32> to vector<8x4xf32>
    %491 = arith.mulf %490, %485 : vector<8x4xf32>
    %492 = vector.extract_strided_slice %45 {offsets = [0, 8], sizes = [8, 4], strides = [1, 1]} : vector<8x16xf32> to vector<8x4xf32>
    %493 = arith.mulf %492, %485 : vector<8x4xf32>
    %494 = vector.extract_strided_slice %11 {offsets = [0, 16], sizes = [80, 8], strides = [1, 1]} : vector<80x32xf32> to vector<80x8xf32>
    %cst_102 = arith.constant 0.000000e+00 : f32
    %495 = vector.broadcast %cst_102 : f32 to vector<8x8xf32>
    %cst_103 = arith.constant 0.000000e+00 : f32
    %496 = vector.broadcast %cst_103 : f32 to vector<8x64xf32>
    %497 = vector.extract_strided_slice %61 {offsets = [0, 8], sizes = [8, 1], strides = [1, 1]} : vector<8x16xi32> to vector<8x1xi32>
    %498 = vector.broadcast %497 : vector<8x1xi32> to vector<8x64xi32>
    %499 = arith.cmpi eq, %118, %498 : vector<8x64xi32>
    %500 = vector.extract_strided_slice %487 {offsets = [0, 0], sizes = [8, 1], strides = [1, 1]} : vector<8x4xf32> to vector<8x1xf32>
    %cst_104 = arith.constant 0.000000e+00 : f32
    %501 = vector.shape_cast %500 : vector<8x1xf32> to vector<8x1xf32>
    %502 = vector.broadcast %501 : vector<8x1xf32> to vector<8x64xf32>
    %503 = vector.broadcast %cst_104 : f32 to vector<8x64xf32>
    %504 = arith.select %499, %502, %503 : vector<8x64xi1>, vector<8x64xf32>
    %505 = arith.addf %496, %504 : vector<8x64xf32>
    %506 = vector.extract_strided_slice %79 {offsets = [0, 8], sizes = [8, 1], strides = [1, 1]} : vector<8x16xi32> to vector<8x1xi32>
    %507 = vector.broadcast %506 : vector<8x1xi32> to vector<8x64xi32>
    %508 = arith.cmpi eq, %118, %507 : vector<8x64xi32>
    %509 = vector.extract_strided_slice %489 {offsets = [0, 0], sizes = [8, 1], strides = [1, 1]} : vector<8x4xf32> to vector<8x1xf32>
    %cst_105 = arith.constant 0.000000e+00 : f32
    %510 = vector.shape_cast %509 : vector<8x1xf32> to vector<8x1xf32>
    %511 = vector.broadcast %510 : vector<8x1xf32> to vector<8x64xf32>
    %512 = vector.broadcast %cst_105 : f32 to vector<8x64xf32>
    %513 = arith.select %508, %511, %512 : vector<8x64xi1>, vector<8x64xf32>
    %514 = arith.addf %505, %513 : vector<8x64xf32>
    %515 = vector.extract_strided_slice %97 {offsets = [0, 8], sizes = [8, 1], strides = [1, 1]} : vector<8x16xi32> to vector<8x1xi32>
    %516 = vector.broadcast %515 : vector<8x1xi32> to vector<8x64xi32>
    %517 = arith.cmpi eq, %118, %516 : vector<8x64xi32>
    %518 = vector.extract_strided_slice %491 {offsets = [0, 0], sizes = [8, 1], strides = [1, 1]} : vector<8x4xf32> to vector<8x1xf32>
    %cst_106 = arith.constant 0.000000e+00 : f32
    %519 = vector.shape_cast %518 : vector<8x1xf32> to vector<8x1xf32>
    %520 = vector.broadcast %519 : vector<8x1xf32> to vector<8x64xf32>
    %521 = vector.broadcast %cst_106 : f32 to vector<8x64xf32>
    %522 = arith.select %517, %520, %521 : vector<8x64xi1>, vector<8x64xf32>
    %523 = arith.addf %514, %522 : vector<8x64xf32>
    %524 = vector.extract_strided_slice %117 {offsets = [0, 8], sizes = [8, 1], strides = [1, 1]} : vector<8x16xi32> to vector<8x1xi32>
    %525 = vector.broadcast %524 : vector<8x1xi32> to vector<8x64xi32>
    %526 = arith.cmpi eq, %118, %525 : vector<8x64xi32>
    %527 = vector.extract_strided_slice %493 {offsets = [0, 0], sizes = [8, 1], strides = [1, 1]} : vector<8x4xf32> to vector<8x1xf32>
    %cst_107 = arith.constant 0.000000e+00 : f32
    %528 = vector.shape_cast %527 : vector<8x1xf32> to vector<8x1xf32>
    %529 = vector.broadcast %528 : vector<8x1xf32> to vector<8x64xf32>
    %530 = vector.broadcast %cst_107 : f32 to vector<8x64xf32>
    %531 = arith.select %526, %529, %530 : vector<8x64xi1>, vector<8x64xf32>
    %532 = arith.addf %523, %531 : vector<8x64xf32>
    %533 = vector.extract_strided_slice %61 {offsets = [0, 9], sizes = [8, 1], strides = [1, 1]} : vector<8x16xi32> to vector<8x1xi32>
    %534 = vector.broadcast %533 : vector<8x1xi32> to vector<8x64xi32>
    %535 = arith.cmpi eq, %118, %534 : vector<8x64xi32>
    %536 = vector.extract_strided_slice %487 {offsets = [0, 1], sizes = [8, 1], strides = [1, 1]} : vector<8x4xf32> to vector<8x1xf32>
    %cst_108 = arith.constant 0.000000e+00 : f32
    %537 = vector.shape_cast %536 : vector<8x1xf32> to vector<8x1xf32>
    %538 = vector.broadcast %537 : vector<8x1xf32> to vector<8x64xf32>
    %539 = vector.broadcast %cst_108 : f32 to vector<8x64xf32>
    %540 = arith.select %535, %538, %539 : vector<8x64xi1>, vector<8x64xf32>
    %541 = arith.addf %532, %540 : vector<8x64xf32>
    %542 = vector.extract_strided_slice %79 {offsets = [0, 9], sizes = [8, 1], strides = [1, 1]} : vector<8x16xi32> to vector<8x1xi32>
    %543 = vector.broadcast %542 : vector<8x1xi32> to vector<8x64xi32>
    %544 = arith.cmpi eq, %118, %543 : vector<8x64xi32>
    %545 = vector.extract_strided_slice %489 {offsets = [0, 1], sizes = [8, 1], strides = [1, 1]} : vector<8x4xf32> to vector<8x1xf32>
    %cst_109 = arith.constant 0.000000e+00 : f32
    %546 = vector.shape_cast %545 : vector<8x1xf32> to vector<8x1xf32>
    %547 = vector.broadcast %546 : vector<8x1xf32> to vector<8x64xf32>
    %548 = vector.broadcast %cst_109 : f32 to vector<8x64xf32>
    %549 = arith.select %544, %547, %548 : vector<8x64xi1>, vector<8x64xf32>
    %550 = arith.addf %541, %549 : vector<8x64xf32>
    %551 = vector.extract_strided_slice %97 {offsets = [0, 9], sizes = [8, 1], strides = [1, 1]} : vector<8x16xi32> to vector<8x1xi32>
    %552 = vector.broadcast %551 : vector<8x1xi32> to vector<8x64xi32>
    %553 = arith.cmpi eq, %118, %552 : vector<8x64xi32>
    %554 = vector.extract_strided_slice %491 {offsets = [0, 1], sizes = [8, 1], strides = [1, 1]} : vector<8x4xf32> to vector<8x1xf32>
    %cst_110 = arith.constant 0.000000e+00 : f32
    %555 = vector.shape_cast %554 : vector<8x1xf32> to vector<8x1xf32>
    %556 = vector.broadcast %555 : vector<8x1xf32> to vector<8x64xf32>
    %557 = vector.broadcast %cst_110 : f32 to vector<8x64xf32>
    %558 = arith.select %553, %556, %557 : vector<8x64xi1>, vector<8x64xf32>
    %559 = arith.addf %550, %558 : vector<8x64xf32>
    %560 = vector.extract_strided_slice %117 {offsets = [0, 9], sizes = [8, 1], strides = [1, 1]} : vector<8x16xi32> to vector<8x1xi32>
    %561 = vector.broadcast %560 : vector<8x1xi32> to vector<8x64xi32>
    %562 = arith.cmpi eq, %118, %561 : vector<8x64xi32>
    %563 = vector.extract_strided_slice %493 {offsets = [0, 1], sizes = [8, 1], strides = [1, 1]} : vector<8x4xf32> to vector<8x1xf32>
    %cst_111 = arith.constant 0.000000e+00 : f32
    %564 = vector.shape_cast %563 : vector<8x1xf32> to vector<8x1xf32>
    %565 = vector.broadcast %564 : vector<8x1xf32> to vector<8x64xf32>
    %566 = vector.broadcast %cst_111 : f32 to vector<8x64xf32>
    %567 = arith.select %562, %565, %566 : vector<8x64xi1>, vector<8x64xf32>
    %568 = arith.addf %559, %567 : vector<8x64xf32>
    %569 = vector.extract_strided_slice %494 {offsets = [0, 0], sizes = [64, 8], strides = [1, 1]} : vector<80x8xf32> to vector<64x8xf32>
    %cst_112 = arith.constant dense<0.000000e+00> : vector<8x8xf32>
    %570 = tpu.matmul %568, %569, %cst_112 {dimension_numbers = #tpu.dot_dimension_numbers<[1], [0], [0], [1], [0, 0, 1, 1], [], []>} : vector<8x64xf32>, vector<64x8xf32>, vector<8x8xf32> -> vector<8x8xf32>
    %571 = arith.addf %495, %570 : vector<8x8xf32>
    %cst_113 = arith.constant 0.000000e+00 : f32
    %572 = vector.broadcast %cst_113 : f32 to vector<8x16xf32>
    %573 = vector.extract_strided_slice %61 {offsets = [0, 10], sizes = [8, 1], strides = [1, 1]} : vector<8x16xi32> to vector<8x1xi32>
    %574 = vector.broadcast %573 : vector<8x1xi32> to vector<8x16xi32>
    %575 = arith.cmpi eq, %119, %574 : vector<8x16xi32>
    %576 = vector.extract_strided_slice %487 {offsets = [0, 2], sizes = [8, 1], strides = [1, 1]} : vector<8x4xf32> to vector<8x1xf32>
    %cst_114 = arith.constant 0.000000e+00 : f32
    %577 = vector.shape_cast %576 : vector<8x1xf32> to vector<8x1xf32>
    %578 = vector.broadcast %577 : vector<8x1xf32> to vector<8x16xf32>
    %579 = vector.broadcast %cst_114 : f32 to vector<8x16xf32>
    %580 = arith.select %575, %578, %579 : vector<8x16xi1>, vector<8x16xf32>
    %581 = arith.addf %572, %580 : vector<8x16xf32>
    %582 = vector.extract_strided_slice %79 {offsets = [0, 10], sizes = [8, 1], strides = [1, 1]} : vector<8x16xi32> to vector<8x1xi32>
    %583 = vector.broadcast %582 : vector<8x1xi32> to vector<8x16xi32>
    %584 = arith.cmpi eq, %119, %583 : vector<8x16xi32>
    %585 = vector.extract_strided_slice %489 {offsets = [0, 2], sizes = [8, 1], strides = [1, 1]} : vector<8x4xf32> to vector<8x1xf32>
    %cst_115 = arith.constant 0.000000e+00 : f32
    %586 = vector.shape_cast %585 : vector<8x1xf32> to vector<8x1xf32>
    %587 = vector.broadcast %586 : vector<8x1xf32> to vector<8x16xf32>
    %588 = vector.broadcast %cst_115 : f32 to vector<8x16xf32>
    %589 = arith.select %584, %587, %588 : vector<8x16xi1>, vector<8x16xf32>
    %590 = arith.addf %581, %589 : vector<8x16xf32>
    %591 = vector.extract_strided_slice %97 {offsets = [0, 10], sizes = [8, 1], strides = [1, 1]} : vector<8x16xi32> to vector<8x1xi32>
    %592 = vector.broadcast %591 : vector<8x1xi32> to vector<8x16xi32>
    %593 = arith.cmpi eq, %119, %592 : vector<8x16xi32>
    %594 = vector.extract_strided_slice %491 {offsets = [0, 2], sizes = [8, 1], strides = [1, 1]} : vector<8x4xf32> to vector<8x1xf32>
    %cst_116 = arith.constant 0.000000e+00 : f32
    %595 = vector.shape_cast %594 : vector<8x1xf32> to vector<8x1xf32>
    %596 = vector.broadcast %595 : vector<8x1xf32> to vector<8x16xf32>
    %597 = vector.broadcast %cst_116 : f32 to vector<8x16xf32>
    %598 = arith.select %593, %596, %597 : vector<8x16xi1>, vector<8x16xf32>
    %599 = arith.addf %590, %598 : vector<8x16xf32>
    %600 = vector.extract_strided_slice %117 {offsets = [0, 10], sizes = [8, 1], strides = [1, 1]} : vector<8x16xi32> to vector<8x1xi32>
    %601 = vector.broadcast %600 : vector<8x1xi32> to vector<8x16xi32>
    %602 = arith.cmpi eq, %119, %601 : vector<8x16xi32>
    %603 = vector.extract_strided_slice %493 {offsets = [0, 2], sizes = [8, 1], strides = [1, 1]} : vector<8x4xf32> to vector<8x1xf32>
    %cst_117 = arith.constant 0.000000e+00 : f32
    %604 = vector.shape_cast %603 : vector<8x1xf32> to vector<8x1xf32>
    %605 = vector.broadcast %604 : vector<8x1xf32> to vector<8x16xf32>
    %606 = vector.broadcast %cst_117 : f32 to vector<8x16xf32>
    %607 = arith.select %602, %605, %606 : vector<8x16xi1>, vector<8x16xf32>
    %608 = arith.addf %599, %607 : vector<8x16xf32>
    %609 = vector.extract_strided_slice %61 {offsets = [0, 11], sizes = [8, 1], strides = [1, 1]} : vector<8x16xi32> to vector<8x1xi32>
    %610 = vector.broadcast %609 : vector<8x1xi32> to vector<8x16xi32>
    %611 = arith.cmpi eq, %119, %610 : vector<8x16xi32>
    %612 = vector.extract_strided_slice %487 {offsets = [0, 3], sizes = [8, 1], strides = [1, 1]} : vector<8x4xf32> to vector<8x1xf32>
    %cst_118 = arith.constant 0.000000e+00 : f32
    %613 = vector.shape_cast %612 : vector<8x1xf32> to vector<8x1xf32>
    %614 = vector.broadcast %613 : vector<8x1xf32> to vector<8x16xf32>
    %615 = vector.broadcast %cst_118 : f32 to vector<8x16xf32>
    %616 = arith.select %611, %614, %615 : vector<8x16xi1>, vector<8x16xf32>
    %617 = arith.addf %608, %616 : vector<8x16xf32>
    %618 = vector.extract_strided_slice %79 {offsets = [0, 11], sizes = [8, 1], strides = [1, 1]} : vector<8x16xi32> to vector<8x1xi32>
    %619 = vector.broadcast %618 : vector<8x1xi32> to vector<8x16xi32>
    %620 = arith.cmpi eq, %119, %619 : vector<8x16xi32>
    %621 = vector.extract_strided_slice %489 {offsets = [0, 3], sizes = [8, 1], strides = [1, 1]} : vector<8x4xf32> to vector<8x1xf32>
    %cst_119 = arith.constant 0.000000e+00 : f32
    %622 = vector.shape_cast %621 : vector<8x1xf32> to vector<8x1xf32>
    %623 = vector.broadcast %622 : vector<8x1xf32> to vector<8x16xf32>
    %624 = vector.broadcast %cst_119 : f32 to vector<8x16xf32>
    %625 = arith.select %620, %623, %624 : vector<8x16xi1>, vector<8x16xf32>
    %626 = arith.addf %617, %625 : vector<8x16xf32>
    %627 = vector.extract_strided_slice %97 {offsets = [0, 11], sizes = [8, 1], strides = [1, 1]} : vector<8x16xi32> to vector<8x1xi32>
    %628 = vector.broadcast %627 : vector<8x1xi32> to vector<8x16xi32>
    %629 = arith.cmpi eq, %119, %628 : vector<8x16xi32>
    %630 = vector.extract_strided_slice %491 {offsets = [0, 3], sizes = [8, 1], strides = [1, 1]} : vector<8x4xf32> to vector<8x1xf32>
    %cst_120 = arith.constant 0.000000e+00 : f32
    %631 = vector.shape_cast %630 : vector<8x1xf32> to vector<8x1xf32>
    %632 = vector.broadcast %631 : vector<8x1xf32> to vector<8x16xf32>
    %633 = vector.broadcast %cst_120 : f32 to vector<8x16xf32>
    %634 = arith.select %629, %632, %633 : vector<8x16xi1>, vector<8x16xf32>
    %635 = arith.addf %626, %634 : vector<8x16xf32>
    %636 = vector.extract_strided_slice %117 {offsets = [0, 11], sizes = [8, 1], strides = [1, 1]} : vector<8x16xi32> to vector<8x1xi32>
    %637 = vector.broadcast %636 : vector<8x1xi32> to vector<8x16xi32>
    %638 = arith.cmpi eq, %119, %637 : vector<8x16xi32>
    %639 = vector.extract_strided_slice %493 {offsets = [0, 3], sizes = [8, 1], strides = [1, 1]} : vector<8x4xf32> to vector<8x1xf32>
    %cst_121 = arith.constant 0.000000e+00 : f32
    %640 = vector.shape_cast %639 : vector<8x1xf32> to vector<8x1xf32>
    %641 = vector.broadcast %640 : vector<8x1xf32> to vector<8x16xf32>
    %642 = vector.broadcast %cst_121 : f32 to vector<8x16xf32>
    %643 = arith.select %638, %641, %642 : vector<8x16xi1>, vector<8x16xf32>
    %644 = arith.addf %635, %643 : vector<8x16xf32>
    %645 = vector.extract_strided_slice %494 {offsets = [64, 0], sizes = [16, 8], strides = [1, 1]} : vector<80x8xf32> to vector<16x8xf32>
    %cst_122 = arith.constant dense<0.000000e+00> : vector<8x8xf32>
    %646 = tpu.matmul %644, %645, %cst_122 {dimension_numbers = #tpu.dot_dimension_numbers<[1], [0], [0], [1], [0, 0, 1, 1], [], []>} : vector<8x16xf32>, vector<16x8xf32>, vector<8x8xf32> -> vector<8x8xf32>
    %647 = arith.addf %571, %646 : vector<8x8xf32>
    %648 = vector.extract_strided_slice %121 {offsets = [16, 0], sizes = [8, 32], strides = [1, 1]} : vector<32x32xf32> to vector<8x32xf32>
    %cst_123 = arith.constant dense<0.000000e+00> : vector<8x32xf32>
    %649 = tpu.matmul %647, %648, %cst_123 {dimension_numbers = #tpu.dot_dimension_numbers<[1], [0], [0], [1], [0, 0, 1, 1], [], []>} : vector<8x8xf32>, vector<8x32xf32>, vector<8x32xf32> -> vector<8x32xf32>
    %650 = arith.addf %474, %649 : vector<8x32xf32>
    %651 = vector.extract_strided_slice %21 {offsets = [0, 12], sizes = [8, 4], strides = [1, 1]} : vector<8x16xf32> to vector<8x4xf32>
    %cst_124 = arith.constant dense<0xFF800000> : vector<8xf32>
    %652 = vector.multi_reduction <maximumf>, %651, %cst_124 [1] : vector<8x4xf32> to vector<8xf32>
    %653 = vector.shape_cast %652 : vector<8xf32> to vector<8x1xf32>
    %654 = vector.broadcast %653 : vector<8x1xf32> to vector<8x4xf32>
    %655 = arith.subf %651, %654 : vector<8x4xf32>
    %656 = math.exp %655 : vector<8x4xf32>
    %cst_125 = arith.constant dense<0.000000e+00> : vector<8xf32>
    %657 = vector.multi_reduction <add>, %656, %cst_125 [1] : vector<8x4xf32> to vector<8xf32>
    %658 = vector.shape_cast %657 : vector<8xf32> to vector<8x1xf32>
    %659 = tpu.reciprocal %658 {approx = true} : vector<8x1xf32> -> vector<8x1xf32>
    %660 = vector.broadcast %659 : vector<8x1xf32> to vector<8x4xf32>
    %661 = arith.mulf %656, %660 : vector<8x4xf32>
    %662 = vector.extract_strided_slice %42 {offsets = [0, 12], sizes = [8, 4], strides = [1, 1]} : vector<8x16xf32> to vector<8x4xf32>
    %663 = arith.mulf %662, %661 : vector<8x4xf32>
    %664 = vector.extract_strided_slice %43 {offsets = [0, 12], sizes = [8, 4], strides = [1, 1]} : vector<8x16xf32> to vector<8x4xf32>
    %665 = arith.mulf %664, %661 : vector<8x4xf32>
    %666 = vector.extract_strided_slice %44 {offsets = [0, 12], sizes = [8, 4], strides = [1, 1]} : vector<8x16xf32> to vector<8x4xf32>
    %667 = arith.mulf %666, %661 : vector<8x4xf32>
    %668 = vector.extract_strided_slice %45 {offsets = [0, 12], sizes = [8, 4], strides = [1, 1]} : vector<8x16xf32> to vector<8x4xf32>
    %669 = arith.mulf %668, %661 : vector<8x4xf32>
    %670 = vector.extract_strided_slice %11 {offsets = [0, 24], sizes = [80, 8], strides = [1, 1]} : vector<80x32xf32> to vector<80x8xf32>
    %cst_126 = arith.constant 0.000000e+00 : f32
    %671 = vector.broadcast %cst_126 : f32 to vector<8x8xf32>
    %cst_127 = arith.constant 0.000000e+00 : f32
    %672 = vector.broadcast %cst_127 : f32 to vector<8x64xf32>
    %673 = vector.extract_strided_slice %61 {offsets = [0, 12], sizes = [8, 1], strides = [1, 1]} : vector<8x16xi32> to vector<8x1xi32>
    %674 = vector.broadcast %673 : vector<8x1xi32> to vector<8x64xi32>
    %675 = arith.cmpi eq, %118, %674 : vector<8x64xi32>
    %676 = vector.extract_strided_slice %663 {offsets = [0, 0], sizes = [8, 1], strides = [1, 1]} : vector<8x4xf32> to vector<8x1xf32>
    %cst_128 = arith.constant 0.000000e+00 : f32
    %677 = vector.shape_cast %676 : vector<8x1xf32> to vector<8x1xf32>
    %678 = vector.broadcast %677 : vector<8x1xf32> to vector<8x64xf32>
    %679 = vector.broadcast %cst_128 : f32 to vector<8x64xf32>
    %680 = arith.select %675, %678, %679 : vector<8x64xi1>, vector<8x64xf32>
    %681 = arith.addf %672, %680 : vector<8x64xf32>
    %682 = vector.extract_strided_slice %79 {offsets = [0, 12], sizes = [8, 1], strides = [1, 1]} : vector<8x16xi32> to vector<8x1xi32>
    %683 = vector.broadcast %682 : vector<8x1xi32> to vector<8x64xi32>
    %684 = arith.cmpi eq, %118, %683 : vector<8x64xi32>
    %685 = vector.extract_strided_slice %665 {offsets = [0, 0], sizes = [8, 1], strides = [1, 1]} : vector<8x4xf32> to vector<8x1xf32>
    %cst_129 = arith.constant 0.000000e+00 : f32
    %686 = vector.shape_cast %685 : vector<8x1xf32> to vector<8x1xf32>
    %687 = vector.broadcast %686 : vector<8x1xf32> to vector<8x64xf32>
    %688 = vector.broadcast %cst_129 : f32 to vector<8x64xf32>
    %689 = arith.select %684, %687, %688 : vector<8x64xi1>, vector<8x64xf32>
    %690 = arith.addf %681, %689 : vector<8x64xf32>
    %691 = vector.extract_strided_slice %97 {offsets = [0, 12], sizes = [8, 1], strides = [1, 1]} : vector<8x16xi32> to vector<8x1xi32>
    %692 = vector.broadcast %691 : vector<8x1xi32> to vector<8x64xi32>
    %693 = arith.cmpi eq, %118, %692 : vector<8x64xi32>
    %694 = vector.extract_strided_slice %667 {offsets = [0, 0], sizes = [8, 1], strides = [1, 1]} : vector<8x4xf32> to vector<8x1xf32>
    %cst_130 = arith.constant 0.000000e+00 : f32
    %695 = vector.shape_cast %694 : vector<8x1xf32> to vector<8x1xf32>
    %696 = vector.broadcast %695 : vector<8x1xf32> to vector<8x64xf32>
    %697 = vector.broadcast %cst_130 : f32 to vector<8x64xf32>
    %698 = arith.select %693, %696, %697 : vector<8x64xi1>, vector<8x64xf32>
    %699 = arith.addf %690, %698 : vector<8x64xf32>
    %700 = vector.extract_strided_slice %117 {offsets = [0, 12], sizes = [8, 1], strides = [1, 1]} : vector<8x16xi32> to vector<8x1xi32>
    %701 = vector.broadcast %700 : vector<8x1xi32> to vector<8x64xi32>
    %702 = arith.cmpi eq, %118, %701 : vector<8x64xi32>
    %703 = vector.extract_strided_slice %669 {offsets = [0, 0], sizes = [8, 1], strides = [1, 1]} : vector<8x4xf32> to vector<8x1xf32>
    %cst_131 = arith.constant 0.000000e+00 : f32
    %704 = vector.shape_cast %703 : vector<8x1xf32> to vector<8x1xf32>
    %705 = vector.broadcast %704 : vector<8x1xf32> to vector<8x64xf32>
    %706 = vector.broadcast %cst_131 : f32 to vector<8x64xf32>
    %707 = arith.select %702, %705, %706 : vector<8x64xi1>, vector<8x64xf32>
    %708 = arith.addf %699, %707 : vector<8x64xf32>
    %709 = vector.extract_strided_slice %61 {offsets = [0, 13], sizes = [8, 1], strides = [1, 1]} : vector<8x16xi32> to vector<8x1xi32>
    %710 = vector.broadcast %709 : vector<8x1xi32> to vector<8x64xi32>
    %711 = arith.cmpi eq, %118, %710 : vector<8x64xi32>
    %712 = vector.extract_strided_slice %663 {offsets = [0, 1], sizes = [8, 1], strides = [1, 1]} : vector<8x4xf32> to vector<8x1xf32>
    %cst_132 = arith.constant 0.000000e+00 : f32
    %713 = vector.shape_cast %712 : vector<8x1xf32> to vector<8x1xf32>
    %714 = vector.broadcast %713 : vector<8x1xf32> to vector<8x64xf32>
    %715 = vector.broadcast %cst_132 : f32 to vector<8x64xf32>
    %716 = arith.select %711, %714, %715 : vector<8x64xi1>, vector<8x64xf32>
    %717 = arith.addf %708, %716 : vector<8x64xf32>
    %718 = vector.extract_strided_slice %79 {offsets = [0, 13], sizes = [8, 1], strides = [1, 1]} : vector<8x16xi32> to vector<8x1xi32>
    %719 = vector.broadcast %718 : vector<8x1xi32> to vector<8x64xi32>
    %720 = arith.cmpi eq, %118, %719 : vector<8x64xi32>
    %721 = vector.extract_strided_slice %665 {offsets = [0, 1], sizes = [8, 1], strides = [1, 1]} : vector<8x4xf32> to vector<8x1xf32>
    %cst_133 = arith.constant 0.000000e+00 : f32
    %722 = vector.shape_cast %721 : vector<8x1xf32> to vector<8x1xf32>
    %723 = vector.broadcast %722 : vector<8x1xf32> to vector<8x64xf32>
    %724 = vector.broadcast %cst_133 : f32 to vector<8x64xf32>
    %725 = arith.select %720, %723, %724 : vector<8x64xi1>, vector<8x64xf32>
    %726 = arith.addf %717, %725 : vector<8x64xf32>
    %727 = vector.extract_strided_slice %97 {offsets = [0, 13], sizes = [8, 1], strides = [1, 1]} : vector<8x16xi32> to vector<8x1xi32>
    %728 = vector.broadcast %727 : vector<8x1xi32> to vector<8x64xi32>
    %729 = arith.cmpi eq, %118, %728 : vector<8x64xi32>
    %730 = vector.extract_strided_slice %667 {offsets = [0, 1], sizes = [8, 1], strides = [1, 1]} : vector<8x4xf32> to vector<8x1xf32>
    %cst_134 = arith.constant 0.000000e+00 : f32
    %731 = vector.shape_cast %730 : vector<8x1xf32> to vector<8x1xf32>
    %732 = vector.broadcast %731 : vector<8x1xf32> to vector<8x64xf32>
    %733 = vector.broadcast %cst_134 : f32 to vector<8x64xf32>
    %734 = arith.select %729, %732, %733 : vector<8x64xi1>, vector<8x64xf32>
    %735 = arith.addf %726, %734 : vector<8x64xf32>
    %736 = vector.extract_strided_slice %117 {offsets = [0, 13], sizes = [8, 1], strides = [1, 1]} : vector<8x16xi32> to vector<8x1xi32>
    %737 = vector.broadcast %736 : vector<8x1xi32> to vector<8x64xi32>
    %738 = arith.cmpi eq, %118, %737 : vector<8x64xi32>
    %739 = vector.extract_strided_slice %669 {offsets = [0, 1], sizes = [8, 1], strides = [1, 1]} : vector<8x4xf32> to vector<8x1xf32>
    %cst_135 = arith.constant 0.000000e+00 : f32
    %740 = vector.shape_cast %739 : vector<8x1xf32> to vector<8x1xf32>
    %741 = vector.broadcast %740 : vector<8x1xf32> to vector<8x64xf32>
    %742 = vector.broadcast %cst_135 : f32 to vector<8x64xf32>
    %743 = arith.select %738, %741, %742 : vector<8x64xi1>, vector<8x64xf32>
    %744 = arith.addf %735, %743 : vector<8x64xf32>
    %745 = vector.extract_strided_slice %670 {offsets = [0, 0], sizes = [64, 8], strides = [1, 1]} : vector<80x8xf32> to vector<64x8xf32>
    %cst_136 = arith.constant dense<0.000000e+00> : vector<8x8xf32>
    %746 = tpu.matmul %744, %745, %cst_136 {dimension_numbers = #tpu.dot_dimension_numbers<[1], [0], [0], [1], [0, 0, 1, 1], [], []>} : vector<8x64xf32>, vector<64x8xf32>, vector<8x8xf32> -> vector<8x8xf32>
    %747 = arith.addf %671, %746 : vector<8x8xf32>
    %cst_137 = arith.constant 0.000000e+00 : f32
    %748 = vector.broadcast %cst_137 : f32 to vector<8x16xf32>
    %749 = vector.extract_strided_slice %61 {offsets = [0, 14], sizes = [8, 1], strides = [1, 1]} : vector<8x16xi32> to vector<8x1xi32>
    %750 = vector.broadcast %749 : vector<8x1xi32> to vector<8x16xi32>
    %751 = arith.cmpi eq, %119, %750 : vector<8x16xi32>
    %752 = vector.extract_strided_slice %663 {offsets = [0, 2], sizes = [8, 1], strides = [1, 1]} : vector<8x4xf32> to vector<8x1xf32>
    %cst_138 = arith.constant 0.000000e+00 : f32
    %753 = vector.shape_cast %752 : vector<8x1xf32> to vector<8x1xf32>
    %754 = vector.broadcast %753 : vector<8x1xf32> to vector<8x16xf32>
    %755 = vector.broadcast %cst_138 : f32 to vector<8x16xf32>
    %756 = arith.select %751, %754, %755 : vector<8x16xi1>, vector<8x16xf32>
    %757 = arith.addf %748, %756 : vector<8x16xf32>
    %758 = vector.extract_strided_slice %79 {offsets = [0, 14], sizes = [8, 1], strides = [1, 1]} : vector<8x16xi32> to vector<8x1xi32>
    %759 = vector.broadcast %758 : vector<8x1xi32> to vector<8x16xi32>
    %760 = arith.cmpi eq, %119, %759 : vector<8x16xi32>
    %761 = vector.extract_strided_slice %665 {offsets = [0, 2], sizes = [8, 1], strides = [1, 1]} : vector<8x4xf32> to vector<8x1xf32>
    %cst_139 = arith.constant 0.000000e+00 : f32
    %762 = vector.shape_cast %761 : vector<8x1xf32> to vector<8x1xf32>
    %763 = vector.broadcast %762 : vector<8x1xf32> to vector<8x16xf32>
    %764 = vector.broadcast %cst_139 : f32 to vector<8x16xf32>
    %765 = arith.select %760, %763, %764 : vector<8x16xi1>, vector<8x16xf32>
    %766 = arith.addf %757, %765 : vector<8x16xf32>
    %767 = vector.extract_strided_slice %97 {offsets = [0, 14], sizes = [8, 1], strides = [1, 1]} : vector<8x16xi32> to vector<8x1xi32>
    %768 = vector.broadcast %767 : vector<8x1xi32> to vector<8x16xi32>
    %769 = arith.cmpi eq, %119, %768 : vector<8x16xi32>
    %770 = vector.extract_strided_slice %667 {offsets = [0, 2], sizes = [8, 1], strides = [1, 1]} : vector<8x4xf32> to vector<8x1xf32>
    %cst_140 = arith.constant 0.000000e+00 : f32
    %771 = vector.shape_cast %770 : vector<8x1xf32> to vector<8x1xf32>
    %772 = vector.broadcast %771 : vector<8x1xf32> to vector<8x16xf32>
    %773 = vector.broadcast %cst_140 : f32 to vector<8x16xf32>
    %774 = arith.select %769, %772, %773 : vector<8x16xi1>, vector<8x16xf32>
    %775 = arith.addf %766, %774 : vector<8x16xf32>
    %776 = vector.extract_strided_slice %117 {offsets = [0, 14], sizes = [8, 1], strides = [1, 1]} : vector<8x16xi32> to vector<8x1xi32>
    %777 = vector.broadcast %776 : vector<8x1xi32> to vector<8x16xi32>
    %778 = arith.cmpi eq, %119, %777 : vector<8x16xi32>
    %779 = vector.extract_strided_slice %669 {offsets = [0, 2], sizes = [8, 1], strides = [1, 1]} : vector<8x4xf32> to vector<8x1xf32>
    %cst_141 = arith.constant 0.000000e+00 : f32
    %780 = vector.shape_cast %779 : vector<8x1xf32> to vector<8x1xf32>
    %781 = vector.broadcast %780 : vector<8x1xf32> to vector<8x16xf32>
    %782 = vector.broadcast %cst_141 : f32 to vector<8x16xf32>
    %783 = arith.select %778, %781, %782 : vector<8x16xi1>, vector<8x16xf32>
    %784 = arith.addf %775, %783 : vector<8x16xf32>
    %785 = vector.extract_strided_slice %61 {offsets = [0, 15], sizes = [8, 1], strides = [1, 1]} : vector<8x16xi32> to vector<8x1xi32>
    %786 = vector.broadcast %785 : vector<8x1xi32> to vector<8x16xi32>
    %787 = arith.cmpi eq, %119, %786 : vector<8x16xi32>
    %788 = vector.extract_strided_slice %663 {offsets = [0, 3], sizes = [8, 1], strides = [1, 1]} : vector<8x4xf32> to vector<8x1xf32>
    %cst_142 = arith.constant 0.000000e+00 : f32
    %789 = vector.shape_cast %788 : vector<8x1xf32> to vector<8x1xf32>
    %790 = vector.broadcast %789 : vector<8x1xf32> to vector<8x16xf32>
    %791 = vector.broadcast %cst_142 : f32 to vector<8x16xf32>
    %792 = arith.select %787, %790, %791 : vector<8x16xi1>, vector<8x16xf32>
    %793 = arith.addf %784, %792 : vector<8x16xf32>
    %794 = vector.extract_strided_slice %79 {offsets = [0, 15], sizes = [8, 1], strides = [1, 1]} : vector<8x16xi32> to vector<8x1xi32>
    %795 = vector.broadcast %794 : vector<8x1xi32> to vector<8x16xi32>
    %796 = arith.cmpi eq, %119, %795 : vector<8x16xi32>
    %797 = vector.extract_strided_slice %665 {offsets = [0, 3], sizes = [8, 1], strides = [1, 1]} : vector<8x4xf32> to vector<8x1xf32>
    %cst_143 = arith.constant 0.000000e+00 : f32
    %798 = vector.shape_cast %797 : vector<8x1xf32> to vector<8x1xf32>
    %799 = vector.broadcast %798 : vector<8x1xf32> to vector<8x16xf32>
    %800 = vector.broadcast %cst_143 : f32 to vector<8x16xf32>
    %801 = arith.select %796, %799, %800 : vector<8x16xi1>, vector<8x16xf32>
    %802 = arith.addf %793, %801 : vector<8x16xf32>
    %803 = vector.extract_strided_slice %97 {offsets = [0, 15], sizes = [8, 1], strides = [1, 1]} : vector<8x16xi32> to vector<8x1xi32>
    %804 = vector.broadcast %803 : vector<8x1xi32> to vector<8x16xi32>
    %805 = arith.cmpi eq, %119, %804 : vector<8x16xi32>
    %806 = vector.extract_strided_slice %667 {offsets = [0, 3], sizes = [8, 1], strides = [1, 1]} : vector<8x4xf32> to vector<8x1xf32>
    %cst_144 = arith.constant 0.000000e+00 : f32
    %807 = vector.shape_cast %806 : vector<8x1xf32> to vector<8x1xf32>
    %808 = vector.broadcast %807 : vector<8x1xf32> to vector<8x16xf32>
    %809 = vector.broadcast %cst_144 : f32 to vector<8x16xf32>
    %810 = arith.select %805, %808, %809 : vector<8x16xi1>, vector<8x16xf32>
    %811 = arith.addf %802, %810 : vector<8x16xf32>
    %812 = vector.extract_strided_slice %117 {offsets = [0, 15], sizes = [8, 1], strides = [1, 1]} : vector<8x16xi32> to vector<8x1xi32>
    %813 = vector.broadcast %812 : vector<8x1xi32> to vector<8x16xi32>
    %814 = arith.cmpi eq, %119, %813 : vector<8x16xi32>
    %815 = vector.extract_strided_slice %669 {offsets = [0, 3], sizes = [8, 1], strides = [1, 1]} : vector<8x4xf32> to vector<8x1xf32>
    %cst_145 = arith.constant 0.000000e+00 : f32
    %816 = vector.shape_cast %815 : vector<8x1xf32> to vector<8x1xf32>
    %817 = vector.broadcast %816 : vector<8x1xf32> to vector<8x16xf32>
    %818 = vector.broadcast %cst_145 : f32 to vector<8x16xf32>
    %819 = arith.select %814, %817, %818 : vector<8x16xi1>, vector<8x16xf32>
    %820 = arith.addf %811, %819 : vector<8x16xf32>
    %821 = vector.extract_strided_slice %670 {offsets = [64, 0], sizes = [16, 8], strides = [1, 1]} : vector<80x8xf32> to vector<16x8xf32>
    %cst_146 = arith.constant dense<0.000000e+00> : vector<8x8xf32>
    %822 = tpu.matmul %820, %821, %cst_146 {dimension_numbers = #tpu.dot_dimension_numbers<[1], [0], [0], [1], [0, 0, 1, 1], [], []>} : vector<8x16xf32>, vector<16x8xf32>, vector<8x8xf32> -> vector<8x8xf32>
    %823 = arith.addf %747, %822 : vector<8x8xf32>
    %824 = vector.extract_strided_slice %121 {offsets = [24, 0], sizes = [8, 32], strides = [1, 1]} : vector<32x32xf32> to vector<8x32xf32>
    %cst_147 = arith.constant dense<0.000000e+00> : vector<8x32xf32>
    %825 = tpu.matmul %823, %824, %cst_147 {dimension_numbers = #tpu.dot_dimension_numbers<[1], [0], [0], [1], [0, 0, 1, 1], [], []>} : vector<8x8xf32>, vector<8x32xf32>, vector<8x32xf32> -> vector<8x32xf32>
    %826 = arith.addf %650, %825 : vector<8x32xf32>
    %c0_148 = arith.constant 0 : index
    %c0_149 = arith.constant 0 : index
    %c0_150 = arith.constant 0 : index
    %827 = vector.load %arg16[%c0_148, %c0_149, %c0_150] : memref<1x8x32xf32, #tpu.memory_space<vmem>>, vector<1x8x32xf32>
    %828 = vector.shape_cast %827 : vector<1x8x32xf32> to vector<8x32xf32>
    %829 = arith.addf %828, %826 : vector<8x32xf32>
    %c0_151 = arith.constant 0 : index
    %c0_152 = arith.constant 0 : index
    %c0_153 = arith.constant 0 : index
    %830 = vector.load %arg16[%c0_151, %c0_152, %c0_153] : memref<1x8x32xf32, #tpu.memory_space<vmem>>, vector<1x8x32xf32>
    %831 = vector.shape_cast %830 : vector<1x8x32xf32> to vector<8x32xf32>
    %832 = vector.shape_cast %829 : vector<8x32xf32> to vector<1x8x32xf32>
    tpu.vector_store %arg16[%c0_151, %c0_152, %c0_153], %832 {strides = array<i32>} : memref<1x8x32xf32, #tpu.memory_space<vmem>>, vector<1x8x32xf32>,
    return
  }
  func.func @transform_0(%arg0: i32, %arg1: i32) -> (i32, i32, i32, i32) {
    %c0_i32 = arith.constant 0 : i32
    %c0_i32_0 = arith.constant 0 : i32
    %c0_i32_1 = arith.constant 0 : i32
    return %arg0, %arg1, %c0_i32, %c0_i32_0 : i32, i32, i32, i32
  }
  func.func @transform_1(%arg0: i32, %arg1: i32) -> (i32, i32, i32, i32) {
    %c0_i32 = arith.constant 0 : i32
    %c0_i32_0 = arith.constant 0 : i32
    %c0_i32_1 = arith.constant 0 : i32
    return %arg0, %arg1, %c0_i32, %c0_i32_0 : i32, i32, i32, i32
  }
  func.func @transform_2(%arg0: i32, %arg1: i32) -> (i32, i32, i32) {
    %c0_i32 = arith.constant 0 : i32
    %c0_i32_0 = arith.constant 0 : i32
    %c0_i32_1 = arith.constant 0 : i32
    return %arg0, %c0_i32, %c0_i32_0 : i32, i32, i32
  }
  func.func @transform_3(%arg0: i32, %arg1: i32) -> (i32, i32, i32) {
    %c0_i32 = arith.constant 0 : i32
    %c0_i32_0 = arith.constant 0 : i32
    %c0_i32_1 = arith.constant 0 : i32
    return %arg0, %c0_i32, %c0_i32_0 : i32, i32, i32
  }
  func.func @transform_4(%arg0: i32, %arg1: i32) -> (i32, i32) {
    %c0_i32 = arith.constant 0 : i32
    %c0_i32_0 = arith.constant 0 : i32
    %c0_i32_1 = arith.constant 0 : i32
    return %c0_i32, %c0_i32_0 : i32, i32
  }
  func.func @transform_5(%arg0: i32, %arg1: i32) -> (i32, i32) {
    %c0_i32 = arith.constant 0 : i32
    %c0_i32_0 = arith.constant 0 : i32
    %c0_i32_1 = arith.constant 0 : i32
    return %c0_i32, %c0_i32_0 : i32, i32
  }
  func.func @transform_6(%arg0: i32, %arg1: i32) -> (i32, i32) {
    %c0_i32 = arith.constant 0 : i32
    %c0_i32_0 = arith.constant 0 : i32
    %c0_i32_1 = arith.constant 0 : i32
    return %c0_i32, %c0_i32_0 : i32, i32
  }
  func.func @transform_7(%arg0: i32, %arg1: i32) -> (i32, i32) {
    %c0_i32 = arith.constant 0 : i32
    %c0_i32_0 = arith.constant 0 : i32
    %c0_i32_1 = arith.constant 0 : i32
    return %c0_i32, %c0_i32_0 : i32, i32
  }
  func.func @transform_8(%arg0: i32, %arg1: i32) -> (i32, i32) {
    %c0_i32 = arith.constant 0 : i32
    %c0_i32_0 = arith.constant 0 : i32
    %c0_i32_1 = arith.constant 0 : i32
    return %c0_i32, %c0_i32_0 : i32, i32
  }
  func.func @transform_9(%arg0: i32, %arg1: i32) -> (i32, i32) {
    %c0_i32 = arith.constant 0 : i32
    %c0_i32_0 = arith.constant 0 : i32
    %c0_i32_1 = arith.constant 0 : i32
    return %c0_i32, %c0_i32_0 : i32, i32
  }
  func.func @transform_10(%arg0: i32, %arg1: i32) -> (i32, i32) {
    %c0_i32 = arith.constant 0 : i32
    %c0_i32_0 = arith.constant 0 : i32
    %c0_i32_1 = arith.constant 0 : i32
    return %c0_i32, %c0_i32_0 : i32, i32
  }
  func.func @transform_11(%arg0: i32, %arg1: i32) -> (i32, i32) {
    %c0_i32 = arith.constant 0 : i32
    %c0_i32_0 = arith.constant 0 : i32
    %c0_i32_1 = arith.constant 0 : i32
    return %c0_i32, %c0_i32_0 : i32, i32
  }
  func.func @transform_12(%arg0: i32, %arg1: i32) -> (i32, i32, i32) {
    %c0_i32 = arith.constant 0 : i32
    %c0_i32_0 = arith.constant 0 : i32
    %c0_i32_1 = arith.constant 0 : i32
    return %arg1, %c0_i32, %c0_i32_0 : i32, i32, i32
  }
  func.func @transform_13(%arg0: i32, %arg1: i32) -> (i32, i32) {
    %c0_i32 = arith.constant 0 : i32
    %c0_i32_0 = arith.constant 0 : i32
    %c0_i32_1 = arith.constant 0 : i32
    return %c0_i32, %c0_i32_0 : i32, i32
  }
  func.func @transform_14(%arg0: i32, %arg1: i32) -> (i32, i32, i32) {
    %c0_i32 = arith.constant 0 : i32
    %c0_i32_0 = arith.constant 0 : i32
    %c0_i32_1 = arith.constant 0 : i32
    return %arg0, %c0_i32, %c0_i32_0 : i32, i32, i32
  }
}

</mosaic_0001>

<llo_original>
// kernel: tpu_custom_call.1
$region0: #{tpu_custom_call.1}
  #allocation0 [shape = 'u32[]', space=smem, size = 0x4, offset = 0x4, fixed_abs, tag = 'smem constant byte address 0x4 - core index']
  #allocation1 [shape = 'u32[144,128]{1,0:T(1,128)}', space=vmem, size = 0x12000, scoped, tag = 'internal scratch']
  %s0 = inlined_call_operand.vmem [shape: f32[2,2,8,32], index: 0, kind: input, shape index: {}]
  %s1 = inlined_call_operand.vmem [shape: f32[2,2,80,32], index: 1, kind: input, shape index: {}]
  %s2 = inlined_call_operand.vmem [shape: f32[2,8,16], index: 2, kind: input, shape index: {}]
  %s3 = inlined_call_operand.vmem [shape: f32[2,8,16], index: 3, kind: input, shape index: {}]
  %s4 = inlined_call_operand.vmem [shape: s32[1,16], index: 4, kind: input, shape index: {}]
  %s5 = inlined_call_operand.vmem [shape: s32[1,16], index: 5, kind: input, shape index: {}]
  %s6 = inlined_call_operand.vmem [shape: f32[32,32], index: 6, kind: input, shape index: {}]
  %s7 = inlined_call_operand.vmem [shape: f32[1,32], index: 7, kind: input, shape index: {}]
  %s8 = inlined_call_operand.vmem [shape: f32[32,32], index: 8, kind: input, shape index: {}]
  %s9 = inlined_call_operand.vmem [shape: f32[1,32], index: 9, kind: input, shape index: {}]
  %s10 = inlined_call_operand.vmem [shape: f32[32,16], index: 10, kind: input, shape index: {}]
  %s11 = inlined_call_operand.vmem [shape: f32[1,16], index: 11, kind: input, shape index: {}]
  %s12 = inlined_call_operand.vmem [shape: f32[2,32,32], index: 12, kind: input, shape index: {}]
  %s13 = inlined_call_operand.vmem [shape: f32[1,32], index: 13, kind: input, shape index: {}]
  %s14 = inlined_call_operand.hbm [shape: f32[2,8,32], index: 14, kind: output, shape index: {}]
  %s15 = sld [smem:[#allocation0]]
  $region93: #{tpu_custom_call.1} parent=0
    _
  %s17 = ssub.s32 1, %s15
  %s18 = scalar_select 0, %s17, %s15
  $region1: #{tpu_custom_call.1} parent=0
    #allocation2 [shape = 'u8[8192]{0}', space=vmem, size = 0x2000, scoped, tag = 'output window, operand 0']
    #allocation3 [shape = 's32[2]{0}', space=sflag, size = 0x8, scoped, tag = 'scoped memory for tpu_custom_call.1']
    %19 = vsyncpa [#allocation3], 0
    %s20 = scalar_lea.sflag [#allocation3], 1
    %21 = vsyncpa %s20, 0
    loop: start=0, step=1, limit=6
    $region2: #{tpu_custom_call.1} parent=1 // loop_pre_header
      _
    $region3: #{tpu_custom_call.1} parent=1 // loop_header
      %s23 = sphi 0, %s27
      %p24 = scmp.ge.s32.totalorder %s23, 6
      %s30 = sphi 0, %s42
      %s31 = sphi 0, %s38
      %s32 = sphi 0, %s30
      %s33 = sphi 0, %s31
      %s34 = sphi 0, %s32
      %s35 = sphi 0, %s33
      %s47 = sphi 0, %s49
      %s50 = sphi 0, %s47
      %s51 = sphi 0, %s50
      %s67 = sphi 0, %s51
      %s75 = sphi 0, %s77
      %s78 = sphi 0, %s75
      %s79 = sphi 0, %s78
      %s95 = sphi 0, %s79
      %s101 = sphi 0, %s103
      %s104 = sphi 0, %s101
      %s105 = sphi 0, %s104
      %s121 = sphi 0, %s105
      %s127 = sphi 0, %s129
      %s130 = sphi 0, %s127
      %s131 = sphi 0, %s130
      %s147 = sphi 0, %s131
      %s151 = sphi 0, %s151
      %s153 = sphi 0, %s151
      %s154 = sphi 0, %s153
      %s168 = sphi 0, %s154
      %s172 = sphi 0, %s172
      %s174 = sphi 0, %s172
      %s175 = sphi 0, %s174
      %s189 = sphi 0, %s175
      %s193 = sphi 0, %s193
      %s195 = sphi 0, %s193
      %s196 = sphi 0, %s195
      %s210 = sphi 0, %s196
      %s214 = sphi 0, %s214
      %s216 = sphi 0, %s214
      %s217 = sphi 0, %s216
      %s231 = sphi 0, %s217
      %s235 = sphi 0, %s235
      %s237 = sphi 0, %s235
      %s238 = sphi 0, %s237
      %s252 = sphi 0, %s238
      %s256 = sphi 0, %s256
      %s258 = sphi 0, %s256
      %s259 = sphi 0, %s258
      %s273 = sphi 0, %s259
      %s277 = sphi 0, %s277
      %s279 = sphi 0, %s277
      %s280 = sphi 0, %s279
      %s294 = sphi 0, %s280
      %s298 = sphi 0, %s298
      %s300 = sphi 0, %s298
      %s301 = sphi 0, %s300
      %s315 = sphi 0, %s301
      %s321 = sphi 0, %s323
      %s324 = sphi 0, %s321
      %s325 = sphi 0, %s324
      %s341 = sphi 0, %s325
      %s345 = sphi 0, %s345
      %s347 = sphi 0, %s345
      %s348 = sphi 0, %s347
      %s362 = sphi 0, %s348
      %s368 = sphi 0, %s370
      %s371 = sphi 0, %s368
      %s372 = sphi 0, %s371
      %s388 = sphi 0, %s372
    $region4: #{tpu_custom_call.1} parent=1 // loop_header_branch
      %26 = sbr.rel (%p24) target = $region8
    $region5: #{tpu_custom_call.1} parent=1 // loop_body
      %s28 = ssub.s32 %s23, 1
      %s29 = ssub.s32 %s23, 2
      %s36 = sadd.s32 1, %s31
      %p37 = scmp.ge.s32.totalorder %s36, 2
      %s38 = scalar_select %p37, 0, %s36
      %s39 = sadd.s32 1, %s30
      %s40 = scalar_select %p37, %s39, %s30
      %p41 = scmp.ge.s32.totalorder %s40, 2
      %s42 = scalar_select %p41, 0, %s40
      %s43 = ssub.s32 %s30, %s42
      %s44 = ssub.s32 %s31, %s38
      %s45 = sor.u32 %s43, %s44
      %p46 = scmp.eq.s32.totalorder %s45, 0
      %s48 = sadd.s32 %s47, 1
      %s49 = scalar_select %p46, %s47, %s48
      %p52 = pneg %p46
      %p53 = scmp.eq.s32.totalorder %s23, 3
      %p54 = por %p52, %p53
      %p55 = scmp.ne.s32.totalorder %s47, %s50
      %p56 = scmp.eq.s32.totalorder %s23, 0
      %p57 = por %p55, %p56
      %p58 = scmp.ne.s32.totalorder %s47, %s50
      %p59 = scmp.eq.s32.totalorder %s28, 3
      %p60 = por %p58, %p59
      %p61 = scmp.ne.s32.totalorder %s50, %s51
      %p62 = scmp.eq.s32.totalorder %s28, 0
      %p63 = por %p61, %p62
      %p64 = scmp.ne.s32.totalorder %s50, %s51
      %p65 = scmp.eq.s32.totalorder %s29, 3
      %p66 = por %p64, %p65
      %p68 = scmp.ne.s32.totalorder %s51, %s67
      %p69 = scmp.eq.s32.totalorder %s29, 0
      %p70 = por %p68, %p69
      %s71 = ssub.s32 %s30, %s42
      %s72 = ssub.s32 %s31, %s38
      %s73 = sor.u32 %s71, %s72
      %p74 = scmp.eq.s32.totalorder %s73, 0
      %s76 = sadd.s32 %s75, 1
      %s77 = scalar_select %p74, %s75, %s76
      %p80 = pneg %p74
      %p81 = scmp.eq.s32.totalorder %s23, 3
      %p82 = por %p80, %p81
      %p83 = scmp.ne.s32.totalorder %s75, %s78
      %p84 = scmp.eq.s32.totalorder %s23, 0
      %p85 = por %p83, %p84
      %p86 = scmp.ne.s32.totalorder %s75, %s78
      %p87 = scmp.eq.s32.totalorder %s28, 3
      %p88 = por %p86, %p87
      %p89 = scmp.ne.s32.totalorder %s78, %s79
      %p90 = scmp.eq.s32.totalorder %s28, 0
      %p91 = por %p89, %p90
      %p92 = scmp.ne.s32.totalorder %s78, %s79
      %p93 = scmp.eq.s32.totalorder %s29, 3
      %p94 = por %p92, %p93
      %p96 = scmp.ne.s32.totalorder %s79, %s95
      %p97 = scmp.eq.s32.totalorder %s29, 0
      %p98 = por %p96, %p97
      %s99 = ssub.s32 %s30, %s42
      %p100 = scmp.eq.s32.totalorder %s99, 0
      %s102 = sadd.s32 %s101, 1
      %s103 = scalar_select %p100, %s101, %s102
      %p106 = pneg %p100
      %p107 = scmp.eq.s32.totalorder %s23, 3
      %p108 = por %p106, %p107
      %p109 = scmp.ne.s32.totalorder %s101, %s104
      %p110 = scmp.eq.s32.totalorder %s23, 0
      %p111 = por %p109, %p110
      %p112 = scmp.ne.s32.totalorder %s101, %s104
      %p113 = scmp.eq.s32.totalorder %s28, 3
      %p114 = por %p112, %p113
      %p115 = scmp.ne.s32.totalorder %s104, %s105
      %p116 = scmp.eq.s32.totalorder %s28, 0
      %p117 = por %p115, %p116
      %p118 = scmp.ne.s32.totalorder %s104, %s105
      %p119 = scmp.eq.s32.totalorder %s29, 3
      %p120 = por %p118, %p119
      %p122 = scmp.ne.s32.totalorder %s105, %s121
      %p123 = scmp.eq.s32.totalorder %s29, 0
      %p124 = por %p122, %p123
      %s125 = ssub.s32 %s30, %s42
      %p126 = scmp.eq.s32.totalorder %s125, 0
      %s128 = sadd.s32 %s127, 1
      %s129 = scalar_select %p126, %s127, %s128
      %p132 = pneg %p126
      %p133 = scmp.eq.s32.totalorder %s23, 3
      %p134 = por %p132, %p133
      %p135 = scmp.ne.s32.totalorder %s127, %s130
      %p136 = scmp.eq.s32.totalorder %s23, 0
      %p137 = por %p135, %p136
      %p138 = scmp.ne.s32.totalorder %s127, %s130
      %p139 = scmp.eq.s32.totalorder %s28, 3
      %p140 = por %p138, %p139
      %p141 = scmp.ne.s32.totalorder %s130, %s131
      %p142 = scmp.eq.s32.totalorder %s28, 0
      %p143 = por %p141, %p142
      %p144 = scmp.ne.s32.totalorder %s130, %s131
      %p145 = scmp.eq.s32.totalorder %s29, 3
      %p146 = por %p144, %p145
      %p148 = scmp.ne.s32.totalorder %s131, %s147
      %p149 = scmp.eq.s32.totalorder %s29, 0
      %p150 = por %p148, %p149
      %s152 = sadd.s32 %s151, 1
      %p155 = scmp.eq.s32.totalorder %s23, 3
      %p156 = scmp.ne.s32.totalorder %s151, %s153
      %p157 = scmp.eq.s32.totalorder %s23, 0
      %p158 = por %p156, %p157
      %p159 = scmp.ne.s32.totalorder %s151, %s153
      %p160 = scmp.eq.s32.totalorder %s28, 3
      %p161 = por %p159, %p160
      %p162 = scmp.ne.s32.totalorder %s153, %s154
      %p163 = scmp.eq.s32.totalorder %s28, 0
      %p164 = por %p162, %p163
      %p165 = scmp.ne.s32.totalorder %s153, %s154
      %p166 = scmp.eq.s32.totalorder %s29, 3
      %p167 = por %p165, %p166
      %p169 = scmp.ne.s32.totalorder %s154, %s168
      %p170 = scmp.eq.s32.totalorder %s29, 0
      %p171 = por %p169, %p170
      %s173 = sadd.s32 %s172, 1
      %p176 = scmp.eq.s32.totalorder %s23, 3
      %p177 = scmp.ne.s32.totalorder %s172, %s174
      %p178 = scmp.eq.s32.totalorder %s23, 0
      %p179 = por %p177, %p178
      %p180 = scmp.ne.s32.totalorder %s172, %s174
      %p181 = scmp.eq.s32.totalorder %s28, 3
      %p182 = por %p180, %p181
      %p183 = scmp.ne.s32.totalorder %s174, %s175
      %p184 = scmp.eq.s32.totalorder %s28, 0
      %p185 = por %p183, %p184
      %p186 = scmp.ne.s32.totalorder %s174, %s175
      %p187 = scmp.eq.s32.totalorder %s29, 3
      %p188 = por %p186, %p187
      %p190 = scmp.ne.s32.totalorder %s175, %s189
      %p191 = scmp.eq.s32.totalorder %s29, 0
      %p192 = por %p190, %p191
      %s194 = sadd.s32 %s193, 1
      %p197 = scmp.eq.s32.totalorder %s23, 3
      %p198 = scmp.ne.s32.totalorder %s193, %s195
      %p199 = scmp.eq.s32.totalorder %s23, 0
      %p200 = por %p198, %p199
      %p201 = scmp.ne.s32.totalorder %s193, %s195
      %p202 = scmp.eq.s32.totalorder %s28, 3
      %p203 = por %p201, %p202
      %p204 = scmp.ne.s32.totalorder %s195, %s196
      %p205 = scmp.eq.s32.totalorder %s28, 0
      %p206 = por %p204, %p205
      %p207 = scmp.ne.s32.totalorder %s195, %s196
      %p208 = scmp.eq.s32.totalorder %s29, 3
      %p209 = por %p207, %p208
      %p211 = scmp.ne.s32.totalorder %s196, %s210
      %p212 = scmp.eq.s32.totalorder %s29, 0
      %p213 = por %p211, %p212
      %s215 = sadd.s32 %s214, 1
      %p218 = scmp.eq.s32.totalorder %s23, 3
      %p219 = scmp.ne.s32.totalorder %s214, %s216
      %p220 = scmp.eq.s32.totalorder %s23, 0
      %p221 = por %p219, %p220
      %p222 = scmp.ne.s32.totalorder %s214, %s216
      %p223 = scmp.eq.s32.totalorder %s28, 3
      %p224 = por %p222, %p223
      %p225 = scmp.ne.s32.totalorder %s216, %s217
      %p226 = scmp.eq.s32.totalorder %s28, 0
      %p227 = por %p225, %p226
      %p228 = scmp.ne.s32.totalorder %s216, %s217
      %p229 = scmp.eq.s32.totalorder %s29, 3
      %p230 = por %p228, %p229
      %p232 = scmp.ne.s32.totalorder %s217, %s231
      %p233 = scmp.eq.s32.totalorder %s29, 0
      %p234 = por %p232, %p233
      %s236 = sadd.s32 %s235, 1
      %p239 = scmp.eq.s32.totalorder %s23, 3
      %p240 = scmp.ne.s32.totalorder %s235, %s237
      %p241 = scmp.eq.s32.totalorder %s23, 0
      %p242 = por %p240, %p241
      %p243 = scmp.ne.s32.totalorder %s235, %s237
      %p244 = scmp.eq.s32.totalorder %s28, 3
      %p245 = por %p243, %p244
      %p246 = scmp.ne.s32.totalorder %s237, %s238
      %p247 = scmp.eq.s32.totalorder %s28, 0
      %p248 = por %p246, %p247
      %p249 = scmp.ne.s32.totalorder %s237, %s238
      %p250 = scmp.eq.s32.totalorder %s29, 3
      %p251 = por %p249, %p250
      %p253 = scmp.ne.s32.totalorder %s238, %s252
      %p254 = scmp.eq.s32.totalorder %s29, 0
      %p255 = por %p253, %p254
      %s257 = sadd.s32 %s256, 1
      %p260 = scmp.eq.s32.totalorder %s23, 3
      %p261 = scmp.ne.s32.totalorder %s256, %s258
      %p262 = scmp.eq.s32.totalorder %s23, 0
      %p263 = por %p261, %p262
      %p264 = scmp.ne.s32.totalorder %s256, %s258
      %p265 = scmp.eq.s32.totalorder %s28, 3
      %p266 = por %p264, %p265
      %p267 = scmp.ne.s32.totalorder %s258, %s259
      %p268 = scmp.eq.s32.totalorder %s28, 0
      %p269 = por %p267, %p268
      %p270 = scmp.ne.s32.totalorder %s258, %s259
      %p271 = scmp.eq.s32.totalorder %s29, 3
      %p272 = por %p270, %p271
      %p274 = scmp.ne.s32.totalorder %s259, %s273
      %p275 = scmp.eq.s32.totalorder %s29, 0
      %p276 = por %p274, %p275
      %s278 = sadd.s32 %s277, 1
      %p281 = scmp.eq.s32.totalorder %s23, 3
      %p282 = scmp.ne.s32.totalorder %s277, %s279
      %p283 = scmp.eq.s32.totalorder %s23, 0
      %p284 = por %p282, %p283
      %p285 = scmp.ne.s32.totalorder %s277, %s279
      %p286 = scmp.eq.s32.totalorder %s28, 3
      %p287 = por %p285, %p286
      %p288 = scmp.ne.s32.totalorder %s279, %s280
      %p289 = scmp.eq.s32.totalorder %s28, 0
      %p290 = por %p288, %p289
      %p291 = scmp.ne.s32.totalorder %s279, %s280
      %p292 = scmp.eq.s32.totalorder %s29, 3
      %p293 = por %p291, %p292
      %p295 = scmp.ne.s32.totalorder %s280, %s294
      %p296 = scmp.eq.s32.totalorder %s29, 0
      %p297 = por %p295, %p296
      %s299 = sadd.s32 %s298, 1
      %p302 = scmp.eq.s32.totalorder %s23, 3
      %p303 = scmp.ne.s32.totalorder %s298, %s300
      %p304 = scmp.eq.s32.totalorder %s23, 0
      %p305 = por %p303, %p304
      %p306 = scmp.ne.s32.totalorder %s298, %s300
      %p307 = scmp.eq.s32.totalorder %s28, 3
      %p308 = por %p306, %p307
      %p309 = scmp.ne.s32.totalorder %s300, %s301
      %p310 = scmp.eq.s32.totalorder %s28, 0
      %p311 = por %p309, %p310
      %p312 = scmp.ne.s32.totalorder %s300, %s301
      %p313 = scmp.eq.s32.totalorder %s29, 3
      %p314 = por %p312, %p313
      %p316 = scmp.ne.s32.totalorder %s301, %s315
      %p317 = scmp.eq.s32.totalorder %s29, 0
      %p318 = por %p316, %p317
      %s319 = ssub.s32 %s31, %s38
      %p320 = scmp.eq.s32.totalorder %s319, 0
      %s322 = sadd.s32 %s321, 1
      %s323 = scalar_select %p320, %s321, %s322
      %p326 = pneg %p320
      %p327 = scmp.eq.s32.totalorder %s23, 3
      %p328 = por %p326, %p327
      %p329 = scmp.ne.s32.totalorder %s321, %s324
      %p330 = scmp.eq.s32.totalorder %s23, 0
      %p331 = por %p329, %p330
      %p332 = scmp.ne.s32.totalorder %s321, %s324
      %p333 = scmp.eq.s32.totalorder %s28, 3
      %p334 = por %p332, %p333
      %p335 = scmp.ne.s32.totalorder %s324, %s325
      %p336 = scmp.eq.s32.totalorder %s28, 0
      %p337 = por %p335, %p336
      %p338 = scmp.ne.s32.totalorder %s324, %s325
      %p339 = scmp.eq.s32.totalorder %s29, 3
      %p340 = por %p338, %p339
      %p342 = scmp.ne.s32.totalorder %s325, %s341
      %p343 = scmp.eq.s32.totalorder %s29, 0
      %p344 = por %p342, %p343
      %s346 = sadd.s32 %s345, 1
      %p349 = scmp.eq.s32.totalorder %s23, 3
      %p350 = scmp.ne.s32.totalorder %s345, %s347
      %p351 = scmp.eq.s32.totalorder %s23, 0
      %p352 = por %p350, %p351
      %p353 = scmp.ne.s32.totalorder %s345, %s347
      %p354 = scmp.eq.s32.totalorder %s28, 3
      %p355 = por %p353, %p354
      %p356 = scmp.ne.s32.totalorder %s347, %s348
      %p357 = scmp.eq.s32.totalorder %s28, 0
      %p358 = por %p356, %p357
      %p359 = scmp.ne.s32.totalorder %s347, %s348
      %p360 = scmp.eq.s32.totalorder %s29, 3
      %p361 = por %p359, %p360
      %p363 = scmp.ne.s32.totalorder %s348, %s362
      %p364 = scmp.eq.s32.totalorder %s29, 0
      %p365 = por %p363, %p364
      %s366 = ssub.s32 %s30, %s42
      %p367 = scmp.eq.s32.totalorder %s366, 0
      %s369 = sadd.s32 %s368, 1
      %s370 = scalar_select %p367, %s368, %s369
      %p373 = pneg %p367
      %p374 = scmp.eq.s32.totalorder %s23, 3
      %p375 = por %p373, %p374
      %p376 = scmp.ne.s32.totalorder %s368, %s371
      %p377 = scmp.eq.s32.totalorder %s23, 0
      %p378 = por %p376, %p377
      %p379 = scmp.ne.s32.totalorder %s368, %s371
      %p380 = scmp.eq.s32.totalorder %s28, 3
      %p381 = por %p379, %p380
      %p382 = scmp.ne.s32.totalorder %s371, %s372
      %p383 = scmp.eq.s32.totalorder %s28, 0
      %p384 = por %p382, %p383
      %p385 = scmp.ne.s32.totalorder %s371, %s372
      %p386 = scmp.eq.s32.totalorder %s29, 3
      %p387 = por %p385, %p386
      %p389 = scmp.ne.s32.totalorder %s372, %s388
      %p390 = scmp.eq.s32.totalorder %s29, 0
      %p391 = por %p389, %p390
      %p392 = scmp.le.s32.totalorder 1, %s23
      %p393 = scmp.lt.s32.totalorder %s23, 5
      %p394 = pnand %p392, %p393
      %p395 = pneg %p394
      // Predicated region
      $region9: #{tpu_custom_call.1} parent=5 // pred_check
        _
      $region10: #{tpu_custom_call.1} parent=5 // pred_check_branch
        %397 = sbr.rel (%p394) target = $region12
      $region11: #{tpu_custom_call.1} parent=5 // pred_region
        %s398 = ssub.s32 %s23, 1
        // Predicated region
        $region13: #{tpu_custom_call.1} parent=11 // pred_check
          %p399 = pneg %p164
        $region14: #{tpu_custom_call.1} parent=11 // pred_check_branch
          %401 = sbr.rel (%p399) target = $region16
        $region15: #{tpu_custom_call.1} parent=11 // pred_region
          _
        $region16: #{tpu_custom_call.1} parent=11 // pred_fallthru
          _
        // Predicated region
        $region17: #{tpu_custom_call.1} parent=11 // pred_check
          %p402 = pneg %p185
        $region18: #{tpu_custom_call.1} parent=11 // pred_check_branch
          %404 = sbr.rel (%p402) target = $region20
        $region19: #{tpu_custom_call.1} parent=11 // pred_region
          _
        $region20: #{tpu_custom_call.1} parent=11 // pred_fallthru
          _
        // Predicated region
        $region21: #{tpu_custom_call.1} parent=11 // pred_check
          %p405 = pneg %p206
        $region22: #{tpu_custom_call.1} parent=11 // pred_check_branch
          %407 = sbr.rel (%p405) target = $region24
        $region23: #{tpu_custom_call.1} parent=11 // pred_region
          _
        $region24: #{tpu_custom_call.1} parent=11 // pred_fallthru
          _
        // Predicated region
        $region25: #{tpu_custom_call.1} parent=11 // pred_check
          %p408 = pneg %p227
        $region26: #{tpu_custom_call.1} parent=11 // pred_check_branch
          %410 = sbr.rel (%p408) target = $region28
        $region27: #{tpu_custom_call.1} parent=11 // pred_region
          _
        $region28: #{tpu_custom_call.1} parent=11 // pred_fallthru
          _
        // Predicated region
        $region29: #{tpu_custom_call.1} parent=11 // pred_check
          %p411 = pneg %p248
        $region30: #{tpu_custom_call.1} parent=11 // pred_check_branch
          %413 = sbr.rel (%p411) target = $region32
        $region31: #{tpu_custom_call.1} parent=11 // pred_region
          _
        $region32: #{tpu_custom_call.1} parent=11 // pred_fallthru
          _
        // Predicated region
        $region33: #{tpu_custom_call.1} parent=11 // pred_check
          %p414 = pneg %p269
        $region34: #{tpu_custom_call.1} parent=11 // pred_check_branch
          %416 = sbr.rel (%p414) target = $region36
        $region35: #{tpu_custom_call.1} parent=11 // pred_region
          _
        $region36: #{tpu_custom_call.1} parent=11 // pred_fallthru
          _
        // Predicated region
        $region37: #{tpu_custom_call.1} parent=11 // pred_check
          %p417 = pneg %p290
        $region38: #{tpu_custom_call.1} parent=11 // pred_check_branch
          %419 = sbr.rel (%p417) target = $region40
        $region39: #{tpu_custom_call.1} parent=11 // pred_region
          _
        $region40: #{tpu_custom_call.1} parent=11 // pred_fallthru
          _
        // Predicated region
        $region41: #{tpu_custom_call.1} parent=11 // pred_check
          %p420 = pneg %p311
        $region42: #{tpu_custom_call.1} parent=11 // pred_check_branch
          %422 = sbr.rel (%p420) target = $region44
        $region43: #{tpu_custom_call.1} parent=11 // pred_region
          _
        $region44: #{tpu_custom_call.1} parent=11 // pred_fallthru
          _
        // Predicated region
        $region45: #{tpu_custom_call.1} parent=11 // pred_check
          %p423 = pneg %p358
        $region46: #{tpu_custom_call.1} parent=11 // pred_check_branch
          %425 = sbr.rel (%p423) target = $region48
        $region47: #{tpu_custom_call.1} parent=11 // pred_region
          _
        $region48: #{tpu_custom_call.1} parent=11 // pred_fallthru
          _
      $region12: #{tpu_custom_call.1} parent=5 // pred_fallthru
        _
      %p426 = scmp.lt.s32.totalorder %s23, 4
      // Predicated region
      $region49: #{tpu_custom_call.1} parent=5 // pred_check
        %p427 = pneg %p426
      $region50: #{tpu_custom_call.1} parent=5 // pred_check_branch
        %429 = sbr.rel (%p427) target = $region52
      $region51: #{tpu_custom_call.1} parent=5 // pred_region
        // Predicated region
        $region53: #{tpu_custom_call.1} parent=51 // pred_check
          %p430 = pneg %p57
        $region54: #{tpu_custom_call.1} parent=51 // pred_check_branch
          %432 = sbr.rel (%p430) target = $region56
        $region55: #{tpu_custom_call.1} parent=51 // pred_region
          %p433 = scmp.lt.s32.totalorder %s30, 1
          %s434 = scalar_select %p433, %s30, 1
          %p435 = scmp.lt.s32.totalorder %s31, 1
          %s436 = scalar_select %p435, %s31, 1
          %s437 = smul.addr %s434, 2
          %s438 = sadd.s32 %s436, %s437
          %s439 = smul.addr %s438, 8
          %s440 = scalar_lea.vmem %s0, %s439
        $region56: #{tpu_custom_call.1} parent=51 // pred_fallthru
          _
        // Predicated region
        $region57: #{tpu_custom_call.1} parent=51 // pred_check
          %p441 = pneg %p85
        $region58: #{tpu_custom_call.1} parent=51 // pred_check_branch
          %443 = sbr.rel (%p441) target = $region60
        $region59: #{tpu_custom_call.1} parent=51 // pred_region
          %p444 = scmp.lt.s32.totalorder %s30, 1
          %s445 = scalar_select %p444, %s30, 1
          %p446 = scmp.lt.s32.totalorder %s31, 1
          %s447 = scalar_select %p446, %s31, 1
          %s448 = smul.addr %s447, 10
          %s449 = smul.addr %s445, 20
          %s450 = sadd.s32 %s448, %s449
          %s451 = smul.addr %s450, 8
          %s452 = scalar_lea.vmem %s1, %s451
        $region60: #{tpu_custom_call.1} parent=51 // pred_fallthru
          _
        // Predicated region
        $region61: #{tpu_custom_call.1} parent=51 // pred_check
          %p453 = pneg %p111
        $region62: #{tpu_custom_call.1} parent=51 // pred_check_branch
          %455 = sbr.rel (%p453) target = $region64
        $region63: #{tpu_custom_call.1} parent=51 // pred_region
          %p456 = scmp.lt.s32.totalorder %s30, 1
          %s457 = scalar_select %p456, %s30, 1
          %s458 = smul.addr %s457, 8
          %s459 = scalar_lea.vmem %s2, %s458
        $region64: #{tpu_custom_call.1} parent=51 // pred_fallthru
          _
        // Predicated region
        $region65: #{tpu_custom_call.1} parent=51 // pred_check
          %p460 = pneg %p137
        $region66: #{tpu_custom_call.1} parent=51 // pred_check_branch
          %462 = sbr.rel (%p460) target = $region68
        $region67: #{tpu_custom_call.1} parent=51 // pred_region
          %p463 = scmp.lt.s32.totalorder %s30, 1
          %s464 = scalar_select %p463, %s30, 1
          %s465 = smul.addr %s464, 8
          %s466 = scalar_lea.vmem %s3, %s465
        $region68: #{tpu_custom_call.1} parent=51 // pred_fallthru
          _
        // Predicated region
        $region69: #{tpu_custom_call.1} parent=51 // pred_check
          %p467 = pneg %p331
        $region70: #{tpu_custom_call.1} parent=51 // pred_check_branch
          %469 = sbr.rel (%p467) target = $region72
        $region71: #{tpu_custom_call.1} parent=51 // pred_region
          %p470 = scmp.lt.s32.totalorder %s31, 1
          %s471 = scalar_select %p470, %s31, 1
          %s472 = smul.addr %s471, 4
          %s473 = smul.addr %s472, 8
          %s474 = scalar_lea.vmem %s12, %s473
        $region72: #{tpu_custom_call.1} parent=51 // pred_fallthru
          _
      $region52: #{tpu_custom_call.1} parent=5 // pred_fallthru
        _
      %p475 = scmp.le.s32.totalorder 1, %s23
      %p476 = scmp.lt.s32.totalorder %s23, 5
      %p477 = pnand %p475, %p476
      %p478 = pneg %p477
      // Predicated region
      $region73: #{tpu_custom_call.1} parent=5 // pred_check
        _
      $region74: #{tpu_custom_call.1} parent=5 // pred_check_branch
        %480 = sbr.rel (%p477) target = $region76
      $region75: #{tpu_custom_call.1} parent=5 // pred_region
        %s481 = ssub.s32 %s23, 1
        %p482 = scmp.lt.s32.totalorder %s32, 1
        %s483 = scalar_select %p482, %s32, 1
        %p484 = scmp.lt.s32.totalorder %s33, 1
        %s485 = scalar_select %p484, %s33, 1
        %s486 = smul.addr %s483, 2
        %s487 = sadd.s32 %s485, %s486
        %s488 = smul.addr %s487, 8
        %s489 = scalar_lea.vmem %s0, %s488
        %p490 = pneg %p63
        %p491 = pneg %p60
        %p492 = scmp.lt.s32.totalorder %s32, 1
        %s493 = scalar_select %p492, %s32, 1
        %p494 = scmp.lt.s32.totalorder %s33, 1
        %s495 = scalar_select %p494, %s33, 1
        %s496 = smul.addr %s495, 10
        %s497 = smul.addr %s493, 20
        %s498 = sadd.s32 %s496, %s497
        %s499 = smul.addr %s498, 8
        %s500 = scalar_lea.vmem %s1, %s499
        %p501 = pneg %p91
        %p502 = pneg %p88
        %p503 = scmp.lt.s32.totalorder %s32, 1
        %s504 = scalar_select %p503, %s32, 1
        %s505 = smul.addr %s504, 8
        %s506 = scalar_lea.vmem %s2, %s505
        %p507 = pneg %p117
        %p508 = pneg %p114
        %p509 = scmp.lt.s32.totalorder %s32, 1
        %s510 = scalar_select %p509, %s32, 1
        %s511 = smul.addr %s510, 8
        %s512 = scalar_lea.vmem %s3, %s511
        %p513 = pneg %p143
        %p514 = pneg %p140
        %p515 = pneg %p164
        %p516 = pneg %p161
        %p517 = pneg %p185
        %p518 = pneg %p182
        %p519 = pneg %p206
        %p520 = pneg %p203
        %p521 = pneg %p227
        %p522 = pneg %p224
        %p523 = pneg %p248
        %p524 = pneg %p245
        %p525 = pneg %p269
        %p526 = pneg %p266
        %p527 = pneg %p290
        %p528 = pneg %p287
        %p529 = pneg %p311
        %p530 = pneg %p308
        %p531 = scmp.lt.s32.totalorder %s33, 1
        %s532 = scalar_select %p531, %s33, 1
        %s533 = smul.addr %s532, 4
        %s534 = smul.addr %s533, 8
        %s535 = scalar_lea.vmem %s12, %s534
        %p536 = pneg %p337
        %p537 = pneg %p334
        %p538 = pneg %p358
        %p539 = pneg %p355
        %p540 = pneg %p384
        %p541 = pneg %p381
        %s542 = sand.u32 %s371, 1
        %s543 = scalar_lea.sflag [#allocation3], %s542
        %s544 = sand.u32 %s371, 1
        %s545 = smul.addr %s544, 8
        %s546 = scalar_lea.vmem [#allocation2], %s545
        %p547 = scmp.lt.s32.totalorder %s32, 1
        %s548 = scalar_select %p547, %s32, 1
        %p549 = scmp.lt.s32.totalorder %s33, 1
        %s550 = scalar_select %p549, %s33, 1
        %s551 = smul.addr %s548, 2
        %s552 = sadd.s32 %s550, %s551
        %s553 = smul.addr %s552, 8
        %s554 = scalar_lea.vmem %s0, %s553
        %p555 = scmp.lt.s32.totalorder %s32, 1
        %s556 = scalar_select %p555, %s32, 1
        %p557 = scmp.lt.s32.totalorder %s33, 1
        %s558 = scalar_select %p557, %s33, 1
        %s559 = smul.addr %s558, 10
        %s560 = smul.addr %s556, 20
        %s561 = sadd.s32 %s559, %s560
        %s562 = smul.addr %s561, 8
        %s563 = scalar_lea.vmem %s1, %s562
        %p564 = scmp.lt.s32.totalorder %s32, 1
        %s565 = scalar_select %p564, %s32, 1
        %s566 = smul.addr %s565, 8
        %s567 = scalar_lea.vmem %s2, %s566
        %p568 = scmp.lt.s32.totalorder %s32, 1
        %s569 = scalar_select %p568, %s32, 1
        %s570 = smul.addr %s569, 8
        %s571 = scalar_lea.vmem %s3, %s570
        %p572 = scmp.lt.s32.totalorder %s33, 1
        %s573 = scalar_select %p572, %s33, 1
        %s574 = smul.addr %s573, 4
        %s575 = smul.addr %s574, 8
        %s576 = scalar_lea.vmem %s12, %s575
        %p577 = scmp.eq.s32.totalorder %s33, 0
        // Predicated region
        $region77: #{tpu_custom_call.1} parent=75 // pred_check
          %p578 = pneg %p577
        $region78: #{tpu_custom_call.1} parent=75 // pred_check_branch
          %580 = sbr.rel (%p578) target = $region80
        $region79: #{tpu_custom_call.1} parent=75 // pred_region
          %v581 = vld [vmem:[%s13] sm:$0x1]
          %v583 = vlaneseq
          %v584 = vshrl.u32 %v583, 7
          %v585 = vsub.s32 0, %v584
          %v586 = vrot.slane %v581, %v585
          %vm588 = vcmask 261120
          %589 = vst.msk [vmem:[%s546] sm:$0xff] %vm588, %v586
        $region80: #{tpu_custom_call.1} parent=75 // pred_fallthru
          _
        %v590 = vld [vmem:[%s554] sm:$0xff]
        %v591 = vld [vmem:[%s563] sm:$0xff]
        %v592 = vld [vmem:[%s563 + $0x8] sm:$0xff]
        %v593 = vld [vmem:[%s563 + $0x10] sm:$0xff]
        %v594 = vld [vmem:[%s563 + $0x18] sm:$0xff]
        %v595 = vld [vmem:[%s563 + $0x20] sm:$0xff]
        %v596 = vld [vmem:[%s563 + $0x28] sm:$0xff]
        %v597 = vld [vmem:[%s563 + $0x30] sm:$0xff]
        %v598 = vld [vmem:[%s563 + $0x38] sm:$0xff]
        %v599 = vld [vmem:[%s563 + $0x40] sm:$0xff]
        %v600 = vld [vmem:[%s563 + $0x48] sm:$0xff]
        %v601 = vld [vmem:[%s6] sm:$0xff]
        %v602 = vld [vmem:[%s6 + $0x8] sm:$0xff]
        %v603 = vld [vmem:[%s6 + $0x10] sm:$0xff]
        %v604 = vld [vmem:[%s6 + $0x18] sm:$0xff]
        %v605 = vld [vmem:[%s7] sm:$0x1]
        %v607 = vlaneseq
        %v608 = vshrl.u32 %v607, 7
        %v609 = vsub.s32 0, %v608
        %v610 = vrot.slane %v605, %v609
        %vm612 = vcmask 261120
        %v614 = vsel %vm612, %v591, 0
        %v617 = vsel %vm612, %v592, 0
        %v620 = vsel %vm612, %v593, 0
        %v623 = vsel %vm612, %v594, 0
        %v626 = vsel %vm612, %v595, 0
        %v629 = vsel %vm612, %v596, 0
        %v632 = vsel %vm612, %v597, 0
        %v635 = vsel %vm612, %v598, 0
        %v638 = vsel %vm612, %v599, 0
        %v641 = vsel %vm612, %v600, 0
        %643 = vmatprep.subr.mxu0 0.0
        %644 = vmatpush1.msra.mxu0 0.0
        %645 = vmatprep.subr.mxu0 0.0
        %646 = vmatpush1.msra.mxu0 0.0
        %647 = vmatprep.subr.mxu0 0.0
        %648 = vmatpush1.msra.mxu0 0.0
        %649 = vmatprep.subr.mxu0 0.0
        %650 = vmatpush1.msra.mxu0 0.0
        %651 = vmatprep.subr.mxu0 0.0
        %652 = vmatpush1.msra.mxu0 0.0
        %653 = vmatprep.subr.mxu0 0.0
        %654 = vmatpush1.msra.mxu0 0.0
        %655 = vmatprep.subr.mxu0 0.0
        %656 = vmatpush1.msra.mxu0 0.0
        %657 = vmatprep.subr.mxu0 0.0
        %658 = vmatpush1.msra.mxu0 0.0
        %659 = vmatprep.subr.mxu0 0.0
        %660 = vmatpush1.msra.mxu0 0.0
        %661 = vmatprep.subr.mxu0 0.0
        %662 = vmatpush1.msra.mxu0 0.0
        %663 = vmatprep.subr.mxu0 0.0
        %664 = vmatpush1.msra.mxu0 0.0
        %665 = vmatprep.subr.mxu0 0.0
        %666 = vmatpush1.msra.mxu0 0.0
        %667 = vmatprep.subr.mxu0 0.0
        %668 = vmatpush1.msra.mxu0 %v604
        %669 = vmatprep.subr.mxu0 0.0
        %670 = vmatpush1.msra.mxu0 %v603
        %671 = vmatprep.subr.mxu0 0.0
        %672 = vmatpush1.msra.mxu0 %v602
        %673 = vmatprep.subr.mxu0 0.0
        %674 = vmatpush1.msra.mxu0 %v601
        %675 = vmatprep.subr.mxu0 0.0
        %676 = vmatpush2.msra.mxu0 0.0
        %677 = vmatprep.subr.mxu0 0.0
        %678 = vmatpush2.msra.mxu0 0.0
        %679 = vmatprep.subr.mxu0 0.0
        %680 = vmatpush2.msra.mxu0 0.0
        %681 = vmatprep.subr.mxu0 0.0
        %682 = vmatpush2.msra.mxu0 0.0
        %683 = vmatprep.subr.mxu0 0.0
        %684 = vmatpush2.msra.mxu0 0.0
        %685 = vmatprep.subr.mxu0 0.0
        %686 = vmatpush2.msra.mxu0 0.0
        %687 = vmatprep.subr.mxu0 0.0
        %688 = vmatpush2.msra.mxu0 0.0
        %689 = vmatprep.subr.mxu0 0.0
        %690 = vmatpush2.msra.mxu0 0.0
        %691 = vmatprep.subr.mxu0 0.0
        %692 = vmatpush2.msra.mxu0 0.0
        %693 = vmatprep.subr.mxu0 0.0
        %694 = vmatpush2.msra.mxu0 0.0
        %695 = vmatprep.subr.mxu0 0.0
        %696 = vmatpush2.msra.mxu0 0.0
        %697 = vmatprep.subr.mxu0 0.0
        %698 = vmatpush2.msra.mxu0 0.0
        %699 = vmatprep.subr.mxu0 0.0
        %700 = vmatpush2.msra.mxu0 0.0
        %701 = vmatprep.subr.mxu0 0.0
        %702 = vmatpush2.msra.mxu0 0.0
        %703 = vmatprep.subr.mxu0 0.0
        %704 = vmatpush2.msra.mxu0 0.0
        %705 = vmatprep.subr.mxu0 0.0
        %706 = vmatpush2.msra.mxu0 0.0
        %707 = vmatprep.mubr.f32.mxu0 0.0
        %708 = vmatmul.mubr.f32.gmra.mxu0 %v614
        %v709 = vpop.f32.mrf.mxu0
        %v710 = vadd.f32 %v610, %v709
        %v711 = vpop.f32.mrf.mxu0
        %712 = vmatprep.mubr.f32.mxu0 0.0
        %713 = vmatmul.mubr.f32.gmra.mxu0 %v617
        %v714 = vpop.f32.mrf.mxu0
        %v715 = vadd.f32 %v610, %v714
        %v716 = vpop.f32.mrf.mxu0
        %717 = vmatprep.mubr.f32.mxu0 0.0
        %718 = vmatmul.mubr.f32.gmra.mxu0 %v620
        %v719 = vpop.f32.mrf.mxu0
        %v720 = vadd.f32 %v610, %v719
        %v721 = vpop.f32.mrf.mxu0
        %722 = vmatprep.mubr.f32.mxu0 0.0
        %723 = vmatmul.mubr.f32.gmra.mxu0 %v623
        %v724 = vpop.f32.mrf.mxu0
        %v725 = vadd.f32 %v610, %v724
        %v726 = vpop.f32.mrf.mxu0
        %727 = vmatprep.mubr.f32.mxu0 0.0
        %728 = vmatmul.mubr.f32.gmra.mxu0 %v626
        %v729 = vpop.f32.mrf.mxu0
        %v730 = vadd.f32 %v610, %v729
        %v731 = vpop.f32.mrf.mxu0
        %732 = vmatprep.mubr.f32.mxu0 0.0
        %733 = vmatmul.mubr.f32.gmra.mxu0 %v629
        %v734 = vpop.f32.mrf.mxu0
        %v735 = vadd.f32 %v610, %v734
        %v736 = vpop.f32.mrf.mxu0
        %737 = vmatprep.mubr.f32.mxu0 0.0
        %738 = vmatmul.mubr.f32.gmra.mxu0 %v632
        %v739 = vpop.f32.mrf.mxu0
        %v740 = vadd.f32 %v610, %v739
        %v741 = vpop.f32.mrf.mxu0
        %742 = vmatprep.mubr.f32.mxu0 0.0
        %743 = vmatmul.mubr.f32.gmra.mxu0 %v635
        %v744 = vpop.f32.mrf.mxu0
        %v745 = vadd.f32 %v610, %v744
        %v746 = vpop.f32.mrf.mxu0
        %747 = vmatprep.mubr.f32.mxu0 0.0
        %748 = vmatmul.mubr.f32.gmra.mxu0 %v638
        %v749 = vpop.f32.mrf.mxu0
        %v750 = vadd.f32 %v610, %v749
        %v751 = vpop.f32.mrf.mxu0
        %752 = vmatprep.mubr.f32.mxu0 0.0
        %753 = vmatmul.mubr.f32.gmra.mxu0 %v641
        %v754 = vpop.f32.mrf.mxu0
        %v755 = vadd.f32 %v610, %v754
        %v756 = vpop.f32.mrf.mxu0
        %757 = vdwg.mxu0
        %v758 = vld [vmem:[%s8] sm:$0xff]
        %v759 = vld [vmem:[%s8 + $0x8] sm:$0xff]
        %v760 = vld [vmem:[%s8 + $0x10] sm:$0xff]
        %v761 = vld [vmem:[%s8 + $0x18] sm:$0xff]
        %v762 = vld [vmem:[%s9] sm:$0x1]
        %v764 = vlaneseq
        %v765 = vshrl.u32 %v764, 7
        %v766 = vsub.s32 0, %v765
        %v767 = vrot.slane %v762, %v766
        %v770 = vsel %vm612, %v590, 0
        %772 = vmatprep.subr.mxu0 0.0
        %773 = vmatpush1.msra.mxu0 0.0
        %774 = vmatprep.subr.mxu0 0.0
        %775 = vmatpush1.msra.mxu0 0.0
        %776 = vmatprep.subr.mxu0 0.0
        %777 = vmatpush1.msra.mxu0 0.0
        %778 = vmatprep.subr.mxu0 0.0
        %779 = vmatpush1.msra.mxu0 0.0
        %780 = vmatprep.subr.mxu0 0.0
        %781 = vmatpush1.msra.mxu0 0.0
        %782 = vmatprep.subr.mxu0 0.0
        %783 = vmatpush1.msra.mxu0 0.0
        %784 = vmatprep.subr.mxu0 0.0
        %785 = vmatpush1.msra.mxu0 0.0
        %786 = vmatprep.subr.mxu0 0.0
        %787 = vmatpush1.msra.mxu0 0.0
        %788 = vmatprep.subr.mxu0 0.0
        %789 = vmatpush1.msra.mxu0 0.0
        %790 = vmatprep.subr.mxu0 0.0
        %791 = vmatpush1.msra.mxu0 0.0
        %792 = vmatprep.subr.mxu0 0.0
        %793 = vmatpush1.msra.mxu0 0.0
        %794 = vmatprep.subr.mxu0 0.0
        %795 = vmatpush1.msra.mxu0 0.0
        %796 = vmatprep.subr.mxu0 0.0
        %797 = vmatpush1.msra.mxu0 %v761
        %798 = vmatprep.subr.mxu0 0.0
        %799 = vmatpush1.msra.mxu0 %v760
        %800 = vmatprep.subr.mxu0 0.0
        %801 = vmatpush1.msra.mxu0 %v759
        %802 = vmatprep.subr.mxu0 0.0
        %803 = vmatpush1.msra.mxu0 %v758
        %804 = vmatprep.subr.mxu0 0.0
        %805 = vmatpush2.msra.mxu0 0.0
        %806 = vmatprep.subr.mxu0 0.0
        %807 = vmatpush2.msra.mxu0 0.0
        %808 = vmatprep.subr.mxu0 0.0
        %809 = vmatpush2.msra.mxu0 0.0
        %810 = vmatprep.subr.mxu0 0.0
        %811 = vmatpush2.msra.mxu0 0.0
        %812 = vmatprep.subr.mxu0 0.0
        %813 = vmatpush2.msra.mxu0 0.0
        %814 = vmatprep.subr.mxu0 0.0
        %815 = vmatpush2.msra.mxu0 0.0
        %816 = vmatprep.subr.mxu0 0.0
        %817 = vmatpush2.msra.mxu0 0.0
        %818 = vmatprep.subr.mxu0 0.0
        %819 = vmatpush2.msra.mxu0 0.0
        %820 = vmatprep.subr.mxu0 0.0
        %821 = vmatpush2.msra.mxu0 0.0
        %822 = vmatprep.subr.mxu0 0.0
        %823 = vmatpush2.msra.mxu0 0.0
        %824 = vmatprep.subr.mxu0 0.0
        %825 = vmatpush2.msra.mxu0 0.0
        %826 = vmatprep.subr.mxu0 0.0
        %827 = vmatpush2.msra.mxu0 0.0
        %828 = vmatprep.subr.mxu0 0.0
        %829 = vmatpush2.msra.mxu0 0.0
        %830 = vmatprep.subr.mxu0 0.0
        %831 = vmatpush2.msra.mxu0 0.0
        %832 = vmatprep.subr.mxu0 0.0
        %833 = vmatpush2.msra.mxu0 0.0
        %834 = vmatprep.subr.mxu0 0.0
        %835 = vmatpush2.msra.mxu0 0.0
        %836 = vmatprep.mubr.f32.mxu0 0.0
        %837 = vmatmul.mubr.f32.gmra.mxu0 %v770
        %v838 = vpop.f32.mrf.mxu0
        %v839 = vadd.f32 %v767, %v838
        %v840 = vpop.f32.mrf.mxu0
        %841 = vdwg.mxu0
        %v842 = vld [vmem:[%s10] sm:$0xff]
        %v843 = vld [vmem:[%s10 + $0x8] sm:$0xff]
        %v844 = vld [vmem:[%s10 + $0x10] sm:$0xff]
        %v845 = vld [vmem:[%s10 + $0x18] sm:$0xff]
        %v846 = vld [vmem:[%s11] sm:$0x1]
        %v848 = vlaneseq
        %v849 = vshrl.u32 %v848, 7
        %v850 = vsub.s32 0, %v849
        %v851 = vrot.slane %v846, %v850
        %853 = vmatprep.subr.mxu0 0.0
        %854 = vmatpush1.msra.mxu0 0.0
        %855 = vmatprep.subr.mxu0 0.0
        %856 = vmatpush1.msra.mxu0 0.0
        %857 = vmatprep.subr.mxu0 0.0
        %858 = vmatpush1.msra.mxu0 0.0
        %859 = vmatprep.subr.mxu0 0.0
        %860 = vmatpush1.msra.mxu0 0.0
        %861 = vmatprep.subr.mxu0 0.0
        %862 = vmatpush1.msra.mxu0 0.0
        %863 = vmatprep.subr.mxu0 0.0
        %864 = vmatpush1.msra.mxu0 0.0
        %865 = vmatprep.subr.mxu0 0.0
        %866 = vmatpush1.msra.mxu0 0.0
        %867 = vmatprep.subr.mxu0 0.0
        %868 = vmatpush1.msra.mxu0 0.0
        %869 = vmatprep.subr.mxu0 0.0
        %870 = vmatpush1.msra.mxu0 0.0
        %871 = vmatprep.subr.mxu0 0.0
        %872 = vmatpush1.msra.mxu0 0.0
        %873 = vmatprep.subr.mxu0 0.0
        %874 = vmatpush1.msra.mxu0 0.0
        %875 = vmatprep.subr.mxu0 0.0
        %876 = vmatpush1.msra.mxu0 0.0
        %877 = vmatprep.subr.mxu0 0.0
        %878 = vmatpush1.msra.mxu0 %v845
        %879 = vmatprep.subr.mxu0 0.0
        %880 = vmatpush1.msra.mxu0 %v844
        %881 = vmatprep.subr.mxu0 0.0
        %882 = vmatpush1.msra.mxu0 %v843
        %883 = vmatprep.subr.mxu0 0.0
        %884 = vmatpush1.msra.mxu0 %v842
        %885 = vmatprep.subr.mxu0 0.0
        %886 = vmatpush2.msra.mxu0 0.0
        %887 = vmatprep.subr.mxu0 0.0
        %888 = vmatpush2.msra.mxu0 0.0
        %889 = vmatprep.subr.mxu0 0.0
        %890 = vmatpush2.msra.mxu0 0.0
        %891 = vmatprep.subr.mxu0 0.0
        %892 = vmatpush2.msra.mxu0 0.0
        %893 = vmatprep.subr.mxu0 0.0
        %894 = vmatpush2.msra.mxu0 0.0
        %895 = vmatprep.subr.mxu0 0.0
        %896 = vmatpush2.msra.mxu0 0.0
        %897 = vmatprep.subr.mxu0 0.0
        %898 = vmatpush2.msra.mxu0 0.0
        %899 = vmatprep.subr.mxu0 0.0
        %900 = vmatpush2.msra.mxu0 0.0
        %901 = vmatprep.subr.mxu0 0.0
        %902 = vmatpush2.msra.mxu0 0.0
        %903 = vmatprep.subr.mxu0 0.0
        %904 = vmatpush2.msra.mxu0 0.0
        %905 = vmatprep.subr.mxu0 0.0
        %906 = vmatpush2.msra.mxu0 0.0
        %907 = vmatprep.subr.mxu0 0.0
        %908 = vmatpush2.msra.mxu0 0.0
        %909 = vmatprep.subr.mxu0 0.0
        %910 = vmatpush2.msra.mxu0 0.0
        %911 = vmatprep.subr.mxu0 0.0
        %912 = vmatpush2.msra.mxu0 0.0
        %913 = vmatprep.subr.mxu0 0.0
        %914 = vmatpush2.msra.mxu0 0.0
        %915 = vmatprep.subr.mxu0 0.0
        %916 = vmatpush2.msra.mxu0 0.0
        %917 = vmatprep.mubr.f32.mxu0 0.0
        %918 = vmatmul.mubr.f32.gmra.mxu0 %v770
        %v919 = vpop.f32.mrf.mxu0
        %v920 = vadd.f32 %v851, %v919
        %v921 = vpop.f32.mrf.mxu0
        %922 = vdwg.mxu0
        %v923 = vld [vmem:[%s567] sm:$0xff]
        %v924 = vadd.f32 %v923, %v839
        %v925 = vld [vmem:[%s571] sm:$0xff]
        %927 = vrot.lane.b32.xlu0 %v839, 112
        %v928 = vpop.permute.xlu0 %927
        %v930 = vadd.f32 %v925, %v928
        %v931 = vfloor.f32 %v924
        %v932 = vfloor.f32 %v930
        %v933 = vsub.f32 %v924, %v931
        %v934 = vsub.f32 %v930, %v932
        %v935 = vcvt.f32.s32.to.zero.pseudo %v931
        %v936 = vcvt.f32.s32.to.zero.pseudo %v932
        %v937 = vld [vmem:[%s4] sm:$0x1]
        %v938 = vld [vmem:[%s5] sm:$0x1]
        %v939 = vsub.f32 1.0, %v933
        %v940 = vsub.f32 1.0, %v934
        %v941 = vmul.f32 %v940, %v939
        %v942 = vmul.f32 %v940, %v933
        %v943 = vmul.f32 %v934, %v939
        %v944 = vmul.f32 %v934, %v933
        %vm945 = vcmp.ge.s32.totalorder %v935, 0
        %v946 = vlaneseq
        %v947 = vshrl.u32 %v946, 7
        %v948 = vsub.s32 0, %v947
        %v949 = vrot.slane %v937, %v948
        %vm950 = vcmp.lt.s32.totalorder %v935, %v949
        %vm951 = vmand %vm945, %vm950
        %vm952 = vcmp.ge.s32.totalorder %v936, 0
        %vm953 = vmand %vm951, %vm952
        %v954 = vlaneseq
        %v955 = vshrl.u32 %v954, 7
        %v956 = vsub.s32 0, %v955
        %v957 = vrot.slane %v938, %v956
        %vm958 = vcmp.lt.s32.totalorder %v936, %v957
        %vm959 = vmand %vm953, %vm958
        %v960 = vmul.u32 %v936, %v949
        %v961 = vadd.s32 %v960, %v935
        %v962 = vsel %vm959, %v961, 4294967295
        %v963 = vadd.s32 %v935, 1
        %vm964 = vcmp.ge.s32.totalorder %v963, 0
        %vm965 = vcmp.lt.s32.totalorder %v963, %v949
        %vm966 = vmand %vm964, %vm965
        %vm967 = vmand %vm966, %vm952
        %vm968 = vmand %vm967, %vm958
        %v969 = vadd.s32 %v960, %v963
        %v970 = vsel %vm968, %v969, 4294967295
        %v971 = vadd.s32 %v936, 1
        %vm972 = vcmp.ge.s32.totalorder %v971, 0
        %vm973 = vmand %vm951, %vm972
        %vm974 = vcmp.lt.s32.totalorder %v971, %v957
        %vm975 = vmand %vm973, %vm974
        %v976 = vmul.u32 %v971, %v949
        %v977 = vadd.s32 %v976, %v935
        %v978 = vsel %vm975, %v977, 4294967295
        %vm979 = vmand %vm966, %vm972
        %vm980 = vmand %vm979, %vm974
        %v981 = vadd.s32 %v976, %v963
        %v982 = vsel %vm980, %v981, 4294967295
        %v983 = vlaneseq
        %v984 = vand.u32 %v983, 127
        %v985 = vld [vmem:[%s576] sm:$0xff]
        %v986 = vld [vmem:[%s576 + $0x8] sm:$0xff]
        %v987 = vld [vmem:[%s576 + $0x10] sm:$0xff]
        %v988 = vld [vmem:[%s576 + $0x18] sm:$0xff]
        %vm989 = vcmask 31744
        %v990 = vsel %vm989, %v920, -inf
        %991 = vmax.xlane.f32.xlu0 %v990
        %v992 = vpop.xlane.xlu0 %991
        %v993 = vsub.f32 %v920, %v992
        %v994 = vmul.f32 %v993, 1.442695
        %v995 = vpow.pop %v994
        %v996 = vsel %vm989, %v995, 0.0
        %997 = vadd.xlane.f32.xlu0 %v996
        %v998 = vpop.xlane.xlu0 %997
        %v999 = vrcp.pop %v998
        %v1000 = vmul.f32 %v995, %v999
        %v1001 = vmul.f32 %v941, %v1000
        %v1002 = vmul.f32 %v942, %v1000
        %v1003 = vmul.f32 %v943, %v1000
        %v1004 = vmul.f32 %v944, %v1000
        %1005 = vset.pattern.permute.xlu0 0
        %1006 = vperm.xlu0 %1005, %v962
        %v1007 = vpop.permute.xlu0 %1006
        %vm1008 = vcmp.eq.s32.totalorder %v984, %v1007
        %1010 = vset.pattern.permute.xlu0 0
        %1011 = vperm.xlu0 %1010, %v1001
        %v1012 = vpop.permute.xlu0 %1011
        %v1014 = vsel %vm1008, %v1012, 0.0
        %v1015 = vadd.f32 %v1014, 0.0
        %1016 = vset.pattern.permute.xlu0 0
        %1017 = vperm.xlu0 %1016, %v970
        %v1018 = vpop.permute.xlu0 %1017
        %vm1019 = vcmp.eq.s32.totalorder %v984, %v1018
        %1021 = vset.pattern.permute.xlu0 0
        %1022 = vperm.xlu0 %1021, %v1002
        %v1023 = vpop.permute.xlu0 %1022
        %v1025 = vsel %vm1019, %v1023, 0.0
        %v1026 = vadd.f32 %v1015, %v1025
        %1027 = vset.pattern.permute.xlu0 0
        %1028 = vperm.xlu0 %1027, %v978
        %v1029 = vpop.permute.xlu0 %1028
        %vm1030 = vcmp.eq.s32.totalorder %v984, %v1029
        %1032 = vset.pattern.permute.xlu0 0
        %1033 = vperm.xlu0 %1032, %v1003
        %v1034 = vpop.permute.xlu0 %1033
        %v1036 = vsel %vm1030, %v1034, 0.0
        %v1037 = vadd.f32 %v1026, %v1036
        %1038 = vset.pattern.permute.xlu0 0
        %1039 = vperm.xlu0 %1038, %v982
        %v1040 = vpop.permute.xlu0 %1039
        %vm1041 = vcmp.eq.s32.totalorder %v984, %v1040
        %1043 = vset.pattern.permute.xlu0 0
        %1044 = vperm.xlu0 %1043, %v1004
        %v1045 = vpop.permute.xlu0 %1044
        %v1047 = vsel %vm1041, %v1045, 0.0
        %v1048 = vadd.f32 %v1037, %v1047
        %1049 = vset.pattern.permute.xlu0 1
        %1050 = vperm.xlu0 %1049, %v962
        %v1051 = vpop.permute.xlu0 %1050
        %vm1052 = vcmp.eq.s32.totalorder %v984, %v1051
        %1053 = vset.pattern.permute.xlu0 1
        %1054 = vperm.xlu0 %1053, %v1001
        %v1055 = vpop.permute.xlu0 %1054
        %v1057 = vsel %vm1052, %v1055, 0.0
        %v1058 = vadd.f32 %v1048, %v1057
        %1059 = vset.pattern.permute.xlu0 1
        %1060 = vperm.xlu0 %1059, %v970
        %v1061 = vpop.permute.xlu0 %1060
        %vm1062 = vcmp.eq.s32.totalorder %v984, %v1061
        %1063 = vset.pattern.permute.xlu0 1
        %1064 = vperm.xlu0 %1063, %v1002
        %v1065 = vpop.permute.xlu0 %1064
        %v1067 = vsel %vm1062, %v1065, 0.0
        %v1068 = vadd.f32 %v1058, %v1067
        %1069 = vset.pattern.permute.xlu0 1
        %1070 = vperm.xlu0 %1069, %v978
        %v1071 = vpop.permute.xlu0 %1070
        %vm1072 = vcmp.eq.s32.totalorder %v984, %v1071
        %1073 = vset.pattern.permute.xlu0 1
        %1074 = vperm.xlu0 %1073, %v1003
        %v1075 = vpop.permute.xlu0 %1074
        %v1077 = vsel %vm1072, %v1075, 0.0
        %v1078 = vadd.f32 %v1068, %v1077
        %1079 = vset.pattern.permute.xlu0 1
        %1080 = vperm.xlu0 %1079, %v982
        %v1081 = vpop.permute.xlu0 %1080
        %vm1082 = vcmp.eq.s32.totalorder %v984, %v1081
        %1083 = vset.pattern.permute.xlu0 1
        %1084 = vperm.xlu0 %1083, %v1004
        %v1085 = vpop.permute.xlu0 %1084
        %v1087 = vsel %vm1082, %v1085, 0.0
        %v1088 = vadd.f32 %v1078, %v1087
        %1089 = vset.pattern.permute.xlu0 2
        %1090 = vperm.xlu0 %1089, %v962
        %v1091 = vpop.permute.xlu0 %1090
        %vm1092 = vcmp.eq.s32.totalorder %v984, %v1091
        %1093 = vset.pattern.permute.xlu0 2
        %1094 = vperm.xlu0 %1093, %v1001
        %v1095 = vpop.permute.xlu0 %1094
        %v1097 = vsel %vm1092, %v1095, 0.0
        %v1098 = vadd.f32 %v1097, 0.0
        %1099 = vset.pattern.permute.xlu0 2
        %1100 = vperm.xlu0 %1099, %v970
        %v1101 = vpop.permute.xlu0 %1100
        %vm1102 = vcmp.eq.s32.totalorder %v984, %v1101
        %1103 = vset.pattern.permute.xlu0 2
        %1104 = vperm.xlu0 %1103, %v1002
        %v1105 = vpop.permute.xlu0 %1104
        %v1107 = vsel %vm1102, %v1105, 0.0
        %v1108 = vadd.f32 %v1098, %v1107
        %1109 = vset.pattern.permute.xlu0 2
        %1110 = vperm.xlu0 %1109, %v978
        %v1111 = vpop.permute.xlu0 %1110
        %vm1112 = vcmp.eq.s32.totalorder %v984, %v1111
        %1113 = vset.pattern.permute.xlu0 2
        %1114 = vperm.xlu0 %1113, %v1003
        %v1115 = vpop.permute.xlu0 %1114
        %v1117 = vsel %vm1112, %v1115, 0.0
        %v1118 = vadd.f32 %v1108, %v1117
        %1119 = vset.pattern.permute.xlu0 2
        %1120 = vperm.xlu0 %1119, %v982
        %v1121 = vpop.permute.xlu0 %1120
        %vm1122 = vcmp.eq.s32.totalorder %v984, %v1121
        %1123 = vset.pattern.permute.xlu0 2
        %1124 = vperm.xlu0 %1123, %v1004
        %v1125 = vpop.permute.xlu0 %1124
        %v1127 = vsel %vm1122, %v1125, 0.0
        %v1128 = vadd.f32 %v1118, %v1127
        %1129 = vset.pattern.permute.xlu0 3
        %1130 = vperm.xlu0 %1129, %v962
        %v1131 = vpop.permute.xlu0 %1130
        %vm1132 = vcmp.eq.s32.totalorder %v984, %v1131
        %1133 = vset.pattern.permute.xlu0 3
        %1134 = vperm.xlu0 %1133, %v1001
        %v1135 = vpop.permute.xlu0 %1134
        %v1137 = vsel %vm1132, %v1135, 0.0
        %v1138 = vadd.f32 %v1128, %v1137
        %1139 = vset.pattern.permute.xlu0 3
        %1140 = vperm.xlu0 %1139, %v970
        %v1141 = vpop.permute.xlu0 %1140
        %vm1142 = vcmp.eq.s32.totalorder %v984, %v1141
        %1143 = vset.pattern.permute.xlu0 3
        %1144 = vperm.xlu0 %1143, %v1002
        %v1145 = vpop.permute.xlu0 %1144
        %v1147 = vsel %vm1142, %v1145, 0.0
        %v1148 = vadd.f32 %v1138, %v1147
        %1149 = vset.pattern.permute.xlu0 3
        %1150 = vperm.xlu0 %1149, %v978
        %v1151 = vpop.permute.xlu0 %1150
        %vm1152 = vcmp.eq.s32.totalorder %v984, %v1151
        %1153 = vset.pattern.permute.xlu0 3
        %1154 = vperm.xlu0 %1153, %v1003
        %v1155 = vpop.permute.xlu0 %1154
        %v1157 = vsel %vm1152, %v1155, 0.0
        %v1158 = vadd.f32 %v1148, %v1157
        %1159 = vset.pattern.permute.xlu0 3
        %1160 = vperm.xlu0 %1159, %v982
        %v1161 = vpop.permute.xlu0 %1160
        %vm1162 = vcmp.eq.s32.totalorder %v984, %v1161
        %1163 = vset.pattern.permute.xlu0 3
        %1164 = vperm.xlu0 %1163, %v1004
        %v1165 = vpop.permute.xlu0 %1164
        %v1167 = vsel %vm1162, %v1165, 0.0
        %v1168 = vadd.f32 %v1158, %v1167
        %vm1169 = vcmask 130048
        %v1171 = vsel %vm1169, %v1168, 0
        %1173 = vmatprep.subr.mxu0 0.0
        %1174 = vmatpush1.msra.mxu0 0.0
        %1175 = vmatprep.subr.mxu0 0.0
        %1176 = vmatpush1.msra.mxu0 0.0
        %1177 = vmatprep.subr.mxu0 0.0
        %1178 = vmatpush1.msra.mxu0 0.0
        %1179 = vmatprep.subr.mxu0 0.0
        %1180 = vmatpush1.msra.mxu0 0.0
        %1181 = vmatprep.subr.mxu0 0.0
        %1182 = vmatpush1.msra.mxu0 0.0
        %1183 = vmatprep.subr.mxu0 0.0
        %1184 = vmatpush1.msra.mxu0 0.0
        %1185 = vmatprep.subr.mxu0 0.0
        %1186 = vmatpush1.msra.mxu0 0.0
        %1187 = vmatprep.subr.mxu0 0.0
        %1188 = vmatpush1.msra.mxu0 0.0
        %1189 = vmatprep.subr.mxu0 0.0
        %1190 = vmatpush1.msra.mxu0 0.0
        %1191 = vmatprep.subr.mxu0 0.0
        %1192 = vmatpush1.msra.mxu0 0.0
        %1193 = vmatprep.subr.mxu0 0.0
        %1194 = vmatpush1.msra.mxu0 0.0
        %1195 = vmatprep.subr.mxu0 0.0
        %1196 = vmatpush1.msra.mxu0 0.0
        %1197 = vmatprep.subr.mxu0 0.0
        %1198 = vmatpush1.msra.mxu0 0.0
        %1199 = vmatprep.subr.mxu0 0.0
        %1200 = vmatpush1.msra.mxu0 0.0
        %1201 = vmatprep.subr.mxu0 0.0
        %1202 = vmatpush1.msra.mxu0 %v755
        %1203 = vmatprep.subr.mxu0 0.0
        %1204 = vmatpush1.msra.mxu0 %v750
        %1205 = vmatprep.subr.mxu0 0.0
        %1206 = vmatpush2.msra.mxu0 0.0
        %1207 = vmatprep.subr.mxu0 0.0
        %1208 = vmatpush2.msra.mxu0 0.0
        %1209 = vmatprep.subr.mxu0 0.0
        %1210 = vmatpush2.msra.mxu0 0.0
        %1211 = vmatprep.subr.mxu0 0.0
        %1212 = vmatpush2.msra.mxu0 0.0
        %1213 = vmatprep.subr.mxu0 0.0
        %1214 = vmatpush2.msra.mxu0 0.0
        %1215 = vmatprep.subr.mxu0 0.0
        %1216 = vmatpush2.msra.mxu0 0.0
        %1217 = vmatprep.subr.mxu0 0.0
        %1218 = vmatpush2.msra.mxu0 0.0
        %1219 = vmatprep.subr.mxu0 0.0
        %1220 = vmatpush2.msra.mxu0 0.0
        %1221 = vmatprep.subr.mxu0 0.0
        %1222 = vmatpush2.msra.mxu0 0.0
        %1223 = vmatprep.subr.mxu0 0.0
        %1224 = vmatpush2.msra.mxu0 0.0
        %1225 = vmatprep.subr.mxu0 0.0
        %1226 = vmatpush2.msra.mxu0 0.0
        %1227 = vmatprep.subr.mxu0 0.0
        %1228 = vmatpush2.msra.mxu0 0.0
        %1229 = vmatprep.subr.mxu0 0.0
        %1230 = vmatpush2.msra.mxu0 0.0
        %1231 = vmatprep.subr.mxu0 0.0
        %1232 = vmatpush2.msra.mxu0 0.0
        %1233 = vmatprep.subr.mxu0 0.0
        %1234 = vmatpush2.msra.mxu0 0.0
        %1235 = vmatprep.subr.mxu0 0.0
        %1236 = vmatpush2.msra.mxu0 0.0
        %1237 = vmatprep.mubr.f32.mxu0 0.0
        %1238 = vmatmul.mubr.f32.gmra.mxu0 %v1171
        %v1239 = vpop.f32.mrf.mxu0
        %v1240 = vadd.f32 0.0, %v1239
        %v1241 = vpop.f32.mrf.mxu0
        %1242 = vdwg.mxu0
        %vm1243 = vcmask 523264
        %v1245 = vsel %vm1243, %v1088, 0
        %1247 = vmatprep.subr.mxu0 0.0
        %1248 = vmatpush1.msra.mxu0 0.0
        %1249 = vmatprep.subr.mxu0 0.0
        %1250 = vmatpush1.msra.mxu0 0.0
        %1251 = vmatprep.subr.mxu0 0.0
        %1252 = vmatpush1.msra.mxu0 0.0
        %1253 = vmatprep.subr.mxu0 0.0
        %1254 = vmatpush1.msra.mxu0 0.0
        %1255 = vmatprep.subr.mxu0 0.0
        %1256 = vmatpush1.msra.mxu0 0.0
        %1257 = vmatprep.subr.mxu0 0.0
        %1258 = vmatpush1.msra.mxu0 0.0
        %1259 = vmatprep.subr.mxu0 0.0
        %1260 = vmatpush1.msra.mxu0 0.0
        %1261 = vmatprep.subr.mxu0 0.0
        %1262 = vmatpush1.msra.mxu0 0.0
        %1263 = vmatprep.subr.mxu0 0.0
        %1264 = vmatpush1.msra.mxu0 %v745
        %1265 = vmatprep.subr.mxu0 0.0
        %1266 = vmatpush1.msra.mxu0 %v740
        %1267 = vmatprep.subr.mxu0 0.0
        %1268 = vmatpush1.msra.mxu0 %v735
        %1269 = vmatprep.subr.mxu0 0.0
        %1270 = vmatpush1.msra.mxu0 %v730
        %1271 = vmatprep.subr.mxu0 0.0
        %1272 = vmatpush1.msra.mxu0 %v725
        %1273 = vmatprep.subr.mxu0 0.0
        %1274 = vmatpush1.msra.mxu0 %v720
        %1275 = vmatprep.subr.mxu0 0.0
        %1276 = vmatpush1.msra.mxu0 %v715
        %1277 = vmatprep.subr.mxu0 0.0
        %1278 = vmatpush1.msra.mxu0 %v710
        %1279 = vmatprep.subr.mxu0 0.0
        %1280 = vmatpush2.msra.mxu0 0.0
        %1281 = vmatprep.subr.mxu0 0.0
        %1282 = vmatpush2.msra.mxu0 0.0
        %1283 = vmatprep.subr.mxu0 0.0
        %1284 = vmatpush2.msra.mxu0 0.0
        %1285 = vmatprep.subr.mxu0 0.0
        %1286 = vmatpush2.msra.mxu0 0.0
        %1287 = vmatprep.subr.mxu0 0.0
        %1288 = vmatpush2.msra.mxu0 0.0
        %1289 = vmatprep.subr.mxu0 0.0
        %1290 = vmatpush2.msra.mxu0 0.0
        %1291 = vmatprep.subr.mxu0 0.0
        %1292 = vmatpush2.msra.mxu0 0.0
        %1293 = vmatprep.subr.mxu0 0.0
        %1294 = vmatpush2.msra.mxu0 0.0
        %1295 = vmatprep.subr.mxu0 0.0
        %1296 = vmatpush2.msra.mxu0 0.0
        %1297 = vmatprep.subr.mxu0 0.0
        %1298 = vmatpush2.msra.mxu0 0.0
        %1299 = vmatprep.subr.mxu0 0.0
        %1300 = vmatpush2.msra.mxu0 0.0
        %1301 = vmatprep.subr.mxu0 0.0
        %1302 = vmatpush2.msra.mxu0 0.0
        %1303 = vmatprep.subr.mxu0 0.0
        %1304 = vmatpush2.msra.mxu0 0.0
        %1305 = vmatprep.subr.mxu0 0.0
        %1306 = vmatpush2.msra.mxu0 0.0
        %1307 = vmatprep.subr.mxu0 0.0
        %1308 = vmatpush2.msra.mxu0 0.0
        %1309 = vmatprep.subr.mxu0 0.0
        %1310 = vmatpush2.msra.mxu0 0.0
        %1311 = vmatprep.mubr.f32.mxu0 0.0
        %1312 = vmatmul.mubr.f32.gmra.mxu0 %v1245
        %v1313 = vpop.f32.mrf.mxu0
        %v1314 = vadd.f32 %v1240, %v1313
        %v1315 = vpop.f32.mrf.mxu0
        %1316 = vdwg.mxu0
        %vm1317 = vcmask 64544
        %v1318 = vsel %vm1317, %v920, -inf
        %1319 = vmax.xlane.f32.xlu0 %v1318
        %v1320 = vpop.xlane.xlu0 %1319
        %v1321 = vsub.f32 %v920, %v1320
        %v1322 = vmul.f32 %v1321, 1.442695
        %v1323 = vpow.pop %v1322
        %1325 = vrot.lane.b32.xlu0 %v1323, 124
        %v1326 = vpop.permute.xlu0 %1325
        %v1328 = vsel %vm989, %v1326, 0.0
        %1329 = vadd.xlane.f32.xlu0 %v1328
        %v1330 = vpop.xlane.xlu0 %1329
        %v1331 = vrcp.pop %v1330
        %v1332 = vmul.f32 %v1323, %v1331
        %v1333 = vmul.f32 %v941, %v1332
        %v1334 = vmul.f32 %v942, %v1332
        %v1335 = vmul.f32 %v943, %v1332
        %v1336 = vmul.f32 %v944, %v1332
        %1337 = vset.pattern.permute.xlu0 4
        %1338 = vperm.xlu0 %1337, %v962
        %v1339 = vpop.permute.xlu0 %1338
        %vm1340 = vcmp.eq.s32.totalorder %v984, %v1339
        %1342 = vset.pattern.permute.xlu0 4
        %1343 = vperm.xlu0 %1342, %v1333
        %v1344 = vpop.permute.xlu0 %1343
        %v1346 = vsel %vm1340, %v1344, 0.0
        %v1347 = vadd.f32 %v1346, 0.0
        %1348 = vset.pattern.permute.xlu0 4
        %1349 = vperm.xlu0 %1348, %v970
        %v1350 = vpop.permute.xlu0 %1349
        %vm1351 = vcmp.eq.s32.totalorder %v984, %v1350
        %1353 = vset.pattern.permute.xlu0 4
        %1354 = vperm.xlu0 %1353, %v1334
        %v1355 = vpop.permute.xlu0 %1354
        %v1357 = vsel %vm1351, %v1355, 0.0
        %v1358 = vadd.f32 %v1347, %v1357
        %1359 = vset.pattern.permute.xlu0 4
        %1360 = vperm.xlu0 %1359, %v978
        %v1361 = vpop.permute.xlu0 %1360
        %vm1362 = vcmp.eq.s32.totalorder %v984, %v1361
        %1364 = vset.pattern.permute.xlu0 4
        %1365 = vperm.xlu0 %1364, %v1335
        %v1366 = vpop.permute.xlu0 %1365
        %v1368 = vsel %vm1362, %v1366, 0.0
        %v1369 = vadd.f32 %v1358, %v1368
        %1370 = vset.pattern.permute.xlu0 4
        %1371 = vperm.xlu0 %1370, %v982
        %v1372 = vpop.permute.xlu0 %1371
        %vm1373 = vcmp.eq.s32.totalorder %v984, %v1372
        %1375 = vset.pattern.permute.xlu0 4
        %1376 = vperm.xlu0 %1375, %v1336
        %v1377 = vpop.permute.xlu0 %1376
        %v1379 = vsel %vm1373, %v1377, 0.0
        %v1380 = vadd.f32 %v1369, %v1379
        %1381 = vset.pattern.permute.xlu0 5
        %1382 = vperm.xlu0 %1381, %v962
        %v1383 = vpop.permute.xlu0 %1382
        %vm1384 = vcmp.eq.s32.totalorder %v984, %v1383
        %1385 = vset.pattern.permute.xlu0 5
        %1386 = vperm.xlu0 %1385, %v1333
        %v1387 = vpop.permute.xlu0 %1386
        %v1389 = vsel %vm1384, %v1387, 0.0
        %v1390 = vadd.f32 %v1380, %v1389
        %1391 = vset.pattern.permute.xlu0 5
        %1392 = vperm.xlu0 %1391, %v970
        %v1393 = vpop.permute.xlu0 %1392
        %vm1394 = vcmp.eq.s32.totalorder %v984, %v1393
        %1395 = vset.pattern.permute.xlu0 5
        %1396 = vperm.xlu0 %1395, %v1334
        %v1397 = vpop.permute.xlu0 %1396
        %v1399 = vsel %vm1394, %v1397, 0.0
        %v1400 = vadd.f32 %v1390, %v1399
        %1401 = vset.pattern.permute.xlu0 5
        %1402 = vperm.xlu0 %1401, %v978
        %v1403 = vpop.permute.xlu0 %1402
        %vm1404 = vcmp.eq.s32.totalorder %v984, %v1403
        %1405 = vset.pattern.permute.xlu0 5
        %1406 = vperm.xlu0 %1405, %v1335
        %v1407 = vpop.permute.xlu0 %1406
        %v1409 = vsel %vm1404, %v1407, 0.0
        %v1410 = vadd.f32 %v1400, %v1409
        %1411 = vset.pattern.permute.xlu0 5
        %1412 = vperm.xlu0 %1411, %v982
        %v1413 = vpop.permute.xlu0 %1412
        %vm1414 = vcmp.eq.s32.totalorder %v984, %v1413
        %1415 = vset.pattern.permute.xlu0 5
        %1416 = vperm.xlu0 %1415, %v1336
        %v1417 = vpop.permute.xlu0 %1416
        %v1419 = vsel %vm1414, %v1417, 0.0
        %v1420 = vadd.f32 %v1410, %v1419
        %1421 = vset.pattern.permute.xlu0 6
        %1422 = vperm.xlu0 %1421, %v962
        %v1423 = vpop.permute.xlu0 %1422
        %vm1424 = vcmp.eq.s32.totalorder %v984, %v1423
        %1425 = vset.pattern.permute.xlu0 6
        %1426 = vperm.xlu0 %1425, %v1333
        %v1427 = vpop.permute.xlu0 %1426
        %v1429 = vsel %vm1424, %v1427, 0.0
        %v1430 = vadd.f32 %v1429, 0.0
        %1431 = vset.pattern.permute.xlu0 6
        %1432 = vperm.xlu0 %1431, %v970
        %v1433 = vpop.permute.xlu0 %1432
        %vm1434 = vcmp.eq.s32.totalorder %v984, %v1433
        %1435 = vset.pattern.permute.xlu0 6
        %1436 = vperm.xlu0 %1435, %v1334
        %v1437 = vpop.permute.xlu0 %1436
        %v1439 = vsel %vm1434, %v1437, 0.0
        %v1440 = vadd.f32 %v1430, %v1439
        %1441 = vset.pattern.permute.xlu0 6
        %1442 = vperm.xlu0 %1441, %v978
        %v1443 = vpop.permute.xlu0 %1442
        %vm1444 = vcmp.eq.s32.totalorder %v984, %v1443
        %1445 = vset.pattern.permute.xlu0 6
        %1446 = vperm.xlu0 %1445, %v1335
        %v1447 = vpop.permute.xlu0 %1446
        %v1449 = vsel %vm1444, %v1447, 0.0
        %v1450 = vadd.f32 %v1440, %v1449
        %1451 = vset.pattern.permute.xlu0 6
        %1452 = vperm.xlu0 %1451, %v982
        %v1453 = vpop.permute.xlu0 %1452
        %vm1454 = vcmp.eq.s32.totalorder %v984, %v1453
        %1455 = vset.pattern.permute.xlu0 6
        %1456 = vperm.xlu0 %1455, %v1336
        %v1457 = vpop.permute.xlu0 %1456
        %v1459 = vsel %vm1454, %v1457, 0.0
        %v1460 = vadd.f32 %v1450, %v1459
        %1461 = vset.pattern.permute.xlu0 7
        %1462 = vperm.xlu0 %1461, %v962
        %v1463 = vpop.permute.xlu0 %1462
        %vm1464 = vcmp.eq.s32.totalorder %v984, %v1463
        %1465 = vset.pattern.permute.xlu0 7
        %1466 = vperm.xlu0 %1465, %v1333
        %v1467 = vpop.permute.xlu0 %1466
        %v1469 = vsel %vm1464, %v1467, 0.0
        %v1470 = vadd.f32 %v1460, %v1469
        %1471 = vset.pattern.permute.xlu0 7
        %1472 = vperm.xlu0 %1471, %v970
        %v1473 = vpop.permute.xlu0 %1472
        %vm1474 = vcmp.eq.s32.totalorder %v984, %v1473
        %1475 = vset.pattern.permute.xlu0 7
        %1476 = vperm.xlu0 %1475, %v1334
        %v1477 = vpop.permute.xlu0 %1476
        %v1479 = vsel %vm1474, %v1477, 0.0
        %v1480 = vadd.f32 %v1470, %v1479
        %1481 = vset.pattern.permute.xlu0 7
        %1482 = vperm.xlu0 %1481, %v978
        %v1483 = vpop.permute.xlu0 %1482
        %vm1484 = vcmp.eq.s32.totalorder %v984, %v1483
        %1485 = vset.pattern.permute.xlu0 7
        %1486 = vperm.xlu0 %1485, %v1335
        %v1487 = vpop.permute.xlu0 %1486
        %v1489 = vsel %vm1484, %v1487, 0.0
        %v1490 = vadd.f32 %v1480, %v1489
        %1491 = vset.pattern.permute.xlu0 7
        %1492 = vperm.xlu0 %1491, %v982
        %v1493 = vpop.permute.xlu0 %1492
        %vm1494 = vcmp.eq.s32.totalorder %v984, %v1493
        %1495 = vset.pattern.permute.xlu0 7
        %1496 = vperm.xlu0 %1495, %v1336
        %v1497 = vpop.permute.xlu0 %1496
        %v1499 = vsel %vm1494, %v1497, 0.0
        %v1500 = vadd.f32 %v1490, %v1499
        %1503 = vrot.lane.b32.xlu0 %v750, 120
        %v1504 = vpop.permute.xlu0 %1503
        %1505 = vrot.lane.b32.xlu0 %v755, 120
        %v1506 = vpop.permute.xlu0 %1505
        %v1510 = vsel %vm1169, %v1500, 0
        %1512 = vmatprep.subr.mxu0 0.0
        %1513 = vmatpush1.msra.mxu0 0.0
        %1514 = vmatprep.subr.mxu0 0.0
        %1515 = vmatpush1.msra.mxu0 0.0
        %1516 = vmatprep.subr.mxu0 0.0
        %1517 = vmatpush1.msra.mxu0 0.0
        %1518 = vmatprep.subr.mxu0 0.0
        %1519 = vmatpush1.msra.mxu0 0.0
        %1520 = vmatprep.subr.mxu0 0.0
        %1521 = vmatpush1.msra.mxu0 0.0
        %1522 = vmatprep.subr.mxu0 0.0
        %1523 = vmatpush1.msra.mxu0 0.0
        %1524 = vmatprep.subr.mxu0 0.0
        %1525 = vmatpush1.msra.mxu0 0.0
        %1526 = vmatprep.subr.mxu0 0.0
        %1527 = vmatpush1.msra.mxu0 0.0
        %1528 = vmatprep.subr.mxu0 0.0
        %1529 = vmatpush1.msra.mxu0 0.0
        %1530 = vmatprep.subr.mxu0 0.0
        %1531 = vmatpush1.msra.mxu0 0.0
        %1532 = vmatprep.subr.mxu0 0.0
        %1533 = vmatpush1.msra.mxu0 0.0
        %1534 = vmatprep.subr.mxu0 0.0
        %1535 = vmatpush1.msra.mxu0 0.0
        %1536 = vmatprep.subr.mxu0 0.0
        %1537 = vmatpush1.msra.mxu0 0.0
        %1538 = vmatprep.subr.mxu0 0.0
        %1539 = vmatpush1.msra.mxu0 0.0
        %1540 = vmatprep.subr.mxu0 0.0
        %1541 = vmatpush1.msra.mxu0 %v1506
        %1542 = vmatprep.subr.mxu0 0.0
        %1543 = vmatpush1.msra.mxu0 %v1504
        %1544 = vmatprep.subr.mxu0 0.0
        %1545 = vmatpush2.msra.mxu0 0.0
        %1546 = vmatprep.subr.mxu0 0.0
        %1547 = vmatpush2.msra.mxu0 0.0
        %1548 = vmatprep.subr.mxu0 0.0
        %1549 = vmatpush2.msra.mxu0 0.0
        %1550 = vmatprep.subr.mxu0 0.0
        %1551 = vmatpush2.msra.mxu0 0.0
        %1552 = vmatprep.subr.mxu0 0.0
        %1553 = vmatpush2.msra.mxu0 0.0
        %1554 = vmatprep.subr.mxu0 0.0
        %1555 = vmatpush2.msra.mxu0 0.0
        %1556 = vmatprep.subr.mxu0 0.0
        %1557 = vmatpush2.msra.mxu0 0.0
        %1558 = vmatprep.subr.mxu0 0.0
        %1559 = vmatpush2.msra.mxu0 0.0
        %1560 = vmatprep.subr.mxu0 0.0
        %1561 = vmatpush2.msra.mxu0 0.0
        %1562 = vmatprep.subr.mxu0 0.0
        %1563 = vmatpush2.msra.mxu0 0.0
        %1564 = vmatprep.subr.mxu0 0.0
        %1565 = vmatpush2.msra.mxu0 0.0
        %1566 = vmatprep.subr.mxu0 0.0
        %1567 = vmatpush2.msra.mxu0 0.0
        %1568 = vmatprep.subr.mxu0 0.0
        %1569 = vmatpush2.msra.mxu0 0.0
        %1570 = vmatprep.subr.mxu0 0.0
        %1571 = vmatpush2.msra.mxu0 0.0
        %1572 = vmatprep.subr.mxu0 0.0
        %1573 = vmatpush2.msra.mxu0 0.0
        %1574 = vmatprep.subr.mxu0 0.0
        %1575 = vmatpush2.msra.mxu0 0.0
        %1576 = vmatprep.mubr.f32.mxu0 0.0
        %1577 = vmatmul.mubr.f32.gmra.mxu0 %v1510
        %v1578 = vpop.f32.mrf.mxu0
        %v1579 = vadd.f32 0.0, %v1578
        %v1580 = vpop.f32.mrf.mxu0
        %1581 = vdwg.mxu0
        %1590 = vrot.lane.b32.xlu0 %v710, 120
        %v1591 = vpop.permute.xlu0 %1590
        %1592 = vrot.lane.b32.xlu0 %v715, 120
        %v1593 = vpop.permute.xlu0 %1592
        %1594 = vrot.lane.b32.xlu0 %v720, 120
        %v1595 = vpop.permute.xlu0 %1594
        %1596 = vrot.lane.b32.xlu0 %v725, 120
        %v1597 = vpop.permute.xlu0 %1596
        %1598 = vrot.lane.b32.xlu0 %v730, 120
        %v1599 = vpop.permute.xlu0 %1598
        %1600 = vrot.lane.b32.xlu0 %v735, 120
        %v1601 = vpop.permute.xlu0 %1600
        %1602 = vrot.lane.b32.xlu0 %v740, 120
        %v1603 = vpop.permute.xlu0 %1602
        %1604 = vrot.lane.b32.xlu0 %v745, 120
        %v1605 = vpop.permute.xlu0 %1604
        %v1615 = vsel %vm1243, %v1420, 0
        %1617 = vmatprep.subr.mxu0 0.0
        %1618 = vmatpush1.msra.mxu0 0.0
        %1619 = vmatprep.subr.mxu0 0.0
        %1620 = vmatpush1.msra.mxu0 0.0
        %1621 = vmatprep.subr.mxu0 0.0
        %1622 = vmatpush1.msra.mxu0 0.0
        %1623 = vmatprep.subr.mxu0 0.0
        %1624 = vmatpush1.msra.mxu0 0.0
        %1625 = vmatprep.subr.mxu0 0.0
        %1626 = vmatpush1.msra.mxu0 0.0
        %1627 = vmatprep.subr.mxu0 0.0
        %1628 = vmatpush1.msra.mxu0 0.0
        %1629 = vmatprep.subr.mxu0 0.0
        %1630 = vmatpush1.msra.mxu0 0.0
        %1631 = vmatprep.subr.mxu0 0.0
        %1632 = vmatpush1.msra.mxu0 0.0
        %1633 = vmatprep.subr.mxu0 0.0
        %1634 = vmatpush1.msra.mxu0 %v1605
        %1635 = vmatprep.subr.mxu0 0.0
        %1636 = vmatpush1.msra.mxu0 %v1603
        %1637 = vmatprep.subr.mxu0 0.0
        %1638 = vmatpush1.msra.mxu0 %v1601
        %1639 = vmatprep.subr.mxu0 0.0
        %1640 = vmatpush1.msra.mxu0 %v1599
        %1641 = vmatprep.subr.mxu0 0.0
        %1642 = vmatpush1.msra.mxu0 %v1597
        %1643 = vmatprep.subr.mxu0 0.0
        %1644 = vmatpush1.msra.mxu0 %v1595
        %1645 = vmatprep.subr.mxu0 0.0
        %1646 = vmatpush1.msra.mxu0 %v1593
        %1647 = vmatprep.subr.mxu0 0.0
        %1648 = vmatpush1.msra.mxu0 %v1591
        %1649 = vmatprep.subr.mxu0 0.0
        %1650 = vmatpush2.msra.mxu0 0.0
        %1651 = vmatprep.subr.mxu0 0.0
        %1652 = vmatpush2.msra.mxu0 0.0
        %1653 = vmatprep.subr.mxu0 0.0
        %1654 = vmatpush2.msra.mxu0 0.0
        %1655 = vmatprep.subr.mxu0 0.0
        %1656 = vmatpush2.msra.mxu0 0.0
        %1657 = vmatprep.subr.mxu0 0.0
        %1658 = vmatpush2.msra.mxu0 0.0
        %1659 = vmatprep.subr.mxu0 0.0
        %1660 = vmatpush2.msra.mxu0 0.0
        %1661 = vmatprep.subr.mxu0 0.0
        %1662 = vmatpush2.msra.mxu0 0.0
        %1663 = vmatprep.subr.mxu0 0.0
        %1664 = vmatpush2.msra.mxu0 0.0
        %1665 = vmatprep.subr.mxu0 0.0
        %1666 = vmatpush2.msra.mxu0 0.0
        %1667 = vmatprep.subr.mxu0 0.0
        %1668 = vmatpush2.msra.mxu0 0.0
        %1669 = vmatprep.subr.mxu0 0.0
        %1670 = vmatpush2.msra.mxu0 0.0
        %1671 = vmatprep.subr.mxu0 0.0
        %1672 = vmatpush2.msra.mxu0 0.0
        %1673 = vmatprep.subr.mxu0 0.0
        %1674 = vmatpush2.msra.mxu0 0.0
        %1675 = vmatprep.subr.mxu0 0.0
        %1676 = vmatpush2.msra.mxu0 0.0
        %1677 = vmatprep.subr.mxu0 0.0
        %1678 = vmatpush2.msra.mxu0 0.0
        %1679 = vmatprep.subr.mxu0 0.0
        %1680 = vmatpush2.msra.mxu0 0.0
        %1681 = vmatprep.mubr.f32.mxu0 0.0
        %1682 = vmatmul.mubr.f32.gmra.mxu0 %v1615
        %v1683 = vpop.f32.mrf.mxu0
        %v1684 = vadd.f32 %v1579, %v1683
        %v1685 = vpop.f32.mrf.mxu0
        %1686 = vdwg.mxu0
        %vm1687 = vcmask 64512
        %v1689 = vsel %vm1687, %v1684, 0
        %1691 = vmatprep.subr.mxu0 0.0
        %1692 = vmatpush1.msra.mxu0 0.0
        %1693 = vmatprep.subr.mxu0 0.0
        %1694 = vmatpush1.msra.mxu0 0.0
        %1695 = vmatprep.subr.mxu0 0.0
        %1696 = vmatpush1.msra.mxu0 0.0
        %1697 = vmatprep.subr.mxu0 0.0
        %1698 = vmatpush1.msra.mxu0 0.0
        %1699 = vmatprep.subr.mxu0 0.0
        %1700 = vmatpush1.msra.mxu0 0.0
        %1701 = vmatprep.subr.mxu0 0.0
        %1702 = vmatpush1.msra.mxu0 0.0
        %1703 = vmatprep.subr.mxu0 0.0
        %1704 = vmatpush1.msra.mxu0 0.0
        %1705 = vmatprep.subr.mxu0 0.0
        %1706 = vmatpush1.msra.mxu0 0.0
        %1707 = vmatprep.subr.mxu0 0.0
        %1708 = vmatpush1.msra.mxu0 0.0
        %1709 = vmatprep.subr.mxu0 0.0
        %1710 = vmatpush1.msra.mxu0 0.0
        %1711 = vmatprep.subr.mxu0 0.0
        %1712 = vmatpush1.msra.mxu0 0.0
        %1713 = vmatprep.subr.mxu0 0.0
        %1714 = vmatpush1.msra.mxu0 0.0
        %1715 = vmatprep.subr.mxu0 0.0
        %1716 = vmatpush1.msra.mxu0 0.0
        %1717 = vmatprep.subr.mxu0 0.0
        %1718 = vmatpush1.msra.mxu0 0.0
        %1719 = vmatprep.subr.mxu0 0.0
        %1720 = vmatpush1.msra.mxu0 0.0
        %1721 = vmatprep.subr.mxu0 0.0
        %1722 = vmatpush1.msra.mxu0 %v986
        %1723 = vmatprep.subr.mxu0 0.0
        %1724 = vmatpush2.msra.mxu0 0.0
        %1725 = vmatprep.subr.mxu0 0.0
        %1726 = vmatpush2.msra.mxu0 0.0
        %1727 = vmatprep.subr.mxu0 0.0
        %1728 = vmatpush2.msra.mxu0 0.0
        %1729 = vmatprep.subr.mxu0 0.0
        %1730 = vmatpush2.msra.mxu0 0.0
        %1731 = vmatprep.subr.mxu0 0.0
        %1732 = vmatpush2.msra.mxu0 0.0
        %1733 = vmatprep.subr.mxu0 0.0
        %1734 = vmatpush2.msra.mxu0 0.0
        %1735 = vmatprep.subr.mxu0 0.0
        %1736 = vmatpush2.msra.mxu0 0.0
        %1737 = vmatprep.subr.mxu0 0.0
        %1738 = vmatpush2.msra.mxu0 0.0
        %1739 = vmatprep.subr.mxu0 0.0
        %1740 = vmatpush2.msra.mxu0 0.0
        %1741 = vmatprep.subr.mxu0 0.0
        %1742 = vmatpush2.msra.mxu0 0.0
        %1743 = vmatprep.subr.mxu0 0.0
        %1744 = vmatpush2.msra.mxu0 0.0
        %1745 = vmatprep.subr.mxu0 0.0
        %1746 = vmatpush2.msra.mxu0 0.0
        %1747 = vmatprep.subr.mxu0 0.0
        %1748 = vmatpush2.msra.mxu0 0.0
        %1749 = vmatprep.subr.mxu0 0.0
        %1750 = vmatpush2.msra.mxu0 0.0
        %1751 = vmatprep.subr.mxu0 0.0
        %1752 = vmatpush2.msra.mxu0 0.0
        %1753 = vmatprep.subr.mxu0 0.0
        %1754 = vmatpush2.msra.mxu0 0.0
        %1755 = vmatprep.mubr.f32.mxu0 0.0
        %1756 = vmatmul.mubr.f32.gmra.mxu0 %v1689
        %v1757 = vpop.f32.mrf.mxu0
        %v1758 = vadd.f32 0.0, %v1757
        %v1759 = vpop.f32.mrf.mxu0
        %1760 = vdwg.mxu0
        %v1762 = vsel %vm1687, %v1314, 0
        %1764 = vmatprep.subr.mxu0 0.0
        %1765 = vmatpush1.msra.mxu0 0.0
        %1766 = vmatprep.subr.mxu0 0.0
        %1767 = vmatpush1.msra.mxu0 0.0
        %1768 = vmatprep.subr.mxu0 0.0
        %1769 = vmatpush1.msra.mxu0 0.0
        %1770 = vmatprep.subr.mxu0 0.0
        %1771 = vmatpush1.msra.mxu0 0.0
        %1772 = vmatprep.subr.mxu0 0.0
        %1773 = vmatpush1.msra.mxu0 0.0
        %1774 = vmatprep.subr.mxu0 0.0
        %1775 = vmatpush1.msra.mxu0 0.0
        %1776 = vmatprep.subr.mxu0 0.0
        %1777 = vmatpush1.msra.mxu0 0.0
        %1778 = vmatprep.subr.mxu0 0.0
        %1779 = vmatpush1.msra.mxu0 0.0
        %1780 = vmatprep.subr.mxu0 0.0
        %1781 = vmatpush1.msra.mxu0 0.0
        %1782 = vmatprep.subr.mxu0 0.0
        %1783 = vmatpush1.msra.mxu0 0.0
        %1784 = vmatprep.subr.mxu0 0.0
        %1785 = vmatpush1.msra.mxu0 0.0
        %1786 = vmatprep.subr.mxu0 0.0
        %1787 = vmatpush1.msra.mxu0 0.0
        %1788 = vmatprep.subr.mxu0 0.0
        %1789 = vmatpush1.msra.mxu0 0.0
        %1790 = vmatprep.subr.mxu0 0.0
        %1791 = vmatpush1.msra.mxu0 0.0
        %1792 = vmatprep.subr.mxu0 0.0
        %1793 = vmatpush1.msra.mxu0 0.0
        %1794 = vmatprep.subr.mxu0 0.0
        %1795 = vmatpush1.msra.mxu0 %v985
        %1796 = vmatprep.subr.mxu0 0.0
        %1797 = vmatpush2.msra.mxu0 0.0
        %1798 = vmatprep.subr.mxu0 0.0
        %1799 = vmatpush2.msra.mxu0 0.0
        %1800 = vmatprep.subr.mxu0 0.0
        %1801 = vmatpush2.msra.mxu0 0.0
        %1802 = vmatprep.subr.mxu0 0.0
        %1803 = vmatpush2.msra.mxu0 0.0
        %1804 = vmatprep.subr.mxu0 0.0
        %1805 = vmatpush2.msra.mxu0 0.0
        %1806 = vmatprep.subr.mxu0 0.0
        %1807 = vmatpush2.msra.mxu0 0.0
        %1808 = vmatprep.subr.mxu0 0.0
        %1809 = vmatpush2.msra.mxu0 0.0
        %1810 = vmatprep.subr.mxu0 0.0
        %1811 = vmatpush2.msra.mxu0 0.0
        %1812 = vmatprep.subr.mxu0 0.0
        %1813 = vmatpush2.msra.mxu0 0.0
        %1814 = vmatprep.subr.mxu0 0.0
        %1815 = vmatpush2.msra.mxu0 0.0
        %1816 = vmatprep.subr.mxu0 0.0
        %1817 = vmatpush2.msra.mxu0 0.0
        %1818 = vmatprep.subr.mxu0 0.0
        %1819 = vmatpush2.msra.mxu0 0.0
        %1820 = vmatprep.subr.mxu0 0.0
        %1821 = vmatpush2.msra.mxu0 0.0
        %1822 = vmatprep.subr.mxu0 0.0
        %1823 = vmatpush2.msra.mxu0 0.0
        %1824 = vmatprep.subr.mxu0 0.0
        %1825 = vmatpush2.msra.mxu0 0.0
        %1826 = vmatprep.subr.mxu0 0.0
        %1827 = vmatpush2.msra.mxu0 0.0
        %1828 = vmatprep.mubr.f32.mxu0 0.0
        %1829 = vmatmul.mubr.f32.gmra.mxu0 %v1762
        %v1830 = vpop.f32.mrf.mxu0
        %v1831 = vadd.f32 %v1758, %v1830
        %v1832 = vpop.f32.mrf.mxu0
        %1833 = vdwg.mxu0
        %vm1834 = vcmask 97344
        %v1835 = vsel %vm1834, %v920, -inf
        %1836 = vmax.xlane.f32.xlu0 %v1835
        %v1837 = vpop.xlane.xlu0 %1836
        %v1838 = vsub.f32 %v920, %v1837
        %v1839 = vmul.f32 %v1838, 1.442695
        %v1840 = vpow.pop %v1839
        %1842 = vrot.lane.b32.xlu0 %v1840, 120
        %v1843 = vpop.permute.xlu0 %1842
        %v1845 = vsel %vm989, %v1843, 0.0
        %1846 = vadd.xlane.f32.xlu0 %v1845
        %v1847 = vpop.xlane.xlu0 %1846
        %v1848 = vrcp.pop %v1847
        %v1849 = vmul.f32 %v1840, %v1848
        %v1850 = vmul.f32 %v941, %v1849
        %v1851 = vmul.f32 %v942, %v1849
        %v1852 = vmul.f32 %v943, %v1849
        %v1853 = vmul.f32 %v944, %v1849
        %1854 = vset.pattern.permute.xlu0 8
        %1855 = vperm.xlu0 %1854, %v962
        %v1856 = vpop.permute.xlu0 %1855
        %vm1857 = vcmp.eq.s32.totalorder %v984, %v1856
        %1859 = vset.pattern.permute.xlu0 8
        %1860 = vperm.xlu0 %1859, %v1850
        %v1861 = vpop.permute.xlu0 %1860
        %v1863 = vsel %vm1857, %v1861, 0.0
        %v1864 = vadd.f32 %v1863, 0.0
        %1865 = vset.pattern.permute.xlu0 8
        %1866 = vperm.xlu0 %1865, %v970
        %v1867 = vpop.permute.xlu0 %1866
        %vm1868 = vcmp.eq.s32.totalorder %v984, %v1867
        %1870 = vset.pattern.permute.xlu0 8
        %1871 = vperm.xlu0 %1870, %v1851
        %v1872 = vpop.permute.xlu0 %1871
        %v1874 = vsel %vm1868, %v1872, 0.0
        %v1875 = vadd.f32 %v1864, %v1874
        %1876 = vset.pattern.permute.xlu0 8
        %1877 = vperm.xlu0 %1876, %v978
        %v1878 = vpop.permute.xlu0 %1877
        %vm1879 = vcmp.eq.s32.totalorder %v984, %v1878
        %1881 = vset.pattern.permute.xlu0 8
        %1882 = vperm.xlu0 %1881, %v1852
        %v1883 = vpop.permute.xlu0 %1882
        %v1885 = vsel %vm1879, %v1883, 0.0
        %v1886 = vadd.f32 %v1875, %v1885
        %1887 = vset.pattern.permute.xlu0 8
        %1888 = vperm.xlu0 %1887, %v982
        %v1889 = vpop.permute.xlu0 %1888
        %vm1890 = vcmp.eq.s32.totalorder %v984, %v1889
        %1892 = vset.pattern.permute.xlu0 8
        %1893 = vperm.xlu0 %1892, %v1853
        %v1894 = vpop.permute.xlu0 %1893
        %v1896 = vsel %vm1890, %v1894, 0.0
        %v1897 = vadd.f32 %v1886, %v1896
        %1898 = vset.pattern.permute.xlu0 9
        %1899 = vperm.xlu0 %1898, %v962
        %v1900 = vpop.permute.xlu0 %1899
        %vm1901 = vcmp.eq.s32.totalorder %v984, %v1900
        %1902 = vset.pattern.permute.xlu0 9
        %1903 = vperm.xlu0 %1902, %v1850
        %v1904 = vpop.permute.xlu0 %1903
        %v1906 = vsel %vm1901, %v1904, 0.0
        %v1907 = vadd.f32 %v1897, %v1906
        %1908 = vset.pattern.permute.xlu0 9
        %1909 = vperm.xlu0 %1908, %v970
        %v1910 = vpop.permute.xlu0 %1909
        %vm1911 = vcmp.eq.s32.totalorder %v984, %v1910
        %1912 = vset.pattern.permute.xlu0 9
        %1913 = vperm.xlu0 %1912, %v1851
        %v1914 = vpop.permute.xlu0 %1913
        %v1916 = vsel %vm1911, %v1914, 0.0
        %v1917 = vadd.f32 %v1907, %v1916
        %1918 = vset.pattern.permute.xlu0 9
        %1919 = vperm.xlu0 %1918, %v978
        %v1920 = vpop.permute.xlu0 %1919
        %vm1921 = vcmp.eq.s32.totalorder %v984, %v1920
        %1922 = vset.pattern.permute.xlu0 9
        %1923 = vperm.xlu0 %1922, %v1852
        %v1924 = vpop.permute.xlu0 %1923
        %v1926 = vsel %vm1921, %v1924, 0.0
        %v1927 = vadd.f32 %v1917, %v1926
        %1928 = vset.pattern.permute.xlu0 9
        %1929 = vperm.xlu0 %1928, %v982
        %v1930 = vpop.permute.xlu0 %1929
        %vm1931 = vcmp.eq.s32.totalorder %v984, %v1930
        %1932 = vset.pattern.permute.xlu0 9
        %1933 = vperm.xlu0 %1932, %v1853
        %v1934 = vpop.permute.xlu0 %1933
        %v1936 = vsel %vm1931, %v1934, 0.0
        %v1937 = vadd.f32 %v1927, %v1936
        %1938 = vset.pattern.permute.xlu0 10
        %1939 = vperm.xlu0 %1938, %v962
        %v1940 = vpop.permute.xlu0 %1939
        %vm1941 = vcmp.eq.s32.totalorder %v984, %v1940
        %1942 = vset.pattern.permute.xlu0 10
        %1943 = vperm.xlu0 %1942, %v1850
        %v1944 = vpop.permute.xlu0 %1943
        %v1946 = vsel %vm1941, %v1944, 0.0
        %v1947 = vadd.f32 %v1946, 0.0
        %1948 = vset.pattern.permute.xlu0 10
        %1949 = vperm.xlu0 %1948, %v970
        %v1950 = vpop.permute.xlu0 %1949
        %vm1951 = vcmp.eq.s32.totalorder %v984, %v1950
        %1952 = vset.pattern.permute.xlu0 10
        %1953 = vperm.xlu0 %1952, %v1851
        %v1954 = vpop.permute.xlu0 %1953
        %v1956 = vsel %vm1951, %v1954, 0.0
        %v1957 = vadd.f32 %v1947, %v1956
        %1958 = vset.pattern.permute.xlu0 10
        %1959 = vperm.xlu0 %1958, %v978
        %v1960 = vpop.permute.xlu0 %1959
        %vm1961 = vcmp.eq.s32.totalorder %v984, %v1960
        %1962 = vset.pattern.permute.xlu0 10
        %1963 = vperm.xlu0 %1962, %v1852
        %v1964 = vpop.permute.xlu0 %1963
        %v1966 = vsel %vm1961, %v1964, 0.0
        %v1967 = vadd.f32 %v1957, %v1966
        %1968 = vset.pattern.permute.xlu0 10
        %1969 = vperm.xlu0 %1968, %v982
        %v1970 = vpop.permute.xlu0 %1969
        %vm1971 = vcmp.eq.s32.totalorder %v984, %v1970
        %1972 = vset.pattern.permute.xlu0 10
        %1973 = vperm.xlu0 %1972, %v1853
        %v1974 = vpop.permute.xlu0 %1973
        %v1976 = vsel %vm1971, %v1974, 0.0
        %v1977 = vadd.f32 %v1967, %v1976
        %1978 = vset.pattern.permute.xlu0 11
        %1979 = vperm.xlu0 %1978, %v962
        %v1980 = vpop.permute.xlu0 %1979
        %vm1981 = vcmp.eq.s32.totalorder %v984, %v1980
        %1982 = vset.pattern.permute.xlu0 11
        %1983 = vperm.xlu0 %1982, %v1850
        %v1984 = vpop.permute.xlu0 %1983
        %v1986 = vsel %vm1981, %v1984, 0.0
        %v1987 = vadd.f32 %v1977, %v1986
        %1988 = vset.pattern.permute.xlu0 11
        %1989 = vperm.xlu0 %1988, %v970
        %v1990 = vpop.permute.xlu0 %1989
        %vm1991 = vcmp.eq.s32.totalorder %v984, %v1990
        %1992 = vset.pattern.permute.xlu0 11
        %1993 = vperm.xlu0 %1992, %v1851
        %v1994 = vpop.permute.xlu0 %1993
        %v1996 = vsel %vm1991, %v1994, 0.0
        %v1997 = vadd.f32 %v1987, %v1996
        %1998 = vset.pattern.permute.xlu0 11
        %1999 = vperm.xlu0 %1998, %v978
        %v2000 = vpop.permute.xlu0 %1999
        %vm2001 = vcmp.eq.s32.totalorder %v984, %v2000
        %2002 = vset.pattern.permute.xlu0 11
        %2003 = vperm.xlu0 %2002, %v1852
        %v2004 = vpop.permute.xlu0 %2003
        %v2006 = vsel %vm2001, %v2004, 0.0
        %v2007 = vadd.f32 %v1997, %v2006
        %2008 = vset.pattern.permute.xlu0 11
        %2009 = vperm.xlu0 %2008, %v982
        %v2010 = vpop.permute.xlu0 %2009
        %vm2011 = vcmp.eq.s32.totalorder %v984, %v2010
        %2012 = vset.pattern.permute.xlu0 11
        %2013 = vperm.xlu0 %2012, %v1853
        %v2014 = vpop.permute.xlu0 %2013
        %v2016 = vsel %vm2011, %v2014, 0.0
        %v2017 = vadd.f32 %v2007, %v2016
        %2018 = vrot.lane.b32.xlu0 %v750, 112
        %v2019 = vpop.permute.xlu0 %2018
        %2020 = vrot.lane.b32.xlu0 %v755, 112
        %v2021 = vpop.permute.xlu0 %2020
        %v2025 = vsel %vm1169, %v2017, 0
        %2027 = vmatprep.subr.mxu0 0.0
        %2028 = vmatpush1.msra.mxu0 0.0
        %2029 = vmatprep.subr.mxu0 0.0
        %2030 = vmatpush1.msra.mxu0 0.0
        %2031 = vmatprep.subr.mxu0 0.0
        %2032 = vmatpush1.msra.mxu0 0.0
        %2033 = vmatprep.subr.mxu0 0.0
        %2034 = vmatpush1.msra.mxu0 0.0
        %2035 = vmatprep.subr.mxu0 0.0
        %2036 = vmatpush1.msra.mxu0 0.0
        %2037 = vmatprep.subr.mxu0 0.0
        %2038 = vmatpush1.msra.mxu0 0.0
        %2039 = vmatprep.subr.mxu0 0.0
        %2040 = vmatpush1.msra.mxu0 0.0
        %2041 = vmatprep.subr.mxu0 0.0
        %2042 = vmatpush1.msra.mxu0 0.0
        %2043 = vmatprep.subr.mxu0 0.0
        %2044 = vmatpush1.msra.mxu0 0.0
        %2045 = vmatprep.subr.mxu0 0.0
        %2046 = vmatpush1.msra.mxu0 0.0
        %2047 = vmatprep.subr.mxu0 0.0
        %2048 = vmatpush1.msra.mxu0 0.0
        %2049 = vmatprep.subr.mxu0 0.0
        %2050 = vmatpush1.msra.mxu0 0.0
        %2051 = vmatprep.subr.mxu0 0.0
        %2052 = vmatpush1.msra.mxu0 0.0
        %2053 = vmatprep.subr.mxu0 0.0
        %2054 = vmatpush1.msra.mxu0 0.0
        %2055 = vmatprep.subr.mxu0 0.0
        %2056 = vmatpush1.msra.mxu0 %v2021
        %2057 = vmatprep.subr.mxu0 0.0
        %2058 = vmatpush1.msra.mxu0 %v2019
        %2059 = vmatprep.subr.mxu0 0.0
        %2060 = vmatpush2.msra.mxu0 0.0
        %2061 = vmatprep.subr.mxu0 0.0
        %2062 = vmatpush2.msra.mxu0 0.0
        %2063 = vmatprep.subr.mxu0 0.0
        %2064 = vmatpush2.msra.mxu0 0.0
        %2065 = vmatprep.subr.mxu0 0.0
        %2066 = vmatpush2.msra.mxu0 0.0
        %2067 = vmatprep.subr.mxu0 0.0
        %2068 = vmatpush2.msra.mxu0 0.0
        %2069 = vmatprep.subr.mxu0 0.0
        %2070 = vmatpush2.msra.mxu0 0.0
        %2071 = vmatprep.subr.mxu0 0.0
        %2072 = vmatpush2.msra.mxu0 0.0
        %2073 = vmatprep.subr.mxu0 0.0
        %2074 = vmatpush2.msra.mxu0 0.0
        %2075 = vmatprep.subr.mxu0 0.0
        %2076 = vmatpush2.msra.mxu0 0.0
        %2077 = vmatprep.subr.mxu0 0.0
        %2078 = vmatpush2.msra.mxu0 0.0
        %2079 = vmatprep.subr.mxu0 0.0
        %2080 = vmatpush2.msra.mxu0 0.0
        %2081 = vmatprep.subr.mxu0 0.0
        %2082 = vmatpush2.msra.mxu0 0.0
        %2083 = vmatprep.subr.mxu0 0.0
        %2084 = vmatpush2.msra.mxu0 0.0
        %2085 = vmatprep.subr.mxu0 0.0
        %2086 = vmatpush2.msra.mxu0 0.0
        %2087 = vmatprep.subr.mxu0 0.0
        %2088 = vmatpush2.msra.mxu0 0.0
        %2089 = vmatprep.subr.mxu0 0.0
        %2090 = vmatpush2.msra.mxu0 0.0
        %2091 = vmatprep.mubr.f32.mxu0 0.0
        %2092 = vmatmul.mubr.f32.gmra.mxu0 %v2025
        %v2093 = vpop.f32.mrf.mxu0
        %v2094 = vadd.f32 0.0, %v2093
        %v2095 = vpop.f32.mrf.mxu0
        %2096 = vdwg.mxu0
        %2097 = vrot.lane.b32.xlu0 %v710, 112
        %v2098 = vpop.permute.xlu0 %2097
        %2099 = vrot.lane.b32.xlu0 %v715, 112
        %v2100 = vpop.permute.xlu0 %2099
        %2101 = vrot.lane.b32.xlu0 %v720, 112
        %v2102 = vpop.permute.xlu0 %2101
        %2103 = vrot.lane.b32.xlu0 %v725, 112
        %v2104 = vpop.permute.xlu0 %2103
        %2105 = vrot.lane.b32.xlu0 %v730, 112
        %v2106 = vpop.permute.xlu0 %2105
        %2107 = vrot.lane.b32.xlu0 %v735, 112
        %v2108 = vpop.permute.xlu0 %2107
        %2109 = vrot.lane.b32.xlu0 %v740, 112
        %v2110 = vpop.permute.xlu0 %2109
        %2111 = vrot.lane.b32.xlu0 %v745, 112
        %v2112 = vpop.permute.xlu0 %2111
        %v2122 = vsel %vm1243, %v1937, 0
        %2124 = vmatprep.subr.mxu0 0.0
        %2125 = vmatpush1.msra.mxu0 0.0
        %2126 = vmatprep.subr.mxu0 0.0
        %2127 = vmatpush1.msra.mxu0 0.0
        %2128 = vmatprep.subr.mxu0 0.0
        %2129 = vmatpush1.msra.mxu0 0.0
        %2130 = vmatprep.subr.mxu0 0.0
        %2131 = vmatpush1.msra.mxu0 0.0
        %2132 = vmatprep.subr.mxu0 0.0
        %2133 = vmatpush1.msra.mxu0 0.0
        %2134 = vmatprep.subr.mxu0 0.0
        %2135 = vmatpush1.msra.mxu0 0.0
        %2136 = vmatprep.subr.mxu0 0.0
        %2137 = vmatpush1.msra.mxu0 0.0
        %2138 = vmatprep.subr.mxu0 0.0
        %2139 = vmatpush1.msra.mxu0 0.0
        %2140 = vmatprep.subr.mxu0 0.0
        %2141 = vmatpush1.msra.mxu0 %v2112
        %2142 = vmatprep.subr.mxu0 0.0
        %2143 = vmatpush1.msra.mxu0 %v2110
        %2144 = vmatprep.subr.mxu0 0.0
        %2145 = vmatpush1.msra.mxu0 %v2108
        %2146 = vmatprep.subr.mxu0 0.0
        %2147 = vmatpush1.msra.mxu0 %v2106
        %2148 = vmatprep.subr.mxu0 0.0
        %2149 = vmatpush1.msra.mxu0 %v2104
        %2150 = vmatprep.subr.mxu0 0.0
        %2151 = vmatpush1.msra.mxu0 %v2102
        %2152 = vmatprep.subr.mxu0 0.0
        %2153 = vmatpush1.msra.mxu0 %v2100
        %2154 = vmatprep.subr.mxu0 0.0
        %2155 = vmatpush1.msra.mxu0 %v2098
        %2156 = vmatprep.subr.mxu0 0.0
        %2157 = vmatpush2.msra.mxu0 0.0
        %2158 = vmatprep.subr.mxu0 0.0
        %2159 = vmatpush2.msra.mxu0 0.0
        %2160 = vmatprep.subr.mxu0 0.0
        %2161 = vmatpush2.msra.mxu0 0.0
        %2162 = vmatprep.subr.mxu0 0.0
        %2163 = vmatpush2.msra.mxu0 0.0
        %2164 = vmatprep.subr.mxu0 0.0
        %2165 = vmatpush2.msra.mxu0 0.0
        %2166 = vmatprep.subr.mxu0 0.0
        %2167 = vmatpush2.msra.mxu0 0.0
        %2168 = vmatprep.subr.mxu0 0.0
        %2169 = vmatpush2.msra.mxu0 0.0
        %2170 = vmatprep.subr.mxu0 0.0
        %2171 = vmatpush2.msra.mxu0 0.0
        %2172 = vmatprep.subr.mxu0 0.0
        %2173 = vmatpush2.msra.mxu0 0.0
        %2174 = vmatprep.subr.mxu0 0.0
        %2175 = vmatpush2.msra.mxu0 0.0
        %2176 = vmatprep.subr.mxu0 0.0
        %2177 = vmatpush2.msra.mxu0 0.0
        %2178 = vmatprep.subr.mxu0 0.0
        %2179 = vmatpush2.msra.mxu0 0.0
        %2180 = vmatprep.subr.mxu0 0.0
        %2181 = vmatpush2.msra.mxu0 0.0
        %2182 = vmatprep.subr.mxu0 0.0
        %2183 = vmatpush2.msra.mxu0 0.0
        %2184 = vmatprep.subr.mxu0 0.0
        %2185 = vmatpush2.msra.mxu0 0.0
        %2186 = vmatprep.subr.mxu0 0.0
        %2187 = vmatpush2.msra.mxu0 0.0
        %2188 = vmatprep.mubr.f32.mxu0 0.0
        %2189 = vmatmul.mubr.f32.gmra.mxu0 %v2122
        %v2190 = vpop.f32.mrf.mxu0
        %v2191 = vadd.f32 %v2094, %v2190
        %v2192 = vpop.f32.mrf.mxu0
        %2193 = vdwg.mxu0
        %v2195 = vsel %vm1687, %v2191, 0
        %2197 = vmatprep.subr.mxu0 0.0
        %2198 = vmatpush1.msra.mxu0 0.0
        %2199 = vmatprep.subr.mxu0 0.0
        %2200 = vmatpush1.msra.mxu0 0.0
        %2201 = vmatprep.subr.mxu0 0.0
        %2202 = vmatpush1.msra.mxu0 0.0
        %2203 = vmatprep.subr.mxu0 0.0
        %2204 = vmatpush1.msra.mxu0 0.0
        %2205 = vmatprep.subr.mxu0 0.0
        %2206 = vmatpush1.msra.mxu0 0.0
        %2207 = vmatprep.subr.mxu0 0.0
        %2208 = vmatpush1.msra.mxu0 0.0
        %2209 = vmatprep.subr.mxu0 0.0
        %2210 = vmatpush1.msra.mxu0 0.0
        %2211 = vmatprep.subr.mxu0 0.0
        %2212 = vmatpush1.msra.mxu0 0.0
        %2213 = vmatprep.subr.mxu0 0.0
        %2214 = vmatpush1.msra.mxu0 0.0
        %2215 = vmatprep.subr.mxu0 0.0
        %2216 = vmatpush1.msra.mxu0 0.0
        %2217 = vmatprep.subr.mxu0 0.0
        %2218 = vmatpush1.msra.mxu0 0.0
        %2219 = vmatprep.subr.mxu0 0.0
        %2220 = vmatpush1.msra.mxu0 0.0
        %2221 = vmatprep.subr.mxu0 0.0
        %2222 = vmatpush1.msra.mxu0 0.0
        %2223 = vmatprep.subr.mxu0 0.0
        %2224 = vmatpush1.msra.mxu0 0.0
        %2225 = vmatprep.subr.mxu0 0.0
        %2226 = vmatpush1.msra.mxu0 0.0
        %2227 = vmatprep.subr.mxu0 0.0
        %2228 = vmatpush1.msra.mxu0 %v987
        %2229 = vmatprep.subr.mxu0 0.0
        %2230 = vmatpush2.msra.mxu0 0.0
        %2231 = vmatprep.subr.mxu0 0.0
        %2232 = vmatpush2.msra.mxu0 0.0
        %2233 = vmatprep.subr.mxu0 0.0
        %2234 = vmatpush2.msra.mxu0 0.0
        %2235 = vmatprep.subr.mxu0 0.0
        %2236 = vmatpush2.msra.mxu0 0.0
        %2237 = vmatprep.subr.mxu0 0.0
        %2238 = vmatpush2.msra.mxu0 0.0
        %2239 = vmatprep.subr.mxu0 0.0
        %2240 = vmatpush2.msra.mxu0 0.0
        %2241 = vmatprep.subr.mxu0 0.0
        %2242 = vmatpush2.msra.mxu0 0.0
        %2243 = vmatprep.subr.mxu0 0.0
        %2244 = vmatpush2.msra.mxu0 0.0
        %2245 = vmatprep.subr.mxu0 0.0
        %2246 = vmatpush2.msra.mxu0 0.0
        %2247 = vmatprep.subr.mxu0 0.0
        %2248 = vmatpush2.msra.mxu0 0.0
        %2249 = vmatprep.subr.mxu0 0.0
        %2250 = vmatpush2.msra.mxu0 0.0
        %2251 = vmatprep.subr.mxu0 0.0
        %2252 = vmatpush2.msra.mxu0 0.0
        %2253 = vmatprep.subr.mxu0 0.0
        %2254 = vmatpush2.msra.mxu0 0.0
        %2255 = vmatprep.subr.mxu0 0.0
        %2256 = vmatpush2.msra.mxu0 0.0
        %2257 = vmatprep.subr.mxu0 0.0
        %2258 = vmatpush2.msra.mxu0 0.0
        %2259 = vmatprep.subr.mxu0 0.0
        %2260 = vmatpush2.msra.mxu0 0.0
        %2261 = vmatprep.mubr.f32.mxu0 0.0
        %2262 = vmatmul.mubr.f32.gmra.mxu0 %v2195
        %v2263 = vpop.f32.mrf.mxu0
        %v2264 = vadd.f32 0.0, %v2263
        %v2265 = vpop.f32.mrf.mxu0
        %2266 = vdwg.mxu0
        %v2267 = vadd.f32 %v1831, %v2264
        %vm2268 = vcmask 130144
        %v2269 = vsel %vm2268, %v920, -inf
        %2270 = vmax.xlane.f32.xlu0 %v2269
        %v2271 = vpop.xlane.xlu0 %2270
        %v2272 = vsub.f32 %v920, %v2271
        %v2273 = vmul.f32 %v2272, 1.442695
        %v2274 = vpow.pop %v2273
        %2276 = vrot.lane.b32.xlu0 %v2274, 116
        %v2277 = vpop.permute.xlu0 %2276
        %v2279 = vsel %vm989, %v2277, 0.0
        %2280 = vadd.xlane.f32.xlu0 %v2279
        %v2281 = vpop.xlane.xlu0 %2280
        %v2282 = vrcp.pop %v2281
        %v2283 = vmul.f32 %v2274, %v2282
        %v2284 = vmul.f32 %v941, %v2283
        %v2285 = vmul.f32 %v942, %v2283
        %v2286 = vmul.f32 %v943, %v2283
        %v2287 = vmul.f32 %v944, %v2283
        %2288 = vset.pattern.permute.xlu0 12
        %2289 = vperm.xlu0 %2288, %v962
        %v2290 = vpop.permute.xlu0 %2289
        %vm2291 = vcmp.eq.s32.totalorder %v984, %v2290
        %2293 = vset.pattern.permute.xlu0 12
        %2294 = vperm.xlu0 %2293, %v2284
        %v2295 = vpop.permute.xlu0 %2294
        %v2297 = vsel %vm2291, %v2295, 0.0
        %v2298 = vadd.f32 %v2297, 0.0
        %2299 = vset.pattern.permute.xlu0 12
        %2300 = vperm.xlu0 %2299, %v970
        %v2301 = vpop.permute.xlu0 %2300
        %vm2302 = vcmp.eq.s32.totalorder %v984, %v2301
        %2304 = vset.pattern.permute.xlu0 12
        %2305 = vperm.xlu0 %2304, %v2285
        %v2306 = vpop.permute.xlu0 %2305
        %v2308 = vsel %vm2302, %v2306, 0.0
        %v2309 = vadd.f32 %v2298, %v2308
        %2310 = vset.pattern.permute.xlu0 12
        %2311 = vperm.xlu0 %2310, %v978
        %v2312 = vpop.permute.xlu0 %2311
        %vm2313 = vcmp.eq.s32.totalorder %v984, %v2312
        %2315 = vset.pattern.permute.xlu0 12
        %2316 = vperm.xlu0 %2315, %v2286
        %v2317 = vpop.permute.xlu0 %2316
        %v2319 = vsel %vm2313, %v2317, 0.0
        %v2320 = vadd.f32 %v2309, %v2319
        %2321 = vset.pattern.permute.xlu0 12
        %2322 = vperm.xlu0 %2321, %v982
        %v2323 = vpop.permute.xlu0 %2322
        %vm2324 = vcmp.eq.s32.totalorder %v984, %v2323
        %2326 = vset.pattern.permute.xlu0 12
        %2327 = vperm.xlu0 %2326, %v2287
        %v2328 = vpop.permute.xlu0 %2327
        %v2330 = vsel %vm2324, %v2328, 0.0
        %v2331 = vadd.f32 %v2320, %v2330
        %2332 = vset.pattern.permute.xlu0 13
        %2333 = vperm.xlu0 %2332, %v962
        %v2334 = vpop.permute.xlu0 %2333
        %vm2335 = vcmp.eq.s32.totalorder %v984, %v2334
        %2336 = vset.pattern.permute.xlu0 13
        %2337 = vperm.xlu0 %2336, %v2284
        %v2338 = vpop.permute.xlu0 %2337
        %v2340 = vsel %vm2335, %v2338, 0.0
        %v2341 = vadd.f32 %v2331, %v2340
        %2342 = vset.pattern.permute.xlu0 13
        %2343 = vperm.xlu0 %2342, %v970
        %v2344 = vpop.permute.xlu0 %2343
        %vm2345 = vcmp.eq.s32.totalorder %v984, %v2344
        %2346 = vset.pattern.permute.xlu0 13
        %2347 = vperm.xlu0 %2346, %v2285
        %v2348 = vpop.permute.xlu0 %2347
        %v2350 = vsel %vm2345, %v2348, 0.0
        %v2351 = vadd.f32 %v2341, %v2350
        %2352 = vset.pattern.permute.xlu0 13
        %2353 = vperm.xlu0 %2352, %v978
        %v2354 = vpop.permute.xlu0 %2353
        %vm2355 = vcmp.eq.s32.totalorder %v984, %v2354
        %2356 = vset.pattern.permute.xlu0 13
        %2357 = vperm.xlu0 %2356, %v2286
        %v2358 = vpop.permute.xlu0 %2357
        %v2360 = vsel %vm2355, %v2358, 0.0
        %v2361 = vadd.f32 %v2351, %v2360
        %2362 = vset.pattern.permute.xlu0 13
        %2363 = vperm.xlu0 %2362, %v982
        %v2364 = vpop.permute.xlu0 %2363
        %vm2365 = vcmp.eq.s32.totalorder %v984, %v2364
        %2366 = vset.pattern.permute.xlu0 13
        %2367 = vperm.xlu0 %2366, %v2287
        %v2368 = vpop.permute.xlu0 %2367
        %v2370 = vsel %vm2365, %v2368, 0.0
        %v2371 = vadd.f32 %v2361, %v2370
        %2372 = vset.pattern.permute.xlu0 14
        %2373 = vperm.xlu0 %2372, %v962
        %v2374 = vpop.permute.xlu0 %2373
        %vm2375 = vcmp.eq.s32.totalorder %v984, %v2374
        %2376 = vset.pattern.permute.xlu0 14
        %2377 = vperm.xlu0 %2376, %v2284
        %v2378 = vpop.permute.xlu0 %2377
        %v2380 = vsel %vm2375, %v2378, 0.0
        %v2381 = vadd.f32 %v2380, 0.0
        %2382 = vset.pattern.permute.xlu0 14
        %2383 = vperm.xlu0 %2382, %v970
        %v2384 = vpop.permute.xlu0 %2383
        %vm2385 = vcmp.eq.s32.totalorder %v984, %v2384
        %2386 = vset.pattern.permute.xlu0 14
        %2387 = vperm.xlu0 %2386, %v2285
        %v2388 = vpop.permute.xlu0 %2387
        %v2390 = vsel %vm2385, %v2388, 0.0
        %v2391 = vadd.f32 %v2381, %v2390
        %2392 = vset.pattern.permute.xlu0 14
        %2393 = vperm.xlu0 %2392, %v978
        %v2394 = vpop.permute.xlu0 %2393
        %vm2395 = vcmp.eq.s32.totalorder %v984, %v2394
        %2396 = vset.pattern.permute.xlu0 14
        %2397 = vperm.xlu0 %2396, %v2286
        %v2398 = vpop.permute.xlu0 %2397
        %v2400 = vsel %vm2395, %v2398, 0.0
        %v2401 = vadd.f32 %v2391, %v2400
        %2402 = vset.pattern.permute.xlu0 14
        %2403 = vperm.xlu0 %2402, %v982
        %v2404 = vpop.permute.xlu0 %2403
        %vm2405 = vcmp.eq.s32.totalorder %v984, %v2404
        %2406 = vset.pattern.permute.xlu0 14
        %2407 = vperm.xlu0 %2406, %v2287
        %v2408 = vpop.permute.xlu0 %2407
        %v2410 = vsel %vm2405, %v2408, 0.0
        %v2411 = vadd.f32 %v2401, %v2410
        %2412 = vset.pattern.permute.xlu0 15
        %2413 = vperm.xlu0 %2412, %v962
        %v2414 = vpop.permute.xlu0 %2413
        %vm2415 = vcmp.eq.s32.totalorder %v984, %v2414
        %2416 = vset.pattern.permute.xlu0 15
        %2417 = vperm.xlu0 %2416, %v2284
        %v2418 = vpop.permute.xlu0 %2417
        %v2420 = vsel %vm2415, %v2418, 0.0
        %v2421 = vadd.f32 %v2411, %v2420
        %2422 = vset.pattern.permute.xlu0 15
        %2423 = vperm.xlu0 %2422, %v970
        %v2424 = vpop.permute.xlu0 %2423
        %vm2425 = vcmp.eq.s32.totalorder %v984, %v2424
        %2426 = vset.pattern.permute.xlu0 15
        %2427 = vperm.xlu0 %2426, %v2285
        %v2428 = vpop.permute.xlu0 %2427
        %v2430 = vsel %vm2425, %v2428, 0.0
        %v2431 = vadd.f32 %v2421, %v2430
        %2432 = vset.pattern.permute.xlu0 15
        %2433 = vperm.xlu0 %2432, %v978
        %v2434 = vpop.permute.xlu0 %2433
        %vm2435 = vcmp.eq.s32.totalorder %v984, %v2434
        %2436 = vset.pattern.permute.xlu0 15
        %2437 = vperm.xlu0 %2436, %v2286
        %v2438 = vpop.permute.xlu0 %2437
        %v2440 = vsel %vm2435, %v2438, 0.0
        %v2441 = vadd.f32 %v2431, %v2440
        %2442 = vset.pattern.permute.xlu0 15
        %2443 = vperm.xlu0 %2442, %v982
        %v2444 = vpop.permute.xlu0 %2443
        %vm2445 = vcmp.eq.s32.totalorder %v984, %v2444
        %2446 = vset.pattern.permute.xlu0 15
        %2447 = vperm.xlu0 %2446, %v2287
        %v2448 = vpop.permute.xlu0 %2447
        %v2450 = vsel %vm2445, %v2448, 0.0
        %v2451 = vadd.f32 %v2441, %v2450
        %2452 = vrot.lane.b32.xlu0 %v750, 104
        %v2453 = vpop.permute.xlu0 %2452
        %2454 = vrot.lane.b32.xlu0 %v755, 104
        %v2455 = vpop.permute.xlu0 %2454
        %v2459 = vsel %vm1169, %v2451, 0
        %2461 = vmatprep.subr.mxu0 0.0
        %2462 = vmatpush1.msra.mxu0 0.0
        %2463 = vmatprep.subr.mxu0 0.0
        %2464 = vmatpush1.msra.mxu0 0.0
        %2465 = vmatprep.subr.mxu0 0.0
        %2466 = vmatpush1.msra.mxu0 0.0
        %2467 = vmatprep.subr.mxu0 0.0
        %2468 = vmatpush1.msra.mxu0 0.0
        %2469 = vmatprep.subr.mxu0 0.0
        %2470 = vmatpush1.msra.mxu0 0.0
        %2471 = vmatprep.subr.mxu0 0.0
        %2472 = vmatpush1.msra.mxu0 0.0
        %2473 = vmatprep.subr.mxu0 0.0
        %2474 = vmatpush1.msra.mxu0 0.0
        %2475 = vmatprep.subr.mxu0 0.0
        %2476 = vmatpush1.msra.mxu0 0.0
        %2477 = vmatprep.subr.mxu0 0.0
        %2478 = vmatpush1.msra.mxu0 0.0
        %2479 = vmatprep.subr.mxu0 0.0
        %2480 = vmatpush1.msra.mxu0 0.0
        %2481 = vmatprep.subr.mxu0 0.0
        %2482 = vmatpush1.msra.mxu0 0.0
        %2483 = vmatprep.subr.mxu0 0.0
        %2484 = vmatpush1.msra.mxu0 0.0
        %2485 = vmatprep.subr.mxu0 0.0
        %2486 = vmatpush1.msra.mxu0 0.0
        %2487 = vmatprep.subr.mxu0 0.0
        %2488 = vmatpush1.msra.mxu0 0.0
        %2489 = vmatprep.subr.mxu0 0.0
        %2490 = vmatpush1.msra.mxu0 %v2455
        %2491 = vmatprep.subr.mxu0 0.0
        %2492 = vmatpush1.msra.mxu0 %v2453
        %2493 = vmatprep.subr.mxu0 0.0
        %2494 = vmatpush2.msra.mxu0 0.0
        %2495 = vmatprep.subr.mxu0 0.0
        %2496 = vmatpush2.msra.mxu0 0.0
        %2497 = vmatprep.subr.mxu0 0.0
        %2498 = vmatpush2.msra.mxu0 0.0
        %2499 = vmatprep.subr.mxu0 0.0
        %2500 = vmatpush2.msra.mxu0 0.0
        %2501 = vmatprep.subr.mxu0 0.0
        %2502 = vmatpush2.msra.mxu0 0.0
        %2503 = vmatprep.subr.mxu0 0.0
        %2504 = vmatpush2.msra.mxu0 0.0
        %2505 = vmatprep.subr.mxu0 0.0
        %2506 = vmatpush2.msra.mxu0 0.0
        %2507 = vmatprep.subr.mxu0 0.0
        %2508 = vmatpush2.msra.mxu0 0.0
        %2509 = vmatprep.subr.mxu0 0.0
        %2510 = vmatpush2.msra.mxu0 0.0
        %2511 = vmatprep.subr.mxu0 0.0
        %2512 = vmatpush2.msra.mxu0 0.0
        %2513 = vmatprep.subr.mxu0 0.0
        %2514 = vmatpush2.msra.mxu0 0.0
        %2515 = vmatprep.subr.mxu0 0.0
        %2516 = vmatpush2.msra.mxu0 0.0
        %2517 = vmatprep.subr.mxu0 0.0
        %2518 = vmatpush2.msra.mxu0 0.0
        %2519 = vmatprep.subr.mxu0 0.0
        %2520 = vmatpush2.msra.mxu0 0.0
        %2521 = vmatprep.subr.mxu0 0.0
        %2522 = vmatpush2.msra.mxu0 0.0
        %2523 = vmatprep.subr.mxu0 0.0
        %2524 = vmatpush2.msra.mxu0 0.0
        %2525 = vmatprep.mubr.f32.mxu0 0.0
        %2526 = vmatmul.mubr.f32.gmra.mxu0 %v2459
        %v2527 = vpop.f32.mrf.mxu0
        %v2528 = vadd.f32 0.0, %v2527
        %v2529 = vpop.f32.mrf.mxu0
        %2530 = vdwg.mxu0
        %2531 = vrot.lane.b32.xlu0 %v710, 104
        %v2532 = vpop.permute.xlu0 %2531
        %2533 = vrot.lane.b32.xlu0 %v715, 104
        %v2534 = vpop.permute.xlu0 %2533
        %2535 = vrot.lane.b32.xlu0 %v720, 104
        %v2536 = vpop.permute.xlu0 %2535
        %2537 = vrot.lane.b32.xlu0 %v725, 104
        %v2538 = vpop.permute.xlu0 %2537
        %2539 = vrot.lane.b32.xlu0 %v730, 104
        %v2540 = vpop.permute.xlu0 %2539
        %2541 = vrot.lane.b32.xlu0 %v735, 104
        %v2542 = vpop.permute.xlu0 %2541
        %2543 = vrot.lane.b32.xlu0 %v740, 104
        %v2544 = vpop.permute.xlu0 %2543
        %2545 = vrot.lane.b32.xlu0 %v745, 104
        %v2546 = vpop.permute.xlu0 %2545
        %v2556 = vsel %vm1243, %v2371, 0
        %2558 = vmatprep.subr.mxu0 0.0
        %2559 = vmatpush1.msra.mxu0 0.0
        %2560 = vmatprep.subr.mxu0 0.0
        %2561 = vmatpush1.msra.mxu0 0.0
        %2562 = vmatprep.subr.mxu0 0.0
        %2563 = vmatpush1.msra.mxu0 0.0
        %2564 = vmatprep.subr.mxu0 0.0
        %2565 = vmatpush1.msra.mxu0 0.0
        %2566 = vmatprep.subr.mxu0 0.0
        %2567 = vmatpush1.msra.mxu0 0.0
        %2568 = vmatprep.subr.mxu0 0.0
        %2569 = vmatpush1.msra.mxu0 0.0
        %2570 = vmatprep.subr.mxu0 0.0
        %2571 = vmatpush1.msra.mxu0 0.0
        %2572 = vmatprep.subr.mxu0 0.0
        %2573 = vmatpush1.msra.mxu0 0.0
        %2574 = vmatprep.subr.mxu0 0.0
        %2575 = vmatpush1.msra.mxu0 %v2546
        %2576 = vmatprep.subr.mxu0 0.0
        %2577 = vmatpush1.msra.mxu0 %v2544
        %2578 = vmatprep.subr.mxu0 0.0
        %2579 = vmatpush1.msra.mxu0 %v2542
        %2580 = vmatprep.subr.mxu0 0.0
        %2581 = vmatpush1.msra.mxu0 %v2540
        %2582 = vmatprep.subr.mxu0 0.0
        %2583 = vmatpush1.msra.mxu0 %v2538
        %2584 = vmatprep.subr.mxu0 0.0
        %2585 = vmatpush1.msra.mxu0 %v2536
        %2586 = vmatprep.subr.mxu0 0.0
        %2587 = vmatpush1.msra.mxu0 %v2534
        %2588 = vmatprep.subr.mxu0 0.0
        %2589 = vmatpush1.msra.mxu0 %v2532
        %2590 = vmatprep.subr.mxu0 0.0
        %2591 = vmatpush2.msra.mxu0 0.0
        %2592 = vmatprep.subr.mxu0 0.0
        %2593 = vmatpush2.msra.mxu0 0.0
        %2594 = vmatprep.subr.mxu0 0.0
        %2595 = vmatpush2.msra.mxu0 0.0
        %2596 = vmatprep.subr.mxu0 0.0
        %2597 = vmatpush2.msra.mxu0 0.0
        %2598 = vmatprep.subr.mxu0 0.0
        %2599 = vmatpush2.msra.mxu0 0.0
        %2600 = vmatprep.subr.mxu0 0.0
        %2601 = vmatpush2.msra.mxu0 0.0
        %2602 = vmatprep.subr.mxu0 0.0
        %2603 = vmatpush2.msra.mxu0 0.0
        %2604 = vmatprep.subr.mxu0 0.0
        %2605 = vmatpush2.msra.mxu0 0.0
        %2606 = vmatprep.subr.mxu0 0.0
        %2607 = vmatpush2.msra.mxu0 0.0
        %2608 = vmatprep.subr.mxu0 0.0
        %2609 = vmatpush2.msra.mxu0 0.0
        %2610 = vmatprep.subr.mxu0 0.0
        %2611 = vmatpush2.msra.mxu0 0.0
        %2612 = vmatprep.subr.mxu0 0.0
        %2613 = vmatpush2.msra.mxu0 0.0
        %2614 = vmatprep.subr.mxu0 0.0
        %2615 = vmatpush2.msra.mxu0 0.0
        %2616 = vmatprep.subr.mxu0 0.0
        %2617 = vmatpush2.msra.mxu0 0.0
        %2618 = vmatprep.subr.mxu0 0.0
        %2619 = vmatpush2.msra.mxu0 0.0
        %2620 = vmatprep.subr.mxu0 0.0
        %2621 = vmatpush2.msra.mxu0 0.0
        %2622 = vmatprep.mubr.f32.mxu0 0.0
        %2623 = vmatmul.mubr.f32.gmra.mxu0 %v2556
        %v2624 = vpop.f32.mrf.mxu0
        %v2625 = vadd.f32 %v2528, %v2624
        %v2626 = vpop.f32.mrf.mxu0
        %2627 = vdwg.mxu0
        %v2629 = vsel %vm1687, %v2625, 0
        %2631 = vmatprep.subr.mxu0 0.0
        %2632 = vmatpush1.msra.mxu0 0.0
        %2633 = vmatprep.subr.mxu0 0.0
        %2634 = vmatpush1.msra.mxu0 0.0
        %2635 = vmatprep.subr.mxu0 0.0
        %2636 = vmatpush1.msra.mxu0 0.0
        %2637 = vmatprep.subr.mxu0 0.0
        %2638 = vmatpush1.msra.mxu0 0.0
        %2639 = vmatprep.subr.mxu0 0.0
        %2640 = vmatpush1.msra.mxu0 0.0
        %2641 = vmatprep.subr.mxu0 0.0
        %2642 = vmatpush1.msra.mxu0 0.0
        %2643 = vmatprep.subr.mxu0 0.0
        %2644 = vmatpush1.msra.mxu0 0.0
        %2645 = vmatprep.subr.mxu0 0.0
        %2646 = vmatpush1.msra.mxu0 0.0
        %2647 = vmatprep.subr.mxu0 0.0
        %2648 = vmatpush1.msra.mxu0 0.0
        %2649 = vmatprep.subr.mxu0 0.0
        %2650 = vmatpush1.msra.mxu0 0.0
        %2651 = vmatprep.subr.mxu0 0.0
        %2652 = vmatpush1.msra.mxu0 0.0
        %2653 = vmatprep.subr.mxu0 0.0
        %2654 = vmatpush1.msra.mxu0 0.0
        %2655 = vmatprep.subr.mxu0 0.0
        %2656 = vmatpush1.msra.mxu0 0.0
        %2657 = vmatprep.subr.mxu0 0.0
        %2658 = vmatpush1.msra.mxu0 0.0
        %2659 = vmatprep.subr.mxu0 0.0
        %2660 = vmatpush1.msra.mxu0 0.0
        %2661 = vmatprep.subr.mxu0 0.0
        %2662 = vmatpush1.msra.mxu0 %v988
        %2663 = vmatprep.subr.mxu0 0.0
        %2664 = vmatpush2.msra.mxu0 0.0
        %2665 = vmatprep.subr.mxu0 0.0
        %2666 = vmatpush2.msra.mxu0 0.0
        %2667 = vmatprep.subr.mxu0 0.0
        %2668 = vmatpush2.msra.mxu0 0.0
        %2669 = vmatprep.subr.mxu0 0.0
        %2670 = vmatpush2.msra.mxu0 0.0
        %2671 = vmatprep.subr.mxu0 0.0
        %2672 = vmatpush2.msra.mxu0 0.0
        %2673 = vmatprep.subr.mxu0 0.0
        %2674 = vmatpush2.msra.mxu0 0.0
        %2675 = vmatprep.subr.mxu0 0.0
        %2676 = vmatpush2.msra.mxu0 0.0
        %2677 = vmatprep.subr.mxu0 0.0
        %2678 = vmatpush2.msra.mxu0 0.0
        %2679 = vmatprep.subr.mxu0 0.0
        %2680 = vmatpush2.msra.mxu0 0.0
        %2681 = vmatprep.subr.mxu0 0.0
        %2682 = vmatpush2.msra.mxu0 0.0
        %2683 = vmatprep.subr.mxu0 0.0
        %2684 = vmatpush2.msra.mxu0 0.0
        %2685 = vmatprep.subr.mxu0 0.0
        %2686 = vmatpush2.msra.mxu0 0.0
        %2687 = vmatprep.subr.mxu0 0.0
        %2688 = vmatpush2.msra.mxu0 0.0
        %2689 = vmatprep.subr.mxu0 0.0
        %2690 = vmatpush2.msra.mxu0 0.0
        %2691 = vmatprep.subr.mxu0 0.0
        %2692 = vmatpush2.msra.mxu0 0.0
        %2693 = vmatprep.subr.mxu0 0.0
        %2694 = vmatpush2.msra.mxu0 0.0
        %2695 = vmatprep.mubr.f32.mxu0 0.0
        %2696 = vmatmul.mubr.f32.gmra.mxu0 %v2629
        %v2697 = vpop.f32.mrf.mxu0
        %v2698 = vadd.f32 0.0, %v2697
        %v2699 = vpop.f32.mrf.mxu0
        %2700 = vdwg.mxu0
        %v2701 = vadd.f32 %v2267, %v2698
        %v2702 = vld [vmem:[%s546] sm:$0xff]
        %v2703 = vadd.f32 %v2702, %v2701
        %2704 = vst.msk [vmem:[%s546] sm:$0xff] %vm612, %v2703
        %s2705 = sand.u32 %s371, 1
        %s2706 = scalar_lea.sflag [#allocation3], %s2705
        %s2707 = sand.u32 %s371, 1
        %s2708 = smul.addr %s2707, 8
        %s2709 = scalar_lea.vmem [#allocation2], %s2708
        // Predicated region
        $region81: #{tpu_custom_call.1} parent=75 // pred_check
          %p2710 = pneg %p381
        $region82: #{tpu_custom_call.1} parent=75 // pred_check_branch
          %2712 = sbr.rel (%p2710) target = $region84
        $region83: #{tpu_custom_call.1} parent=75 // pred_region
          %s2714 = ssub.s32 128, 128
          %2715 = vsyncadd %s2706, %s2714
          %s2716 = smul.addr %s32, 128
          %s2717 = scalar_lea.hbm %s14, %s2716
          %s2719 = sshll.u32 %s2709, 4
          %s2720 = int_to_ptr.vmem [resolvable:$true] %s2719
          %2722 = dma.vmem_to_hbm [thread:$0]  %s2720, 128, %s2717, %s2706
        $region84: #{tpu_custom_call.1} parent=75 // pred_fallthru
          _
      $region76: #{tpu_custom_call.1} parent=5 // pred_fallthru
        _
      %p2723 = scmp.le.s32.totalorder 2, %s23
      // Predicated region
      $region85: #{tpu_custom_call.1} parent=5 // pred_check
        %p2724 = pneg %p2723
      $region86: #{tpu_custom_call.1} parent=5 // pred_check_branch
        %2726 = sbr.rel (%p2724) target = $region88
      $region87: #{tpu_custom_call.1} parent=5 // pred_region
        %s2727 = ssub.s32 %s23, 2
        // Predicated region
        $region89: #{tpu_custom_call.1} parent=87 // pred_check
          %p2728 = pneg %p387
        $region90: #{tpu_custom_call.1} parent=87 // pred_check_branch
          %2730 = sbr.rel (%p2728) target = $region92
        $region91: #{tpu_custom_call.1} parent=87 // pred_region
          %s2731 = sand.u32 %s372, 1
          %s2732 = scalar_lea.sflag [#allocation3], %s2731
          %s2733 = sand.u32 %s372, 1
          %s2734 = smul.addr %s2733, 8
          %s2735 = scalar_lea.vmem [#allocation2], %s2734
          %2736 = dma.done %s2732, 128
        $region92: #{tpu_custom_call.1} parent=87 // pred_fallthru
          _
      $region88: #{tpu_custom_call.1} parent=5 // pred_fallthru
        _
    $region6: #{tpu_custom_call.1} parent=1 // loop_footer
      %s27 = sadd.s32 1, %s23
    $region7: #{tpu_custom_call.1} parent=1 // loop_footer_branch
      %22 = sbr.rel target = $region3
    $region8: #{tpu_custom_call.1} parent=1 // loop_exit
      _
    %2737 = vsyncpa [#allocation3], 1
    %s2738 = scalar_lea.sflag [#allocation3], 1
    %2739 = vsyncpa %s2738, 1

</llo_original>
